<compile_context>
chip_gen: v7x
topology: tpu7x:2x2x1
jax: 0.10.0
libtpu: 0.0.40
codegen_flags: <defaults>
</compile_context>

<pallas_src>
import functools

import jax
import jax.numpy as jnp
import numpy as np
from jax import lax
from jax.experimental import pallas as pl
from jax.experimental.pallas import tpu as pltpu


def _fold_bn(gamma, beta, mean, var, eps=1e-5):
    scale = gamma / jnp.sqrt(var + eps)
    bias = beta - mean * scale
    return scale, bias


# --------------------------------------------------------------------------
# Fused residual-block kernel.  Grid = (N, Hout // TH); one output row-tile
# of one image per step.  Scratch buffers persist across the row-tile axis.
# --------------------------------------------------------------------------
def _res_block_kernel(*refs, H, W, Cin, Cout, Hout, Wout, TH, stride, proj, padh):
    if proj:
        (x_ref, w1_ref, w2_ref, wsc_ref, bn_ref, o_ref,
         xpad_ref, a1_ref, y1p_ref, a2_ref) = refs
    else:
        (x_ref, w1_ref, w2_ref, bn_ref, o_ref,
         xpad_ref, a1_ref, y1p_ref, a2_ref) = refs

    h = pl.program_id(1)
    r0 = h * TH                      # first output row of this tile
    R1 = TH + 2                      # conv1 rows needed (incl. conv2 halo)

    def sds(start, size):            # (optionally strided) slice helper
        if stride == 1:
            return pl.ds(start, size)
        return pl.ds(start, size, stride=stride)

    # ---- stage the zero-padded input image in VMEM once per image -------
    @pl.when(h == 0)
    def _():
        xpad_ref[...] = jnp.zeros(xpad_ref.shape, xpad_ref.dtype)
        xpad_ref[padh:padh + H, 1:W + 1, :] = x_ref[...]

    s1 = bn_ref[0:1, :]; b1 = bn_ref[1:2, :]
    s2 = bn_ref[2:3, :]; b2 = bn_ref[3:4, :]

    # ---- conv1 (3x3, stride) + bn1 + relu for rows [r0-1, r0+TH+1) ------
    # im2col slab materialised in VMEM, contracted in ONE bf16 MXU matmul.
    base = r0 * stride + padh - 1 - stride
    for dy in range(3):
        for dx in range(3):
            k = dy * 3 + dx
            a1_ref[:, :, k * Cin:(k + 1) * Cin] = (
                xpad_ref[sds(base + dy, R1), sds(dx, Wout), :])
    a1 = a1_ref[...].reshape(R1 * Wout, 9 * Cin).astype(jnp.bfloat16)
    y1 = jnp.dot(a1, w1_ref[...], preferred_element_type=jnp.float32)
    y1 = jnp.maximum(y1 * s1 + b1, 0.0).reshape(R1, Wout, Cout)
    # halo rows outside the image are conv2's zero padding, not conv1 output
    ridx = r0 - 1 + lax.broadcasted_iota(jnp.int32, (R1, 1, 1), 0)
    y1 = jnp.where((ridx >= 0) & (ridx < Hout), y1, 0.0)

    # stage conv1 result with a zero-padded W border for conv2
    zcol = jnp.zeros((R1, 1, Cout), jnp.float32)
    y1p_ref[:, 0:1, :] = zcol
    y1p_ref[:, Wout + 1:Wout + 2, :] = zcol
    y1p_ref[:, 1:Wout + 1, :] = y1

    # ------------------- conv2 (3x3, stride 1) + bn2 ---------------------
    for dy in range(3):
        for dx in range(3):
            k = dy * 3 + dx
            a2_ref[:, :, k * Cout:(k + 1) * Cout] = y1p_ref[dy:dy + TH, dx:dx + Wout, :]
    a2 = a2_ref[...].reshape(TH * Wout, 9 * Cout).astype(jnp.bfloat16)
    y2 = jnp.dot(a2, w2_ref[...], preferred_element_type=jnp.float32)
    y2 = y2 * s2 + b2

    # ------------------------------ shortcut -----------------------------
    xs = xpad_ref[sds(r0 * stride + padh, TH), sds(1, Wout), :]   # (TH, Wout, Cin)
    if proj:  # 1x1 conv (stride) + BN
        ssc = bn_ref[4:5, :]; bsc = bn_ref[5:6, :]
        sc = jnp.dot(xs.reshape(TH * Wout, Cin).astype(jnp.bfloat16), wsc_ref[...],
                     preferred_element_type=jnp.float32)
        sc = sc * ssc + bsc
    else:     # identity: stride == 1 and Cin == Cout
        sc = xs.reshape(TH * Wout, Cout)

    out = jnp.maximum(y2 + sc, 0.0).reshape(TH, Wout, Cout)

    # lane-dense writeback: output block minor dim is Wout*Cout (>=128 here)
    for w in range(Wout):
        o_ref[:, w * Cout:(w + 1) * Cout] = out[:, w, :]


# --------------------------------------------------------------------------
# Wrapper
# --------------------------------------------------------------------------
def residual_block(x_nchw, params, stride=1):
    """Fused Pallas implementation of ResidualBlock.forward.  NCHW in/out."""
    # TODO(synk): in a full network keep activations NHWC end-to-end and drop
    # these boundary transposes.
    x = jnp.transpose(x_nchw, (0, 2, 3, 1)).astype(jnp.float32)   # NCHW -> NHWC
    N, H, W, Cin = x.shape
    Cout = params["w1"].shape[-1]
    Hout = (H - 1) // stride + 1
    Wout = (W - 1) // stride + 1
    proj = (stride != 1) or (Cin != Cout)
    TH = 8 if Hout % 8 == 0 else Hout        # output-row tile (sublane multiple)
    HT = Hout // TH
    padh = stride + 1                        # top/bottom halo rows in VMEM scratch
    R1 = TH + 2

    # conv weights pre-reshaped for the single im2col contraction, in bf16
    w1r = params["w1"].reshape(9 * Cin, Cout).astype(jnp.bfloat16)
    w2r = params["w2"].reshape(9 * Cout, Cout).astype(jnp.bfloat16)

    s1, b1 = _fold_bn(*params["bn1"])
    s2, b2 = _fold_bn(*params["bn2"])
    bn_rows = [s1, b1, s2, b2]

    args = [x, w1r, w2r]
    in_specs = [
        pl.BlockSpec((None, H, W, Cin), lambda n, h: (n, 0, 0, 0)),
        pl.BlockSpec((9 * Cin, Cout), lambda n, h: (0, 0)),
        pl.BlockSpec((9 * Cout, Cout), lambda n, h: (0, 0)),
    ]
    if proj:
        wsc = params["w_sc"].reshape(Cin, Cout).astype(jnp.bfloat16)
        ssc, bsc = _fold_bn(*params["bn_sc"])
        bn_rows += [ssc, bsc]
        args.append(wsc)
        in_specs.append(pl.BlockSpec((Cin, Cout), lambda n, h: (0, 0)))
    bn = jnp.stack(bn_rows).astype(jnp.float32)          # (4 or 6, Cout)
    args.append(bn)
    in_specs.append(pl.BlockSpec((bn.shape[0], Cout), lambda n, h: (0, 0)))

    kernel = functools.partial(
        _res_block_kernel, H=H, W=W, Cin=Cin, Cout=Cout, Hout=Hout, Wout=Wout,
        TH=TH, stride=stride, proj=proj, padh=padh)

    out = pl.pallas_call(
        kernel,
        out_shape=jax.ShapeDtypeStruct((N, Hout, Wout * Cout), jnp.float32),
        grid=(N, HT),
        in_specs=in_specs,
        out_specs=pl.BlockSpec((None, TH, Wout * Cout), lambda n, h: (n, h, 0)),
        scratch_shapes=[
            pltpu.VMEM((H + 2 * padh, W + 2, Cin), jnp.float32),  # padded input
            pltpu.VMEM((R1, Wout, 9 * Cin), jnp.float32),         # conv1 im2col
            pltpu.VMEM((R1, Wout + 2, Cout), jnp.float32),        # conv1 out (W-pad)
            pltpu.VMEM((TH, Wout, 9 * Cout), jnp.float32),        # conv2 im2col
        ],
        compiler_params=pltpu.CompilerParams(
            dimension_semantics=("parallel", "arbitrary"),
            vmem_limit_bytes=48 * 1024 * 1024),
    )(*args)

    out = out.reshape(N, Hout, Wout, Cout)
    return jnp.transpose(out, (0, 3, 1, 2))              # NHWC -> NCHW


# --------------------------------------------------------------------------
# Pure-JAX reference (mirrors the kernel's bf16-operand / f32-accum math)
# --------------------------------------------------------------------------
def _conv_ref(x, w, stride, pad):
    return lax.conv_general_dilated(
        x, w, (stride, stride), [(pad, pad), (pad, pad)],
        dimension_numbers=("NHWC", "HWIO", "NHWC"),
        preferred_element_type=jnp.float32)


def residual_block_ref(x_nchw, params, stride=1):
    x = jnp.transpose(x_nchw, (0, 2, 3, 1))
    Cin = x.shape[-1]
    Cout = params["w1"].shape[-1]
    xb = x.astype(jnp.bfloat16)
    s1, b1 = _fold_bn(*params["bn1"])
    s2, b2 = _fold_bn(*params["bn2"])
    y1 = jnp.maximum(
        _conv_ref(xb, params["w1"].astype(jnp.bfloat16), stride, 1) * s1 + b1, 0.0)
    y2 = _conv_ref(y1.astype(jnp.bfloat16),
                   params["w2"].astype(jnp.bfloat16), 1, 1) * s2 + b2
    if stride != 1 or Cin != Cout:
        ssc, bsc = _fold_bn(*params["bn_sc"])
        sc = _conv_ref(xb, params["w_sc"].astype(jnp.bfloat16), stride, 0) * ssc + bsc
    else:
        sc = x
    out = jnp.maximum(y2 + sc, 0.0)
    return jnp.transpose(out, (0, 3, 1, 2))


# --------------------------------------------------------------------------
# Main
# --------------------------------------------------------------------------
if __name__ == "__main__":
    key = jax.random.PRNGKey(0)
    keys = jax.random.split(key, 16)

    def bn_params(k, c):
        k1, k2, k3, k4 = jax.random.split(k, 4)
        gamma = 1.0 + 0.1 * jax.random.normal(k1, (c,), jnp.float32)
        beta = 0.1 * jax.random.normal(k2, (c,), jnp.float32)
        mean = 0.05 * jax.random.normal(k3, (c,), jnp.float32)
        var = jax.random.uniform(k4, (c,), jnp.float32, 0.5, 1.5)
        return (gamma, beta, mean, var)

    # --- case 1: projection shortcut (Cin != Cout), stride 1 ---------------
    N, Cin, Cout, H, W = 2, 4, 8, 16, 16
    params = {
        "w1": 0.1 * jax.random.normal(keys[0], (3, 3, Cin, Cout), jnp.float32),
        "w2": 0.1 * jax.random.normal(keys[1], (3, 3, Cout, Cout), jnp.float32),
        "w_sc": 0.1 * jax.random.normal(keys[2], (1, 1, Cin, Cout), jnp.float32),
        "bn1": bn_params(keys[3], Cout),
        "bn2": bn_params(keys[4], Cout),
        "bn_sc": bn_params(keys[5], Cout),
    }
    x = jax.random.normal(keys[6], (N, Cin, H, W), jnp.float32)   # NCHW like PyTorch

    out = jax.block_until_ready(residual_block(x, params, stride=1))
    ref = jax.block_until_ready(residual_block_ref(x, params, stride=1))
    assert out.shape == (N, Cout, H, W)
    np.testing.assert_allclose(np.asarray(out), np.asarray(ref), rtol=1e-2, atol=1e-2)

    # --- case 2: identity shortcut (Cin == Cout), stride 1 -----------------
    C2 = 8
    params2 = {
        "w1": 0.1 * jax.random.normal(keys[7], (3, 3, C2, C2), jnp.float32),
        "w2": 0.1 * jax.random.normal(keys[8], (3, 3, C2, C2), jnp.float32),
        "bn1": bn_params(keys[9], C2),
        "bn2": bn_params(keys[10], C2),
    }
    x2 = jax.random.normal(keys[11], (N, C2, H, W), jnp.float32)

    out2 = jax.block_until_ready(residual_block(x2, params2, stride=1))
    ref2 = jax.block_until_ready(residual_block_ref(x2, params2, stride=1))
    np.testing.assert_allclose(np.asarray(out2), np.asarray(ref2), rtol=1e-2, atol=1e-2)

    print("KERNEL_OK")
</pallas_src>

<mosaic_0001>
module attributes {stable_mosaic.version = 11 : i64} {
  func.func @_res_block_kernel(%arg0: i32, %arg1: i32, %arg2: memref<1x16x16x4xf32, #tpu.memory_space<vmem>>, %arg3: memref<36x8xbf16, #tpu.memory_space<vmem>>, %arg4: memref<72x8xbf16, #tpu.memory_space<vmem>>, %arg5: memref<4x8xbf16, #tpu.memory_space<vmem>>, %arg6: memref<6x8xf32, #tpu.memory_space<vmem>>, %arg7: memref<1x8x128xf32, #tpu.memory_space<vmem>>, %arg8: memref<20x18x4xf32, #tpu.memory_space<vmem>>, %arg9: memref<10x16x36xf32, #tpu.memory_space<vmem>>, %arg10: memref<10x18x8xf32, #tpu.memory_space<vmem>>, %arg11: memref<8x16x72xf32, #tpu.memory_space<vmem>>) attributes {dimension_semantics = [#tpu.dimension_semantics<parallel>, #tpu.dimension_semantics<arbitrary>], iteration_bounds = array<i64: 2, 2>, scalar_prefetch = 0 : i64, scratch_operands = 4 : i64, tpu.core_type = #tpu.core_type<tc>, window_params = [{transform_indices = @transform_0, window_bounds = array<i64: 1, 16, 16, 4>}, {pipeline_mode = #tpu.pipeline_mode<synchronous>, transform_indices = @transform_1, window_bounds = array<i64: 36, 8>}, {pipeline_mode = #tpu.pipeline_mode<synchronous>, transform_indices = @transform_2, window_bounds = array<i64: 72, 8>}, {pipeline_mode = #tpu.pipeline_mode<synchronous>, transform_indices = @transform_3, window_bounds = array<i64: 4, 8>}, {pipeline_mode = #tpu.pipeline_mode<synchronous>, transform_indices = @transform_4, window_bounds = array<i64: 6, 8>}, {transform_indices = @transform_5, window_bounds = array<i64: 1, 8, 128>}]} {
    %c8_i32 = arith.constant 8 : i32
    %0 = arith.muli %arg1, %c8_i32 : i32
    %c0_i32 = arith.constant 0 : i32
    %1 = arith.cmpi eq, %arg1, %c0_i32 : i32
    %2 = arith.extui %1 : i1 to i32
    %c0_i32_0 = arith.constant 0 : i32
    %3 = arith.cmpi ne, %2, %c0_i32_0 : i32
    scf.if %3 {
      %cst_179 = arith.constant 0.000000e+00 : f32
      %202 = vector.broadcast %cst_179 : f32 to vector<20x18x4xf32>
      %c0_180 = arith.constant 0 : index
      %c0_181 = arith.constant 0 : index
      %c0_182 = arith.constant 0 : index
      %203 = vector.load %arg8[%c0_180, %c0_181, %c0_182] : memref<20x18x4xf32, #tpu.memory_space<vmem>>, vector<20x18x4xf32>
      tpu.vector_store %arg8[%c0_180, %c0_181, %c0_182], %202 {strides = array<i32>} : memref<20x18x4xf32, #tpu.memory_space<vmem>>, vector<20x18x4xf32>,
      %c0_183 = arith.constant 0 : index
      %c0_184 = arith.constant 0 : index
      %c0_185 = arith.constant 0 : index
      %c0_186 = arith.constant 0 : index
      %204 = vector.load %arg2[%c0_183, %c0_184, %c0_185, %c0_186] : memref<1x16x16x4xf32, #tpu.memory_space<vmem>>, vector<1x16x16x4xf32>
      %205 = vector.shape_cast %204 : vector<1x16x16x4xf32> to vector<16x16x4xf32>
      %c2_187 = arith.constant 2 : index
      %c1_188 = arith.constant 1 : index
      %c0_189 = arith.constant 0 : index
      %206 = vector.load %arg8[%c2_187, %c1_188, %c0_189] : memref<20x18x4xf32, #tpu.memory_space<vmem>>, vector<16x16x4xf32>
      tpu.vector_store %arg8[%c2_187, %c1_188, %c0_189], %205 {strides = array<i32>} : memref<20x18x4xf32, #tpu.memory_space<vmem>>, vector<16x16x4xf32>,
    } else {
    }
    %c0 = arith.constant 0 : index
    %c0_1 = arith.constant 0 : index
    %4 = vector.load %arg6[%c0, %c0_1] : memref<6x8xf32, #tpu.memory_space<vmem>>, vector<1x8xf32>
    %c1 = arith.constant 1 : index
    %c0_2 = arith.constant 0 : index
    %5 = vector.load %arg6[%c1, %c0_2] : memref<6x8xf32, #tpu.memory_space<vmem>>, vector<1x8xf32>
    %c2 = arith.constant 2 : index
    %c0_3 = arith.constant 0 : index
    %6 = vector.load %arg6[%c2, %c0_3] : memref<6x8xf32, #tpu.memory_space<vmem>>, vector<1x8xf32>
    %c3 = arith.constant 3 : index
    %c0_4 = arith.constant 0 : index
    %7 = vector.load %arg6[%c3, %c0_4] : memref<6x8xf32, #tpu.memory_space<vmem>>, vector<1x8xf32>
    %c1_i32 = arith.constant 1 : i32
    %8 = arith.muli %0, %c1_i32 : i32
    %c2_i32 = arith.constant 2 : i32
    %9 = arith.addi %8, %c2_i32 : i32
    %c1_i32_5 = arith.constant 1 : i32
    %10 = arith.subi %9, %c1_i32_5 : i32
    %c1_i32_6 = arith.constant 1 : i32
    %11 = arith.subi %10, %c1_i32_6 : i32
    %c0_i32_7 = arith.constant 0 : i32
    %12 = arith.addi %11, %c0_i32_7 : i32
    %13 = arith.index_cast %12 : i32 to index
    %c0_8 = arith.constant 0 : index
    %c0_9 = arith.constant 0 : index
    %14 = vector.load %arg8[%13, %c0_8, %c0_9] : memref<20x18x4xf32, #tpu.memory_space<vmem>>, vector<10x16x4xf32>
    %c0_10 = arith.constant 0 : index
    %c0_11 = arith.constant 0 : index
    %c0_12 = arith.constant 0 : index
    %15 = vector.load %arg9[%c0_10, %c0_11, %c0_12] : memref<10x16x36xf32, #tpu.memory_space<vmem>>, vector<10x16x4xf32>
    tpu.vector_store %arg9[%c0_10, %c0_11, %c0_12], %14 {strides = array<i32>} : memref<10x16x36xf32, #tpu.memory_space<vmem>>, vector<10x16x4xf32>,
    %c0_i32_13 = arith.constant 0 : i32
    %16 = arith.addi %11, %c0_i32_13 : i32
    %17 = arith.index_cast %16 : i32 to index
    %c1_14 = arith.constant 1 : index
    %c0_15 = arith.constant 0 : index
    %18 = vector.load %arg8[%17, %c1_14, %c0_15] : memref<20x18x4xf32, #tpu.memory_space<vmem>>, vector<10x16x4xf32>
    %c0_16 = arith.constant 0 : index
    %c0_17 = arith.constant 0 : index
    %c4 = arith.constant 4 : index
    %19 = vector.load %arg9[%c0_16, %c0_17, %c4] : memref<10x16x36xf32, #tpu.memory_space<vmem>>, vector<10x16x4xf32>
    tpu.vector_store %arg9[%c0_16, %c0_17, %c4], %18 {strides = array<i32>} : memref<10x16x36xf32, #tpu.memory_space<vmem>>, vector<10x16x4xf32>,
    %c0_i32_18 = arith.constant 0 : i32
    %20 = arith.addi %11, %c0_i32_18 : i32
    %21 = arith.index_cast %20 : i32 to index
    %c2_19 = arith.constant 2 : index
    %c0_20 = arith.constant 0 : index
    %22 = vector.load %arg8[%21, %c2_19, %c0_20] : memref<20x18x4xf32, #tpu.memory_space<vmem>>, vector<10x16x4xf32>
    %c0_21 = arith.constant 0 : index
    %c0_22 = arith.constant 0 : index
    %c8 = arith.constant 8 : index
    %23 = vector.load %arg9[%c0_21, %c0_22, %c8] : memref<10x16x36xf32, #tpu.memory_space<vmem>>, vector<10x16x4xf32>
    tpu.vector_store %arg9[%c0_21, %c0_22, %c8], %22 {strides = array<i32>} : memref<10x16x36xf32, #tpu.memory_space<vmem>>, vector<10x16x4xf32>,
    %c1_i32_23 = arith.constant 1 : i32
    %24 = arith.addi %11, %c1_i32_23 : i32
    %25 = arith.index_cast %24 : i32 to index
    %c0_24 = arith.constant 0 : index
    %c0_25 = arith.constant 0 : index
    %26 = vector.load %arg8[%25, %c0_24, %c0_25] : memref<20x18x4xf32, #tpu.memory_space<vmem>>, vector<10x16x4xf32>
    %c0_26 = arith.constant 0 : index
    %c0_27 = arith.constant 0 : index
    %c12 = arith.constant 12 : index
    %27 = vector.load %arg9[%c0_26, %c0_27, %c12] : memref<10x16x36xf32, #tpu.memory_space<vmem>>, vector<10x16x4xf32>
    tpu.vector_store %arg9[%c0_26, %c0_27, %c12], %26 {strides = array<i32>} : memref<10x16x36xf32, #tpu.memory_space<vmem>>, vector<10x16x4xf32>,
    %c1_i32_28 = arith.constant 1 : i32
    %28 = arith.addi %11, %c1_i32_28 : i32
    %29 = arith.index_cast %28 : i32 to index
    %c1_29 = arith.constant 1 : index
    %c0_30 = arith.constant 0 : index
    %30 = vector.load %arg8[%29, %c1_29, %c0_30] : memref<20x18x4xf32, #tpu.memory_space<vmem>>, vector<10x16x4xf32>
    %c0_31 = arith.constant 0 : index
    %c0_32 = arith.constant 0 : index
    %c16 = arith.constant 16 : index
    %31 = vector.load %arg9[%c0_31, %c0_32, %c16] : memref<10x16x36xf32, #tpu.memory_space<vmem>>, vector<10x16x4xf32>
    tpu.vector_store %arg9[%c0_31, %c0_32, %c16], %30 {strides = array<i32>} : memref<10x16x36xf32, #tpu.memory_space<vmem>>, vector<10x16x4xf32>,
    %c1_i32_33 = arith.constant 1 : i32
    %32 = arith.addi %11, %c1_i32_33 : i32
    %33 = arith.index_cast %32 : i32 to index
    %c2_34 = arith.constant 2 : index
    %c0_35 = arith.constant 0 : index
    %34 = vector.load %arg8[%33, %c2_34, %c0_35] : memref<20x18x4xf32, #tpu.memory_space<vmem>>, vector<10x16x4xf32>
    %c0_36 = arith.constant 0 : index
    %c0_37 = arith.constant 0 : index
    %c20 = arith.constant 20 : index
    %35 = vector.load %arg9[%c0_36, %c0_37, %c20] : memref<10x16x36xf32, #tpu.memory_space<vmem>>, vector<10x16x4xf32>
    tpu.vector_store %arg9[%c0_36, %c0_37, %c20], %34 {strides = array<i32>} : memref<10x16x36xf32, #tpu.memory_space<vmem>>, vector<10x16x4xf32>,
    %c2_i32_38 = arith.constant 2 : i32
    %36 = arith.addi %11, %c2_i32_38 : i32
    %37 = arith.index_cast %36 : i32 to index
    %c0_39 = arith.constant 0 : index
    %c0_40 = arith.constant 0 : index
    %38 = vector.load %arg8[%37, %c0_39, %c0_40] : memref<20x18x4xf32, #tpu.memory_space<vmem>>, vector<10x16x4xf32>
    %c0_41 = arith.constant 0 : index
    %c0_42 = arith.constant 0 : index
    %c24 = arith.constant 24 : index
    %39 = vector.load %arg9[%c0_41, %c0_42, %c24] : memref<10x16x36xf32, #tpu.memory_space<vmem>>, vector<10x16x4xf32>
    tpu.vector_store %arg9[%c0_41, %c0_42, %c24], %38 {strides = array<i32>} : memref<10x16x36xf32, #tpu.memory_space<vmem>>, vector<10x16x4xf32>,
    %c2_i32_43 = arith.constant 2 : i32
    %40 = arith.addi %11, %c2_i32_43 : i32
    %41 = arith.index_cast %40 : i32 to index
    %c1_44 = arith.constant 1 : index
    %c0_45 = arith.constant 0 : index
    %42 = vector.load %arg8[%41, %c1_44, %c0_45] : memref<20x18x4xf32, #tpu.memory_space<vmem>>, vector<10x16x4xf32>
    %c0_46 = arith.constant 0 : index
    %c0_47 = arith.constant 0 : index
    %c28 = arith.constant 28 : index
    %43 = vector.load %arg9[%c0_46, %c0_47, %c28] : memref<10x16x36xf32, #tpu.memory_space<vmem>>, vector<10x16x4xf32>
    tpu.vector_store %arg9[%c0_46, %c0_47, %c28], %42 {strides = array<i32>} : memref<10x16x36xf32, #tpu.memory_space<vmem>>, vector<10x16x4xf32>,
    %c2_i32_48 = arith.constant 2 : i32
    %44 = arith.addi %11, %c2_i32_48 : i32
    %45 = arith.index_cast %44 : i32 to index
    %c2_49 = arith.constant 2 : index
    %c0_50 = arith.constant 0 : index
    %46 = vector.load %arg8[%45, %c2_49, %c0_50] : memref<20x18x4xf32, #tpu.memory_space<vmem>>, vector<10x16x4xf32>
    %c0_51 = arith.constant 0 : index
    %c0_52 = arith.constant 0 : index
    %c32 = arith.constant 32 : index
    %47 = vector.load %arg9[%c0_51, %c0_52, %c32] : memref<10x16x36xf32, #tpu.memory_space<vmem>>, vector<10x16x4xf32>
    tpu.vector_store %arg9[%c0_51, %c0_52, %c32], %46 {strides = array<i32>} : memref<10x16x36xf32, #tpu.memory_space<vmem>>, vector<10x16x4xf32>,
    %c0_53 = arith.constant 0 : index
    %c0_54 = arith.constant 0 : index
    %c0_55 = arith.constant 0 : index
    %48 = vector.load %arg9[%c0_53, %c0_54, %c0_55] : memref<10x16x36xf32, #tpu.memory_space<vmem>>, vector<10x16x36xf32>
    %49 = vector.shape_cast %48 : vector<10x16x36xf32> to vector<160x36xf32>
    %50 = arith.truncf %49 : vector<160x36xf32> to vector<160x36xbf16>
    %c0_56 = arith.constant 0 : index
    %c0_57 = arith.constant 0 : index
    %51 = vector.load %arg3[%c0_56, %c0_57] : memref<36x8xbf16, #tpu.memory_space<vmem>>, vector<36x8xbf16>
    %cst = arith.constant dense<0.000000e+00> : vector<160x8xf32>
    %52 = tpu.matmul %50, %51, %cst {dimension_numbers = #tpu.dot_dimension_numbers<[1], [0], [0], [1], [0, 0, 1, 1], [], []>} : vector<160x36xbf16>, vector<36x8xbf16>, vector<160x8xf32> -> vector<160x8xf32>
    %53 = vector.broadcast %4 : vector<1x8xf32> to vector<160x8xf32>
    %54 = arith.mulf %52, %53 : vector<160x8xf32>
    %55 = vector.broadcast %5 : vector<1x8xf32> to vector<160x8xf32>
    %56 = arith.addf %54, %55 : vector<160x8xf32>
    %cst_58 = arith.constant 0.000000e+00 : f32
    %57 = vector.broadcast %cst_58 : f32 to vector<160x8xf32>
    %58 = arith.maximumf %56, %57 : vector<160x8xf32>
    %59 = vector.shape_cast %58 : vector<160x8xf32> to vector<10x16x8xf32>
    %c1_i32_59 = arith.constant 1 : i32
    %60 = arith.subi %0, %c1_i32_59 : i32
    %61 = tpu.iota {dimensions = array<i32: 0>} : vector<10x1x1xi32>
    %62 = vector.broadcast %60 : i32 to vector<10x1x1xi32>
    %63 = arith.addi %62, %61 : vector<10x1x1xi32>
    %c0_i32_60 = arith.constant 0 : i32
    %64 = vector.broadcast %c0_i32_60 : i32 to vector<10x1x1xi32>
    %65 = arith.cmpi sge, %63, %64 : vector<10x1x1xi32>
    %c16_i32 = arith.constant 16 : i32
    %66 = vector.broadcast %c16_i32 : i32 to vector<10x1x1xi32>
    %67 = arith.cmpi slt, %63, %66 : vector<10x1x1xi32>
    %68 = arith.andi %65, %67 : vector<10x1x1xi1>
    %cst_61 = arith.constant 0.000000e+00 : f32
    %69 = vector.shape_cast %68 : vector<10x1x1xi1> to vector<10x1x1xi1>
    %70 = vector.broadcast %69 : vector<10x1x1xi1> to vector<10x16x8xi1>
    %71 = vector.broadcast %cst_61 : f32 to vector<10x16x8xf32>
    %72 = arith.select %70, %59, %71 : vector<10x16x8xi1>, vector<10x16x8xf32>
    %cst_62 = arith.constant 0.000000e+00 : f32
    %73 = vector.broadcast %cst_62 : f32 to vector<10x1x8xf32>
    %c0_63 = arith.constant 0 : index
    %c0_64 = arith.constant 0 : index
    %c0_65 = arith.constant 0 : index
    %74 = vector.load %arg10[%c0_63, %c0_64, %c0_65] : memref<10x18x8xf32, #tpu.memory_space<vmem>>, vector<10x1x8xf32>
    tpu.vector_store %arg10[%c0_63, %c0_64, %c0_65], %73 {strides = array<i32>} : memref<10x18x8xf32, #tpu.memory_space<vmem>>, vector<10x1x8xf32>,
    %c0_66 = arith.constant 0 : index
    %c17 = arith.constant 17 : index
    %c0_67 = arith.constant 0 : index
    %75 = vector.load %arg10[%c0_66, %c17, %c0_67] : memref<10x18x8xf32, #tpu.memory_space<vmem>>, vector<10x1x8xf32>
    tpu.vector_store %arg10[%c0_66, %c17, %c0_67], %73 {strides = array<i32>} : memref<10x18x8xf32, #tpu.memory_space<vmem>>, vector<10x1x8xf32>,
    %c0_68 = arith.constant 0 : index
    %c1_69 = arith.constant 1 : index
    %c0_70 = arith.constant 0 : index
    %76 = vector.load %arg10[%c0_68, %c1_69, %c0_70] : memref<10x18x8xf32, #tpu.memory_space<vmem>>, vector<10x16x8xf32>
    tpu.vector_store %arg10[%c0_68, %c1_69, %c0_70], %72 {strides = array<i32>} : memref<10x18x8xf32, #tpu.memory_space<vmem>>, vector<10x16x8xf32>,
    %c0_71 = arith.constant 0 : index
    %c0_72 = arith.constant 0 : index
    %c0_73 = arith.constant 0 : index
    %77 = vector.load %arg10[%c0_71, %c0_72, %c0_73] : memref<10x18x8xf32, #tpu.memory_space<vmem>>, vector<8x16x8xf32>
    %c0_74 = arith.constant 0 : index
    %c0_75 = arith.constant 0 : index
    %c0_76 = arith.constant 0 : index
    %78 = vector.load %arg11[%c0_74, %c0_75, %c0_76] : memref<8x16x72xf32, #tpu.memory_space<vmem>>, vector<8x16x8xf32>
    tpu.vector_store %arg11[%c0_74, %c0_75, %c0_76], %77 {strides = array<i32>} : memref<8x16x72xf32, #tpu.memory_space<vmem>>, vector<8x16x8xf32>,
    %c0_77 = arith.constant 0 : index
    %c1_78 = arith.constant 1 : index
    %c0_79 = arith.constant 0 : index
    %79 = vector.load %arg10[%c0_77, %c1_78, %c0_79] : memref<10x18x8xf32, #tpu.memory_space<vmem>>, vector<8x16x8xf32>
    %c0_80 = arith.constant 0 : index
    %c0_81 = arith.constant 0 : index
    %c8_82 = arith.constant 8 : index
    %80 = vector.load %arg11[%c0_80, %c0_81, %c8_82] : memref<8x16x72xf32, #tpu.memory_space<vmem>>, vector<8x16x8xf32>
    tpu.vector_store %arg11[%c0_80, %c0_81, %c8_82], %79 {strides = array<i32>} : memref<8x16x72xf32, #tpu.memory_space<vmem>>, vector<8x16x8xf32>,
    %c0_83 = arith.constant 0 : index
    %c2_84 = arith.constant 2 : index
    %c0_85 = arith.constant 0 : index
    %81 = vector.load %arg10[%c0_83, %c2_84, %c0_85] : memref<10x18x8xf32, #tpu.memory_space<vmem>>, vector<8x16x8xf32>
    %c0_86 = arith.constant 0 : index
    %c0_87 = arith.constant 0 : index
    %c16_88 = arith.constant 16 : index
    %82 = vector.load %arg11[%c0_86, %c0_87, %c16_88] : memref<8x16x72xf32, #tpu.memory_space<vmem>>, vector<8x16x8xf32>
    tpu.vector_store %arg11[%c0_86, %c0_87, %c16_88], %81 {strides = array<i32>} : memref<8x16x72xf32, #tpu.memory_space<vmem>>, vector<8x16x8xf32>,
    %c1_89 = arith.constant 1 : index
    %c0_90 = arith.constant 0 : index
    %c0_91 = arith.constant 0 : index
    %83 = vector.load %arg10[%c1_89, %c0_90, %c0_91] : memref<10x18x8xf32, #tpu.memory_space<vmem>>, vector<8x16x8xf32>
    %c0_92 = arith.constant 0 : index
    %c0_93 = arith.constant 0 : index
    %c24_94 = arith.constant 24 : index
    %84 = vector.load %arg11[%c0_92, %c0_93, %c24_94] : memref<8x16x72xf32, #tpu.memory_space<vmem>>, vector<8x16x8xf32>
    tpu.vector_store %arg11[%c0_92, %c0_93, %c24_94], %83 {strides = array<i32>} : memref<8x16x72xf32, #tpu.memory_space<vmem>>, vector<8x16x8xf32>,
    %c1_95 = arith.constant 1 : index
    %c1_96 = arith.constant 1 : index
    %c0_97 = arith.constant 0 : index
    %85 = vector.load %arg10[%c1_95, %c1_96, %c0_97] : memref<10x18x8xf32, #tpu.memory_space<vmem>>, vector<8x16x8xf32>
    %c0_98 = arith.constant 0 : index
    %c0_99 = arith.constant 0 : index
    %c32_100 = arith.constant 32 : index
    %86 = vector.load %arg11[%c0_98, %c0_99, %c32_100] : memref<8x16x72xf32, #tpu.memory_space<vmem>>, vector<8x16x8xf32>
    tpu.vector_store %arg11[%c0_98, %c0_99, %c32_100], %85 {strides = array<i32>} : memref<8x16x72xf32, #tpu.memory_space<vmem>>, vector<8x16x8xf32>,
    %c1_101 = arith.constant 1 : index
    %c2_102 = arith.constant 2 : index
    %c0_103 = arith.constant 0 : index
    %87 = vector.load %arg10[%c1_101, %c2_102, %c0_103] : memref<10x18x8xf32, #tpu.memory_space<vmem>>, vector<8x16x8xf32>
    %c0_104 = arith.constant 0 : index
    %c0_105 = arith.constant 0 : index
    %c40 = arith.constant 40 : index
    %88 = vector.load %arg11[%c0_104, %c0_105, %c40] : memref<8x16x72xf32, #tpu.memory_space<vmem>>, vector<8x16x8xf32>
    tpu.vector_store %arg11[%c0_104, %c0_105, %c40], %87 {strides = array<i32>} : memref<8x16x72xf32, #tpu.memory_space<vmem>>, vector<8x16x8xf32>,
    %c2_106 = arith.constant 2 : index
    %c0_107 = arith.constant 0 : index
    %c0_108 = arith.constant 0 : index
    %89 = vector.load %arg10[%c2_106, %c0_107, %c0_108] : memref<10x18x8xf32, #tpu.memory_space<vmem>>, vector<8x16x8xf32>
    %c0_109 = arith.constant 0 : index
    %c0_110 = arith.constant 0 : index
    %c48 = arith.constant 48 : index
    %90 = vector.load %arg11[%c0_109, %c0_110, %c48] : memref<8x16x72xf32, #tpu.memory_space<vmem>>, vector<8x16x8xf32>
    tpu.vector_store %arg11[%c0_109, %c0_110, %c48], %89 {strides = array<i32>} : memref<8x16x72xf32, #tpu.memory_space<vmem>>, vector<8x16x8xf32>,
    %c2_111 = arith.constant 2 : index
    %c1_112 = arith.constant 1 : index
    %c0_113 = arith.constant 0 : index
    %91 = vector.load %arg10[%c2_111, %c1_112, %c0_113] : memref<10x18x8xf32, #tpu.memory_space<vmem>>, vector<8x16x8xf32>
    %c0_114 = arith.constant 0 : index
    %c0_115 = arith.constant 0 : index
    %c56 = arith.constant 56 : index
    %92 = vector.load %arg11[%c0_114, %c0_115, %c56] : memref<8x16x72xf32, #tpu.memory_space<vmem>>, vector<8x16x8xf32>
    tpu.vector_store %arg11[%c0_114, %c0_115, %c56], %91 {strides = array<i32>} : memref<8x16x72xf32, #tpu.memory_space<vmem>>, vector<8x16x8xf32>,
    %c2_116 = arith.constant 2 : index
    %c2_117 = arith.constant 2 : index
    %c0_118 = arith.constant 0 : index
    %93 = vector.load %arg10[%c2_116, %c2_117, %c0_118] : memref<10x18x8xf32, #tpu.memory_space<vmem>>, vector<8x16x8xf32>
    %c0_119 = arith.constant 0 : index
    %c0_120 = arith.constant 0 : index
    %c64 = arith.constant 64 : index
    %94 = vector.load %arg11[%c0_119, %c0_120, %c64] : memref<8x16x72xf32, #tpu.memory_space<vmem>>, vector<8x16x8xf32>
    tpu.vector_store %arg11[%c0_119, %c0_120, %c64], %93 {strides = array<i32>} : memref<8x16x72xf32, #tpu.memory_space<vmem>>, vector<8x16x8xf32>,
    %c0_121 = arith.constant 0 : index
    %c0_122 = arith.constant 0 : index
    %c0_123 = arith.constant 0 : index
    %95 = vector.load %arg11[%c0_121, %c0_122, %c0_123] : memref<8x16x72xf32, #tpu.memory_space<vmem>>, vector<8x16x72xf32>
    %96 = vector.shape_cast %95 : vector<8x16x72xf32> to vector<128x72xf32>
    %97 = arith.truncf %96 : vector<128x72xf32> to vector<128x72xbf16>
    %c0_124 = arith.constant 0 : index
    %c0_125 = arith.constant 0 : index
    %98 = vector.load %arg4[%c0_124, %c0_125] : memref<72x8xbf16, #tpu.memory_space<vmem>>, vector<72x8xbf16>
    %cst_126 = arith.constant dense<0.000000e+00> : vector<128x8xf32>
    %99 = tpu.matmul %97, %98, %cst_126 {dimension_numbers = #tpu.dot_dimension_numbers<[1], [0], [0], [1], [0, 0, 1, 1], [], []>} : vector<128x72xbf16>, vector<72x8xbf16>, vector<128x8xf32> -> vector<128x8xf32>
    %100 = vector.broadcast %6 : vector<1x8xf32> to vector<128x8xf32>
    %101 = arith.mulf %99, %100 : vector<128x8xf32>
    %102 = vector.broadcast %7 : vector<1x8xf32> to vector<128x8xf32>
    %103 = arith.addf %101, %102 : vector<128x8xf32>
    %c1_i32_127 = arith.constant 1 : i32
    %104 = arith.muli %0, %c1_i32_127 : i32
    %c2_i32_128 = arith.constant 2 : i32
    %105 = arith.addi %104, %c2_i32_128 : i32
    %106 = arith.index_cast %105 : i32 to index
    %c1_129 = arith.constant 1 : index
    %c0_130 = arith.constant 0 : index
    %107 = vector.load %arg8[%106, %c1_129, %c0_130] : memref<20x18x4xf32, #tpu.memory_space<vmem>>, vector<8x16x4xf32>
    %c4_131 = arith.constant 4 : index
    %c0_132 = arith.constant 0 : index
    %108 = vector.load %arg6[%c4_131, %c0_132] : memref<6x8xf32, #tpu.memory_space<vmem>>, vector<1x8xf32>
    %c5 = arith.constant 5 : index
    %c0_133 = arith.constant 0 : index
    %109 = vector.load %arg6[%c5, %c0_133] : memref<6x8xf32, #tpu.memory_space<vmem>>, vector<1x8xf32>
    %110 = vector.shape_cast %107 : vector<8x16x4xf32> to vector<128x4xf32>
    %111 = arith.truncf %110 : vector<128x4xf32> to vector<128x4xbf16>
    %c0_134 = arith.constant 0 : index
    %c0_135 = arith.constant 0 : index
    %112 = vector.load %arg5[%c0_134, %c0_135] : memref<4x8xbf16, #tpu.memory_space<vmem>>, vector<4x8xbf16>
    %cst_136 = arith.constant dense<0.000000e+00> : vector<128x8xf32>
    %113 = tpu.matmul %111, %112, %cst_136 {dimension_numbers = #tpu.dot_dimension_numbers<[1], [0], [0], [1], [0, 0, 1, 1], [], []>} : vector<128x4xbf16>, vector<4x8xbf16>, vector<128x8xf32> -> vector<128x8xf32>
    %114 = vector.broadcast %108 : vector<1x8xf32> to vector<128x8xf32>
    %115 = arith.mulf %113, %114 : vector<128x8xf32>
    %116 = vector.broadcast %109 : vector<1x8xf32> to vector<128x8xf32>
    %117 = arith.addf %115, %116 : vector<128x8xf32>
    %118 = arith.addf %103, %117 : vector<128x8xf32>
    %cst_137 = arith.constant 0.000000e+00 : f32
    %119 = vector.broadcast %cst_137 : f32 to vector<128x8xf32>
    %120 = arith.maximumf %118, %119 : vector<128x8xf32>
    %121 = vector.shape_cast %120 : vector<128x8xf32> to vector<8x16x8xf32>
    %122 = vector.extract_strided_slice %121 {offsets = [0, 0, 0], sizes = [8, 1, 8], strides = [1, 1, 1]} : vector<8x16x8xf32> to vector<8x1x8xf32>
    %123 = vector.shape_cast %122 : vector<8x1x8xf32> to vector<8x8xf32>
    %c0_138 = arith.constant 0 : index
    %c0_139 = arith.constant 0 : index
    %c0_140 = arith.constant 0 : index
    %124 = vector.load %arg7[%c0_138, %c0_139, %c0_140] : memref<1x8x128xf32, #tpu.memory_space<vmem>>, vector<1x8x8xf32>
    %125 = vector.shape_cast %124 : vector<1x8x8xf32> to vector<8x8xf32>
    %126 = vector.shape_cast %123 : vector<8x8xf32> to vector<1x8x8xf32>
    tpu.vector_store %arg7[%c0_138, %c0_139, %c0_140], %126 {strides = array<i32>} : memref<1x8x128xf32, #tpu.memory_space<vmem>>, vector<1x8x8xf32>,
    %127 = vector.extract_strided_slice %121 {offsets = [0, 1, 0], sizes = [8, 1, 8], strides = [1, 1, 1]} : vector<8x16x8xf32> to vector<8x1x8xf32>
    %128 = vector.shape_cast %127 : vector<8x1x8xf32> to vector<8x8xf32>
    %c0_141 = arith.constant 0 : index
    %c0_142 = arith.constant 0 : index
    %c8_143 = arith.constant 8 : index
    %129 = vector.load %arg7[%c0_141, %c0_142, %c8_143] : memref<1x8x128xf32, #tpu.memory_space<vmem>>, vector<1x8x8xf32>
    %130 = vector.shape_cast %129 : vector<1x8x8xf32> to vector<8x8xf32>
    %131 = vector.shape_cast %128 : vector<8x8xf32> to vector<1x8x8xf32>
    tpu.vector_store %arg7[%c0_141, %c0_142, %c8_143], %131 {strides = array<i32>} : memref<1x8x128xf32, #tpu.memory_space<vmem>>, vector<1x8x8xf32>,
    %132 = vector.extract_strided_slice %121 {offsets = [0, 2, 0], sizes = [8, 1, 8], strides = [1, 1, 1]} : vector<8x16x8xf32> to vector<8x1x8xf32>
    %133 = vector.shape_cast %132 : vector<8x1x8xf32> to vector<8x8xf32>
    %c0_144 = arith.constant 0 : index
    %c0_145 = arith.constant 0 : index
    %c16_146 = arith.constant 16 : index
    %134 = vector.load %arg7[%c0_144, %c0_145, %c16_146] : memref<1x8x128xf32, #tpu.memory_space<vmem>>, vector<1x8x8xf32>
    %135 = vector.shape_cast %134 : vector<1x8x8xf32> to vector<8x8xf32>
    %136 = vector.shape_cast %133 : vector<8x8xf32> to vector<1x8x8xf32>
    tpu.vector_store %arg7[%c0_144, %c0_145, %c16_146], %136 {strides = array<i32>} : memref<1x8x128xf32, #tpu.memory_space<vmem>>, vector<1x8x8xf32>,
    %137 = vector.extract_strided_slice %121 {offsets = [0, 3, 0], sizes = [8, 1, 8], strides = [1, 1, 1]} : vector<8x16x8xf32> to vector<8x1x8xf32>
    %138 = vector.shape_cast %137 : vector<8x1x8xf32> to vector<8x8xf32>
    %c0_147 = arith.constant 0 : index
    %c0_148 = arith.constant 0 : index
    %c24_149 = arith.constant 24 : index
    %139 = vector.load %arg7[%c0_147, %c0_148, %c24_149] : memref<1x8x128xf32, #tpu.memory_space<vmem>>, vector<1x8x8xf32>
    %140 = vector.shape_cast %139 : vector<1x8x8xf32> to vector<8x8xf32>
    %141 = vector.shape_cast %138 : vector<8x8xf32> to vector<1x8x8xf32>
    tpu.vector_store %arg7[%c0_147, %c0_148, %c24_149], %141 {strides = array<i32>} : memref<1x8x128xf32, #tpu.memory_space<vmem>>, vector<1x8x8xf32>,
    %142 = vector.extract_strided_slice %121 {offsets = [0, 4, 0], sizes = [8, 1, 8], strides = [1, 1, 1]} : vector<8x16x8xf32> to vector<8x1x8xf32>
    %143 = vector.shape_cast %142 : vector<8x1x8xf32> to vector<8x8xf32>
    %c0_150 = arith.constant 0 : index
    %c0_151 = arith.constant 0 : index
    %c32_152 = arith.constant 32 : index
    %144 = vector.load %arg7[%c0_150, %c0_151, %c32_152] : memref<1x8x128xf32, #tpu.memory_space<vmem>>, vector<1x8x8xf32>
    %145 = vector.shape_cast %144 : vector<1x8x8xf32> to vector<8x8xf32>
    %146 = vector.shape_cast %143 : vector<8x8xf32> to vector<1x8x8xf32>
    tpu.vector_store %arg7[%c0_150, %c0_151, %c32_152], %146 {strides = array<i32>} : memref<1x8x128xf32, #tpu.memory_space<vmem>>, vector<1x8x8xf32>,
    %147 = vector.extract_strided_slice %121 {offsets = [0, 5, 0], sizes = [8, 1, 8], strides = [1, 1, 1]} : vector<8x16x8xf32> to vector<8x1x8xf32>
    %148 = vector.shape_cast %147 : vector<8x1x8xf32> to vector<8x8xf32>
    %c0_153 = arith.constant 0 : index
    %c0_154 = arith.constant 0 : index
    %c40_155 = arith.constant 40 : index
    %149 = vector.load %arg7[%c0_153, %c0_154, %c40_155] : memref<1x8x128xf32, #tpu.memory_space<vmem>>, vector<1x8x8xf32>
    %150 = vector.shape_cast %149 : vector<1x8x8xf32> to vector<8x8xf32>
    %151 = vector.shape_cast %148 : vector<8x8xf32> to vector<1x8x8xf32>
    tpu.vector_store %arg7[%c0_153, %c0_154, %c40_155], %151 {strides = array<i32>} : memref<1x8x128xf32, #tpu.memory_space<vmem>>, vector<1x8x8xf32>,
    %152 = vector.extract_strided_slice %121 {offsets = [0, 6, 0], sizes = [8, 1, 8], strides = [1, 1, 1]} : vector<8x16x8xf32> to vector<8x1x8xf32>
    %153 = vector.shape_cast %152 : vector<8x1x8xf32> to vector<8x8xf32>
    %c0_156 = arith.constant 0 : index
    %c0_157 = arith.constant 0 : index
    %c48_158 = arith.constant 48 : index
    %154 = vector.load %arg7[%c0_156, %c0_157, %c48_158] : memref<1x8x128xf32, #tpu.memory_space<vmem>>, vector<1x8x8xf32>
    %155 = vector.shape_cast %154 : vector<1x8x8xf32> to vector<8x8xf32>
    %156 = vector.shape_cast %153 : vector<8x8xf32> to vector<1x8x8xf32>
    tpu.vector_store %arg7[%c0_156, %c0_157, %c48_158], %156 {strides = array<i32>} : memref<1x8x128xf32, #tpu.memory_space<vmem>>, vector<1x8x8xf32>,
    %157 = vector.extract_strided_slice %121 {offsets = [0, 7, 0], sizes = [8, 1, 8], strides = [1, 1, 1]} : vector<8x16x8xf32> to vector<8x1x8xf32>
    %158 = vector.shape_cast %157 : vector<8x1x8xf32> to vector<8x8xf32>
    %c0_159 = arith.constant 0 : index
    %c0_160 = arith.constant 0 : index
    %c56_161 = arith.constant 56 : index
    %159 = vector.load %arg7[%c0_159, %c0_160, %c56_161] : memref<1x8x128xf32, #tpu.memory_space<vmem>>, vector<1x8x8xf32>
    %160 = vector.shape_cast %159 : vector<1x8x8xf32> to vector<8x8xf32>
    %161 = vector.shape_cast %158 : vector<8x8xf32> to vector<1x8x8xf32>
    tpu.vector_store %arg7[%c0_159, %c0_160, %c56_161], %161 {strides = array<i32>} : memref<1x8x128xf32, #tpu.memory_space<vmem>>, vector<1x8x8xf32>,
    %162 = vector.extract_strided_slice %121 {offsets = [0, 8, 0], sizes = [8, 1, 8], strides = [1, 1, 1]} : vector<8x16x8xf32> to vector<8x1x8xf32>
    %163 = vector.shape_cast %162 : vector<8x1x8xf32> to vector<8x8xf32>
    %c0_162 = arith.constant 0 : index
    %c0_163 = arith.constant 0 : index
    %c64_164 = arith.constant 64 : index
    %164 = vector.load %arg7[%c0_162, %c0_163, %c64_164] : memref<1x8x128xf32, #tpu.memory_space<vmem>>, vector<1x8x8xf32>
    %165 = vector.shape_cast %164 : vector<1x8x8xf32> to vector<8x8xf32>
    %166 = vector.shape_cast %163 : vector<8x8xf32> to vector<1x8x8xf32>
    tpu.vector_store %arg7[%c0_162, %c0_163, %c64_164], %166 {strides = array<i32>} : memref<1x8x128xf32, #tpu.memory_space<vmem>>, vector<1x8x8xf32>,
    %167 = vector.extract_strided_slice %121 {offsets = [0, 9, 0], sizes = [8, 1, 8], strides = [1, 1, 1]} : vector<8x16x8xf32> to vector<8x1x8xf32>
    %168 = vector.shape_cast %167 : vector<8x1x8xf32> to vector<8x8xf32>
    %c0_165 = arith.constant 0 : index
    %c0_166 = arith.constant 0 : index
    %c72 = arith.constant 72 : index
    %169 = vector.load %arg7[%c0_165, %c0_166, %c72] : memref<1x8x128xf32, #tpu.memory_space<vmem>>, vector<1x8x8xf32>
    %170 = vector.shape_cast %169 : vector<1x8x8xf32> to vector<8x8xf32>
    %171 = vector.shape_cast %168 : vector<8x8xf32> to vector<1x8x8xf32>
    tpu.vector_store %arg7[%c0_165, %c0_166, %c72], %171 {strides = array<i32>} : memref<1x8x128xf32, #tpu.memory_space<vmem>>, vector<1x8x8xf32>,
    %172 = vector.extract_strided_slice %121 {offsets = [0, 10, 0], sizes = [8, 1, 8], strides = [1, 1, 1]} : vector<8x16x8xf32> to vector<8x1x8xf32>
    %173 = vector.shape_cast %172 : vector<8x1x8xf32> to vector<8x8xf32>
    %c0_167 = arith.constant 0 : index
    %c0_168 = arith.constant 0 : index
    %c80 = arith.constant 80 : index
    %174 = vector.load %arg7[%c0_167, %c0_168, %c80] : memref<1x8x128xf32, #tpu.memory_space<vmem>>, vector<1x8x8xf32>
    %175 = vector.shape_cast %174 : vector<1x8x8xf32> to vector<8x8xf32>
    %176 = vector.shape_cast %173 : vector<8x8xf32> to vector<1x8x8xf32>
    tpu.vector_store %arg7[%c0_167, %c0_168, %c80], %176 {strides = array<i32>} : memref<1x8x128xf32, #tpu.memory_space<vmem>>, vector<1x8x8xf32>,
    %177 = vector.extract_strided_slice %121 {offsets = [0, 11, 0], sizes = [8, 1, 8], strides = [1, 1, 1]} : vector<8x16x8xf32> to vector<8x1x8xf32>
    %178 = vector.shape_cast %177 : vector<8x1x8xf32> to vector<8x8xf32>
    %c0_169 = arith.constant 0 : index
    %c0_170 = arith.constant 0 : index
    %c88 = arith.constant 88 : index
    %179 = vector.load %arg7[%c0_169, %c0_170, %c88] : memref<1x8x128xf32, #tpu.memory_space<vmem>>, vector<1x8x8xf32>
    %180 = vector.shape_cast %179 : vector<1x8x8xf32> to vector<8x8xf32>
    %181 = vector.shape_cast %178 : vector<8x8xf32> to vector<1x8x8xf32>
    tpu.vector_store %arg7[%c0_169, %c0_170, %c88], %181 {strides = array<i32>} : memref<1x8x128xf32, #tpu.memory_space<vmem>>, vector<1x8x8xf32>,
    %182 = vector.extract_strided_slice %121 {offsets = [0, 12, 0], sizes = [8, 1, 8], strides = [1, 1, 1]} : vector<8x16x8xf32> to vector<8x1x8xf32>
    %183 = vector.shape_cast %182 : vector<8x1x8xf32> to vector<8x8xf32>
    %c0_171 = arith.constant 0 : index
    %c0_172 = arith.constant 0 : index
    %c96 = arith.constant 96 : index
    %184 = vector.load %arg7[%c0_171, %c0_172, %c96] : memref<1x8x128xf32, #tpu.memory_space<vmem>>, vector<1x8x8xf32>
    %185 = vector.shape_cast %184 : vector<1x8x8xf32> to vector<8x8xf32>
    %186 = vector.shape_cast %183 : vector<8x8xf32> to vector<1x8x8xf32>
    tpu.vector_store %arg7[%c0_171, %c0_172, %c96], %186 {strides = array<i32>} : memref<1x8x128xf32, #tpu.memory_space<vmem>>, vector<1x8x8xf32>,
    %187 = vector.extract_strided_slice %121 {offsets = [0, 13, 0], sizes = [8, 1, 8], strides = [1, 1, 1]} : vector<8x16x8xf32> to vector<8x1x8xf32>
    %188 = vector.shape_cast %187 : vector<8x1x8xf32> to vector<8x8xf32>
    %c0_173 = arith.constant 0 : index
    %c0_174 = arith.constant 0 : index
    %c104 = arith.constant 104 : index
    %189 = vector.load %arg7[%c0_173, %c0_174, %c104] : memref<1x8x128xf32, #tpu.memory_space<vmem>>, vector<1x8x8xf32>
    %190 = vector.shape_cast %189 : vector<1x8x8xf32> to vector<8x8xf32>
    %191 = vector.shape_cast %188 : vector<8x8xf32> to vector<1x8x8xf32>
    tpu.vector_store %arg7[%c0_173, %c0_174, %c104], %191 {strides = array<i32>} : memref<1x8x128xf32, #tpu.memory_space<vmem>>, vector<1x8x8xf32>,
    %192 = vector.extract_strided_slice %121 {offsets = [0, 14, 0], sizes = [8, 1, 8], strides = [1, 1, 1]} : vector<8x16x8xf32> to vector<8x1x8xf32>
    %193 = vector.shape_cast %192 : vector<8x1x8xf32> to vector<8x8xf32>
    %c0_175 = arith.constant 0 : index
    %c0_176 = arith.constant 0 : index
    %c112 = arith.constant 112 : index
    %194 = vector.load %arg7[%c0_175, %c0_176, %c112] : memref<1x8x128xf32, #tpu.memory_space<vmem>>, vector<1x8x8xf32>
    %195 = vector.shape_cast %194 : vector<1x8x8xf32> to vector<8x8xf32>
    %196 = vector.shape_cast %193 : vector<8x8xf32> to vector<1x8x8xf32>
    tpu.vector_store %arg7[%c0_175, %c0_176, %c112], %196 {strides = array<i32>} : memref<1x8x128xf32, #tpu.memory_space<vmem>>, vector<1x8x8xf32>,
    %197 = vector.extract_strided_slice %121 {offsets = [0, 15, 0], sizes = [8, 1, 8], strides = [1, 1, 1]} : vector<8x16x8xf32> to vector<8x1x8xf32>
    %198 = vector.shape_cast %197 : vector<8x1x8xf32> to vector<8x8xf32>
    %c0_177 = arith.constant 0 : index
    %c0_178 = arith.constant 0 : index
    %c120 = arith.constant 120 : index
    %199 = vector.load %arg7[%c0_177, %c0_178, %c120] : memref<1x8x128xf32, #tpu.memory_space<vmem>>, vector<1x8x8xf32>
    %200 = vector.shape_cast %199 : vector<1x8x8xf32> to vector<8x8xf32>
    %201 = vector.shape_cast %198 : vector<8x8xf32> to vector<1x8x8xf32>
    tpu.vector_store %arg7[%c0_177, %c0_178, %c120], %201 {strides = array<i32>} : memref<1x8x128xf32, #tpu.memory_space<vmem>>, vector<1x8x8xf32>,
    return
  }
  func.func @transform_0(%arg0: i32, %arg1: i32) -> (i32, i32, i32, i32) {
    %c0_i32 = arith.constant 0 : i32
    %c0_i32_0 = arith.constant 0 : i32
    %c0_i32_1 = arith.constant 0 : i32
    %c0_i32_2 = arith.constant 0 : i32
    return %arg0, %c0_i32, %c0_i32_0, %c0_i32_1 : i32, i32, i32, i32
  }
  func.func @transform_1(%arg0: i32, %arg1: i32) -> (i32, i32) {
    %c0_i32 = arith.constant 0 : i32
    %c0_i32_0 = arith.constant 0 : i32
    %c0_i32_1 = arith.constant 0 : i32
    return %c0_i32, %c0_i32_0 : i32, i32
  }
  func.func @transform_2(%arg0: i32, %arg1: i32) -> (i32, i32) {
    %c0_i32 = arith.constant 0 : i32
    %c0_i32_0 = arith.constant 0 : i32
    %c0_i32_1 = arith.constant 0 : i32
    return %c0_i32, %c0_i32_0 : i32, i32
  }
  func.func @transform_3(%arg0: i32, %arg1: i32) -> (i32, i32) {
    %c0_i32 = arith.constant 0 : i32
    %c0_i32_0 = arith.constant 0 : i32
    %c0_i32_1 = arith.constant 0 : i32
    return %c0_i32, %c0_i32_0 : i32, i32
  }
  func.func @transform_4(%arg0: i32, %arg1: i32) -> (i32, i32) {
    %c0_i32 = arith.constant 0 : i32
    %c0_i32_0 = arith.constant 0 : i32
    %c0_i32_1 = arith.constant 0 : i32
    return %c0_i32, %c0_i32_0 : i32, i32
  }
  func.func @transform_5(%arg0: i32, %arg1: i32) -> (i32, i32, i32) {
    %c0_i32 = arith.constant 0 : i32
    %c0_i32_0 = arith.constant 0 : i32
    return %arg0, %arg1, %c0_i32 : i32, i32, i32
  }
}

</mosaic_0001>

<llo_original>
// kernel: tpu_custom_call.1
$region0: #{tpu_custom_call.1}
  #allocation0 [shape = 'u32[]', space=smem, size = 0x4, offset = 0x4, fixed_abs, tag = 'smem constant byte address 0x4 - core index']
  #allocation1 [shape = 'u32[144,128]{1,0:T(1,128)}', space=vmem, size = 0x12000, scoped, tag = 'internal scratch']
  #allocation2 [shape = 'f32[20,18,4]{2,1,0:T(8,128)}', space=vmem, size = 0x3c000, scoped, tag = 'scratch operand']
  #allocation3 [shape = 'f32[10,16,36]{2,1,0:T(8,128)}', space=vmem, size = 0x14000, scoped, tag = 'scratch operand']
  #allocation4 [shape = 'f32[10,18,8]{2,1,0:T(8,128)}', space=vmem, size = 0x1e000, scoped, tag = 'scratch operand']
  #allocation5 [shape = 'f32[8,16,72]{2,1,0:T(8,128)}', space=vmem, size = 0x10000, scoped, tag = 'scratch operand']
  %s0 = inlined_call_operand.vmem [shape: f32[2,16,16,4], index: 0, kind: input, shape index: {}]
  %s1 = inlined_call_operand.vmem [shape: bf16[36,8], index: 1, kind: input, shape index: {}]
  %s2 = inlined_call_operand.vmem [shape: bf16[72,8], index: 2, kind: input, shape index: {}]
  %s3 = inlined_call_operand.vmem [shape: bf16[4,8], index: 3, kind: input, shape index: {}]
  %s4 = inlined_call_operand.vmem [shape: f32[6,8], index: 4, kind: input, shape index: {}]
  %s5 = inlined_call_operand.hbm [shape: f32[2,16,128], index: 5, kind: output, shape index: {}]
  %s6 = sld [smem:[#allocation0]]
  $region57: #{tpu_custom_call.1} parent=0
    _
  %s8 = ssub.s32 1, %s6
  %s9 = scalar_select 0, %s8, %s6
  $region1: #{tpu_custom_call.1} parent=0
    #allocation6 [shape = 'u8[8192]{0}', space=vmem, size = 0x2000, scoped, tag = 'output window, operand 0']
    #allocation7 [shape = 's32[2]{0}', space=sflag, size = 0x8, scoped, tag = 'scoped memory for tpu_custom_call.1']
    %10 = vsyncpa [#allocation7], 0
    %s11 = scalar_lea.sflag [#allocation7], 1
    %12 = vsyncpa %s11, 0
    loop: start=0, step=1, limit=6
    $region2: #{tpu_custom_call.1} parent=1 // loop_pre_header
      _
    $region3: #{tpu_custom_call.1} parent=1 // loop_header
      %s14 = sphi 0, %s18
      %p15 = scmp.ge.s32.totalorder %s14, 6
      %s21 = sphi 0, %s33
      %s22 = sphi 0, %s29
      %s23 = sphi 0, %s21
      %s24 = sphi 0, %s22
      %s25 = sphi 0, %s23
      %s26 = sphi 0, %s24
      %s36 = sphi 0, %s38
      %s39 = sphi 0, %s36
      %s40 = sphi 0, %s39
      %s56 = sphi 0, %s40
      %s60 = sphi 0, %s60
      %s62 = sphi 0, %s60
      %s63 = sphi 0, %s62
      %s77 = sphi 0, %s63
      %s81 = sphi 0, %s81
      %s83 = sphi 0, %s81
      %s84 = sphi 0, %s83
      %s98 = sphi 0, %s84
      %s102 = sphi 0, %s102
      %s104 = sphi 0, %s102
      %s105 = sphi 0, %s104
      %s119 = sphi 0, %s105
      %s123 = sphi 0, %s123
      %s125 = sphi 0, %s123
      %s126 = sphi 0, %s125
      %s140 = sphi 0, %s126
      %s148 = sphi 0, %s150
      %s151 = sphi 0, %s148
      %s152 = sphi 0, %s151
      %s168 = sphi 0, %s152
    $region4: #{tpu_custom_call.1} parent=1 // loop_header_branch
      %17 = sbr.rel (%p15) target = $region8
    $region5: #{tpu_custom_call.1} parent=1 // loop_body
      %s19 = ssub.s32 %s14, 1
      %s20 = ssub.s32 %s14, 2
      %s27 = sadd.s32 1, %s22
      %p28 = scmp.ge.s32.totalorder %s27, 2
      %s29 = scalar_select %p28, 0, %s27
      %s30 = sadd.s32 1, %s21
      %s31 = scalar_select %p28, %s30, %s21
      %p32 = scmp.ge.s32.totalorder %s31, 2
      %s33 = scalar_select %p32, 0, %s31
      %s34 = ssub.s32 %s21, %s33
      %p35 = scmp.eq.s32.totalorder %s34, 0
      %s37 = sadd.s32 %s36, 1
      %s38 = scalar_select %p35, %s36, %s37
      %p41 = pneg %p35
      %p42 = scmp.eq.s32.totalorder %s14, 3
      %p43 = por %p41, %p42
      %p44 = scmp.ne.s32.totalorder %s36, %s39
      %p45 = scmp.eq.s32.totalorder %s14, 0
      %p46 = por %p44, %p45
      %p47 = scmp.ne.s32.totalorder %s36, %s39
      %p48 = scmp.eq.s32.totalorder %s19, 3
      %p49 = por %p47, %p48
      %p50 = scmp.ne.s32.totalorder %s39, %s40
      %p51 = scmp.eq.s32.totalorder %s19, 0
      %p52 = por %p50, %p51
      %p53 = scmp.ne.s32.totalorder %s39, %s40
      %p54 = scmp.eq.s32.totalorder %s20, 3
      %p55 = por %p53, %p54
      %p57 = scmp.ne.s32.totalorder %s40, %s56
      %p58 = scmp.eq.s32.totalorder %s20, 0
      %p59 = por %p57, %p58
      %s61 = sadd.s32 %s60, 1
      %p64 = scmp.eq.s32.totalorder %s14, 3
      %p65 = scmp.ne.s32.totalorder %s60, %s62
      %p66 = scmp.eq.s32.totalorder %s14, 0
      %p67 = por %p65, %p66
      %p68 = scmp.ne.s32.totalorder %s60, %s62
      %p69 = scmp.eq.s32.totalorder %s19, 3
      %p70 = por %p68, %p69
      %p71 = scmp.ne.s32.totalorder %s62, %s63
      %p72 = scmp.eq.s32.totalorder %s19, 0
      %p73 = por %p71, %p72
      %p74 = scmp.ne.s32.totalorder %s62, %s63
      %p75 = scmp.eq.s32.totalorder %s20, 3
      %p76 = por %p74, %p75
      %p78 = scmp.ne.s32.totalorder %s63, %s77
      %p79 = scmp.eq.s32.totalorder %s20, 0
      %p80 = por %p78, %p79
      %s82 = sadd.s32 %s81, 1
      %p85 = scmp.eq.s32.totalorder %s14, 3
      %p86 = scmp.ne.s32.totalorder %s81, %s83
      %p87 = scmp.eq.s32.totalorder %s14, 0
      %p88 = por %p86, %p87
      %p89 = scmp.ne.s32.totalorder %s81, %s83
      %p90 = scmp.eq.s32.totalorder %s19, 3
      %p91 = por %p89, %p90
      %p92 = scmp.ne.s32.totalorder %s83, %s84
      %p93 = scmp.eq.s32.totalorder %s19, 0
      %p94 = por %p92, %p93
      %p95 = scmp.ne.s32.totalorder %s83, %s84
      %p96 = scmp.eq.s32.totalorder %s20, 3
      %p97 = por %p95, %p96
      %p99 = scmp.ne.s32.totalorder %s84, %s98
      %p100 = scmp.eq.s32.totalorder %s20, 0
      %p101 = por %p99, %p100
      %s103 = sadd.s32 %s102, 1
      %p106 = scmp.eq.s32.totalorder %s14, 3
      %p107 = scmp.ne.s32.totalorder %s102, %s104
      %p108 = scmp.eq.s32.totalorder %s14, 0
      %p109 = por %p107, %p108
      %p110 = scmp.ne.s32.totalorder %s102, %s104
      %p111 = scmp.eq.s32.totalorder %s19, 3
      %p112 = por %p110, %p111
      %p113 = scmp.ne.s32.totalorder %s104, %s105
      %p114 = scmp.eq.s32.totalorder %s19, 0
      %p115 = por %p113, %p114
      %p116 = scmp.ne.s32.totalorder %s104, %s105
      %p117 = scmp.eq.s32.totalorder %s20, 3
      %p118 = por %p116, %p117
      %p120 = scmp.ne.s32.totalorder %s105, %s119
      %p121 = scmp.eq.s32.totalorder %s20, 0
      %p122 = por %p120, %p121
      %s124 = sadd.s32 %s123, 1
      %p127 = scmp.eq.s32.totalorder %s14, 3
      %p128 = scmp.ne.s32.totalorder %s123, %s125
      %p129 = scmp.eq.s32.totalorder %s14, 0
      %p130 = por %p128, %p129
      %p131 = scmp.ne.s32.totalorder %s123, %s125
      %p132 = scmp.eq.s32.totalorder %s19, 3
      %p133 = por %p131, %p132
      %p134 = scmp.ne.s32.totalorder %s125, %s126
      %p135 = scmp.eq.s32.totalorder %s19, 0
      %p136 = por %p134, %p135
      %p137 = scmp.ne.s32.totalorder %s125, %s126
      %p138 = scmp.eq.s32.totalorder %s20, 3
      %p139 = por %p137, %p138
      %p141 = scmp.ne.s32.totalorder %s126, %s140
      %p142 = scmp.eq.s32.totalorder %s20, 0
      %p143 = por %p141, %p142
      %s144 = ssub.s32 %s21, %s33
      %s145 = ssub.s32 %s22, %s29
      %s146 = sor.u32 %s144, %s145
      %p147 = scmp.eq.s32.totalorder %s146, 0
      %s149 = sadd.s32 %s148, 1
      %s150 = scalar_select %p147, %s148, %s149
      %p153 = pneg %p147
      %p154 = scmp.eq.s32.totalorder %s14, 3
      %p155 = por %p153, %p154
      %p156 = scmp.ne.s32.totalorder %s148, %s151
      %p157 = scmp.eq.s32.totalorder %s14, 0
      %p158 = por %p156, %p157
      %p159 = scmp.ne.s32.totalorder %s148, %s151
      %p160 = scmp.eq.s32.totalorder %s19, 3
      %p161 = por %p159, %p160
      %p162 = scmp.ne.s32.totalorder %s151, %s152
      %p163 = scmp.eq.s32.totalorder %s19, 0
      %p164 = por %p162, %p163
      %p165 = scmp.ne.s32.totalorder %s151, %s152
      %p166 = scmp.eq.s32.totalorder %s20, 3
      %p167 = por %p165, %p166
      %p169 = scmp.ne.s32.totalorder %s152, %s168
      %p170 = scmp.eq.s32.totalorder %s20, 0
      %p171 = por %p169, %p170
      %p172 = scmp.le.s32.totalorder 1, %s14
      %p173 = scmp.lt.s32.totalorder %s14, 5
      %p174 = pnand %p172, %p173
      %p175 = pneg %p174
      // Predicated region
      $region9: #{tpu_custom_call.1} parent=5 // pred_check
        _
      $region10: #{tpu_custom_call.1} parent=5 // pred_check_branch
        %177 = sbr.rel (%p174) target = $region12
      $region11: #{tpu_custom_call.1} parent=5 // pred_region
        %s178 = ssub.s32 %s14, 1
        // Predicated region
        $region13: #{tpu_custom_call.1} parent=11 // pred_check
          %p179 = pneg %p73
        $region14: #{tpu_custom_call.1} parent=11 // pred_check_branch
          %181 = sbr.rel (%p179) target = $region16
        $region15: #{tpu_custom_call.1} parent=11 // pred_region
          _
        $region16: #{tpu_custom_call.1} parent=11 // pred_fallthru
          _
        // Predicated region
        $region17: #{tpu_custom_call.1} parent=11 // pred_check
          %p182 = pneg %p94
        $region18: #{tpu_custom_call.1} parent=11 // pred_check_branch
          %184 = sbr.rel (%p182) target = $region20
        $region19: #{tpu_custom_call.1} parent=11 // pred_region
          _
        $region20: #{tpu_custom_call.1} parent=11 // pred_fallthru
          _
        // Predicated region
        $region21: #{tpu_custom_call.1} parent=11 // pred_check
          %p185 = pneg %p115
        $region22: #{tpu_custom_call.1} parent=11 // pred_check_branch
          %187 = sbr.rel (%p185) target = $region24
        $region23: #{tpu_custom_call.1} parent=11 // pred_region
          _
        $region24: #{tpu_custom_call.1} parent=11 // pred_fallthru
          _
        // Predicated region
        $region25: #{tpu_custom_call.1} parent=11 // pred_check
          %p188 = pneg %p136
        $region26: #{tpu_custom_call.1} parent=11 // pred_check_branch
          %190 = sbr.rel (%p188) target = $region28
        $region27: #{tpu_custom_call.1} parent=11 // pred_region
          _
        $region28: #{tpu_custom_call.1} parent=11 // pred_fallthru
          _
      $region12: #{tpu_custom_call.1} parent=5 // pred_fallthru
        _
      %p191 = scmp.lt.s32.totalorder %s14, 4
      // Predicated region
      $region29: #{tpu_custom_call.1} parent=5 // pred_check
        %p192 = pneg %p191
      $region30: #{tpu_custom_call.1} parent=5 // pred_check_branch
        %194 = sbr.rel (%p192) target = $region32
      $region31: #{tpu_custom_call.1} parent=5 // pred_region
        // Predicated region
        $region33: #{tpu_custom_call.1} parent=31 // pred_check
          %p195 = pneg %p46
        $region34: #{tpu_custom_call.1} parent=31 // pred_check_branch
          %197 = sbr.rel (%p195) target = $region36
        $region35: #{tpu_custom_call.1} parent=31 // pred_region
          %p198 = scmp.lt.s32.totalorder %s21, 1
          %s199 = scalar_select %p198, %s21, 1
          %s200 = smul.addr %s199, 32
          %s201 = smul.addr %s200, 8
          %s202 = scalar_lea.vmem %s0, %s201
        $region36: #{tpu_custom_call.1} parent=31 // pred_fallthru
          _
      $region32: #{tpu_custom_call.1} parent=5 // pred_fallthru
        _
      %p203 = scmp.le.s32.totalorder 1, %s14
      %p204 = scmp.lt.s32.totalorder %s14, 5
      %p205 = pnand %p203, %p204
      %p206 = pneg %p205
      // Predicated region
      $region37: #{tpu_custom_call.1} parent=5 // pred_check
        _
      $region38: #{tpu_custom_call.1} parent=5 // pred_check_branch
        %208 = sbr.rel (%p205) target = $region40
      $region39: #{tpu_custom_call.1} parent=5 // pred_region
        %s209 = ssub.s32 %s14, 1
        %p210 = scmp.lt.s32.totalorder %s23, 1
        %s211 = scalar_select %p210, %s23, 1
        %s212 = smul.addr %s211, 32
        %s213 = smul.addr %s212, 8
        %s214 = scalar_lea.vmem %s0, %s213
        %p215 = pneg %p52
        %p216 = pneg %p49
        %p217 = pneg %p73
        %p218 = pneg %p70
        %p219 = pneg %p94
        %p220 = pneg %p91
        %p221 = pneg %p115
        %p222 = pneg %p112
        %p223 = pneg %p136
        %p224 = pneg %p133
        %p225 = pneg %p164
        %p226 = pneg %p161
        %s227 = sand.u32 %s151, 1
        %s228 = scalar_lea.sflag [#allocation7], %s227
        %s229 = sand.u32 %s151, 1
        %s230 = smul.addr %s229, 8
        %s231 = scalar_lea.vmem [#allocation6], %s230
        %p232 = scmp.lt.s32.totalorder %s23, 1
        %s233 = scalar_select %p232, %s23, 1
        %s234 = smul.addr %s233, 32
        %s235 = smul.addr %s234, 8
        %s236 = scalar_lea.vmem %s0, %s235
        %s238 = smul.u32 %s24, 8
        %p239 = scmp.eq.s32.totalorder %s24, 0
        // Predicated region
        $region41: #{tpu_custom_call.1} parent=39 // pred_check
          %p240 = pneg %p239
        $region42: #{tpu_custom_call.1} parent=39 // pred_check_branch
          %242 = sbr.rel (%p240) target = $region44
        $region43: #{tpu_custom_call.1} parent=39 // pred_region
          %vm243 = vcmask 31744
          %244 = vst.msk [vmem:[#allocation2] sm:$0xff] %vm243, 0.0
          %245 = vst.msk [vmem:[#allocation2 + $0x8] sm:$0xff] %vm243, 0.0
          %vm246 = vcmask 25600
          %247 = vst.msk [vmem:[#allocation2 + $0x10] sm:$0x3] %vm246, 0.0
          %248 = vst.msk [vmem:[#allocation2 + $0x18] sm:$0xff] %vm243, 0.0
          %249 = vst.msk [vmem:[#allocation2 + $0x20] sm:$0xff] %vm243, 0.0
          %250 = vst.msk [vmem:[#allocation2 + $0x28] sm:$0x3] %vm246, 0.0
          %251 = vst.msk [vmem:[#allocation2 + $0x30] sm:$0xff] %vm243, 0.0
          %252 = vst.msk [vmem:[#allocation2 + $0x38] sm:$0xff] %vm243, 0.0
          %253 = vst.msk [vmem:[#allocation2 + $0x40] sm:$0x3] %vm246, 0.0
          %254 = vst.msk [vmem:[#allocation2 + $0x48] sm:$0xff] %vm243, 0.0
          %255 = vst.msk [vmem:[#allocation2 + $0x50] sm:$0xff] %vm243, 0.0
          %256 = vst.msk [vmem:[#allocation2 + $0x58] sm:$0x3] %vm246, 0.0
          %257 = vst.msk [vmem:[#allocation2 + $0x60] sm:$0xff] %vm243, 0.0
          %258 = vst.msk [vmem:[#allocation2 + $0x68] sm:$0xff] %vm243, 0.0
          %259 = vst.msk [vmem:[#allocation2 + $0x70] sm:$0x3] %vm246, 0.0
          %260 = vst.msk [vmem:[#allocation2 + $0x78] sm:$0xff] %vm243, 0.0
          %261 = vst.msk [vmem:[#allocation2 + $0x80] sm:$0xff] %vm243, 0.0
          %262 = vst.msk [vmem:[#allocation2 + $0x88] sm:$0x3] %vm246, 0.0
          %263 = vst.msk [vmem:[#allocation2 + $0x90] sm:$0xff] %vm243, 0.0
          %264 = vst.msk [vmem:[#allocation2 + $0x98] sm:$0xff] %vm243, 0.0
          %265 = vst.msk [vmem:[#allocation2 + $0xa0] sm:$0x3] %vm246, 0.0
          %266 = vst.msk [vmem:[#allocation2 + $0xa8] sm:$0xff] %vm243, 0.0
          %267 = vst.msk [vmem:[#allocation2 + $0xb0] sm:$0xff] %vm243, 0.0
          %268 = vst.msk [vmem:[#allocation2 + $0xb8] sm:$0x3] %vm246, 0.0
          %269 = vst.msk [vmem:[#allocation2 + $0xc0] sm:$0xff] %vm243, 0.0
          %270 = vst.msk [vmem:[#allocation2 + $0xc8] sm:$0xff] %vm243, 0.0
          %271 = vst.msk [vmem:[#allocation2 + $0xd0] sm:$0x3] %vm246, 0.0
          %272 = vst.msk [vmem:[#allocation2 + $0xd8] sm:$0xff] %vm243, 0.0
          %273 = vst.msk [vmem:[#allocation2 + $0xe0] sm:$0xff] %vm243, 0.0
          %274 = vst.msk [vmem:[#allocation2 + $0xe8] sm:$0x3] %vm246, 0.0
          %275 = vst.msk [vmem:[#allocation2 + $0xf0] sm:$0xff] %vm243, 0.0
          %276 = vst.msk [vmem:[#allocation2 + $0xf8] sm:$0xff] %vm243, 0.0
          %277 = vst.msk [vmem:[#allocation2 + $0x100] sm:$0x3] %vm246, 0.0
          %278 = vst.msk [vmem:[#allocation2 + $0x108] sm:$0xff] %vm243, 0.0
          %279 = vst.msk [vmem:[#allocation2 + $0x110] sm:$0xff] %vm243, 0.0
          %280 = vst.msk [vmem:[#allocation2 + $0x118] sm:$0x3] %vm246, 0.0
          %281 = vst.msk [vmem:[#allocation2 + $0x120] sm:$0xff] %vm243, 0.0
          %282 = vst.msk [vmem:[#allocation2 + $0x128] sm:$0xff] %vm243, 0.0
          %283 = vst.msk [vmem:[#allocation2 + $0x130] sm:$0x3] %vm246, 0.0
          %284 = vst.msk [vmem:[#allocation2 + $0x138] sm:$0xff] %vm243, 0.0
          %285 = vst.msk [vmem:[#allocation2 + $0x140] sm:$0xff] %vm243, 0.0
          %286 = vst.msk [vmem:[#allocation2 + $0x148] sm:$0x3] %vm246, 0.0
          %287 = vst.msk [vmem:[#allocation2 + $0x150] sm:$0xff] %vm243, 0.0
          %288 = vst.msk [vmem:[#allocation2 + $0x158] sm:$0xff] %vm243, 0.0
          %289 = vst.msk [vmem:[#allocation2 + $0x160] sm:$0x3] %vm246, 0.0
          %290 = vst.msk [vmem:[#allocation2 + $0x168] sm:$0xff] %vm243, 0.0
          %291 = vst.msk [vmem:[#allocation2 + $0x170] sm:$0xff] %vm243, 0.0
          %292 = vst.msk [vmem:[#allocation2 + $0x178] sm:$0x3] %vm246, 0.0
          %293 = vst.msk [vmem:[#allocation2 + $0x180] sm:$0xff] %vm243, 0.0
          %294 = vst.msk [vmem:[#allocation2 + $0x188] sm:$0xff] %vm243, 0.0
          %295 = vst.msk [vmem:[#allocation2 + $0x190] sm:$0x3] %vm246, 0.0
          %296 = vst.msk [vmem:[#allocation2 + $0x198] sm:$0xff] %vm243, 0.0
          %297 = vst.msk [vmem:[#allocation2 + $0x1a0] sm:$0xff] %vm243, 0.0
          %298 = vst.msk [vmem:[#allocation2 + $0x1a8] sm:$0x3] %vm246, 0.0
          %299 = vst.msk [vmem:[#allocation2 + $0x1b0] sm:$0xff] %vm243, 0.0
          %300 = vst.msk [vmem:[#allocation2 + $0x1b8] sm:$0xff] %vm243, 0.0
          %301 = vst.msk [vmem:[#allocation2 + $0x1c0] sm:$0x3] %vm246, 0.0
          %302 = vst.msk [vmem:[#allocation2 + $0x1c8] sm:$0xff] %vm243, 0.0
          %303 = vst.msk [vmem:[#allocation2 + $0x1d0] sm:$0xff] %vm243, 0.0
          %304 = vst.msk [vmem:[#allocation2 + $0x1d8] sm:$0x3] %vm246, 0.0
          %v305 = vld [vmem:[%s236] sm:$0xff]
          %v306 = vld [vmem:[%s236 + $0x8] sm:$0xff]
          %v307 = vld [vmem:[%s236 + $0x10] sm:$0xff]
          %v308 = vld [vmem:[%s236 + $0x18] sm:$0xff]
          %v309 = vld [vmem:[%s236 + $0x20] sm:$0xff]
          %v310 = vld [vmem:[%s236 + $0x28] sm:$0xff]
          %v311 = vld [vmem:[%s236 + $0x30] sm:$0xff]
          %v312 = vld [vmem:[%s236 + $0x38] sm:$0xff]
          %v313 = vld [vmem:[%s236 + $0x40] sm:$0xff]
          %v314 = vld [vmem:[%s236 + $0x48] sm:$0xff]
          %v315 = vld [vmem:[%s236 + $0x50] sm:$0xff]
          %v316 = vld [vmem:[%s236 + $0x58] sm:$0xff]
          %v317 = vld [vmem:[%s236 + $0x60] sm:$0xff]
          %v318 = vld [vmem:[%s236 + $0x68] sm:$0xff]
          %v319 = vld [vmem:[%s236 + $0x70] sm:$0xff]
          %v320 = vld [vmem:[%s236 + $0x78] sm:$0xff]
          %v321 = vld [vmem:[%s236 + $0x80] sm:$0xff]
          %v322 = vld [vmem:[%s236 + $0x88] sm:$0xff]
          %v323 = vld [vmem:[%s236 + $0x90] sm:$0xff]
          %v324 = vld [vmem:[%s236 + $0x98] sm:$0xff]
          %v325 = vld [vmem:[%s236 + $0xa0] sm:$0xff]
          %v326 = vld [vmem:[%s236 + $0xa8] sm:$0xff]
          %v327 = vld [vmem:[%s236 + $0xb0] sm:$0xff]
          %v328 = vld [vmem:[%s236 + $0xb8] sm:$0xff]
          %v329 = vld [vmem:[%s236 + $0xc0] sm:$0xff]
          %v330 = vld [vmem:[%s236 + $0xc8] sm:$0xff]
          %v331 = vld [vmem:[%s236 + $0xd0] sm:$0xff]
          %v332 = vld [vmem:[%s236 + $0xd8] sm:$0xff]
          %v333 = vld [vmem:[%s236 + $0xe0] sm:$0xff]
          %v334 = vld [vmem:[%s236 + $0xe8] sm:$0xff]
          %v335 = vld [vmem:[%s236 + $0xf0] sm:$0xff]
          %v336 = vld [vmem:[%s236 + $0xf8] sm:$0xff]
          %s337 = scalar_lea.vmem [#allocation2], 48
          %338 = vst.msk [vmem:[%s337 + $0x1] sm:$0xff] %vm243, %v305
          %339 = vst.msk [vmem:[%s337 + $0x9] sm:$0xff] %vm243, %v306
          %340 = vst.msk [vmem:[%s337 + $0x19] sm:$0xff] %vm243, %v307
          %341 = vst.msk [vmem:[%s337 + $0x21] sm:$0xff] %vm243, %v308
          %342 = vst.msk [vmem:[%s337 + $0x31] sm:$0xff] %vm243, %v309
          %343 = vst.msk [vmem:[%s337 + $0x39] sm:$0xff] %vm243, %v310
          %344 = vst.msk [vmem:[%s337 + $0x49] sm:$0xff] %vm243, %v311
          %345 = vst.msk [vmem:[%s337 + $0x51] sm:$0xff] %vm243, %v312
          %346 = vst.msk [vmem:[%s337 + $0x61] sm:$0xff] %vm243, %v313
          %347 = vst.msk [vmem:[%s337 + $0x69] sm:$0xff] %vm243, %v314
          %348 = vst.msk [vmem:[%s337 + $0x79] sm:$0xff] %vm243, %v315
          %349 = vst.msk [vmem:[%s337 + $0x81] sm:$0xff] %vm243, %v316
          %350 = vst.msk [vmem:[%s337 + $0x91] sm:$0xff] %vm243, %v317
          %351 = vst.msk [vmem:[%s337 + $0x99] sm:$0xff] %vm243, %v318
          %352 = vst.msk [vmem:[%s337 + $0xa9] sm:$0xff] %vm243, %v319
          %353 = vst.msk [vmem:[%s337 + $0xb1] sm:$0xff] %vm243, %v320
          %354 = vst.msk [vmem:[%s337 + $0xc1] sm:$0xff] %vm243, %v321
          %355 = vst.msk [vmem:[%s337 + $0xc9] sm:$0xff] %vm243, %v322
          %356 = vst.msk [vmem:[%s337 + $0xd9] sm:$0xff] %vm243, %v323
          %357 = vst.msk [vmem:[%s337 + $0xe1] sm:$0xff] %vm243, %v324
          %358 = vst.msk [vmem:[%s337 + $0xf1] sm:$0xff] %vm243, %v325
          %359 = vst.msk [vmem:[%s337 + $0xf9] sm:$0xff] %vm243, %v326
          %360 = vst.msk [vmem:[%s337 + $0x109] sm:$0xff] %vm243, %v327
          %361 = vst.msk [vmem:[%s337 + $0x111] sm:$0xff] %vm243, %v328
          %362 = vst.msk [vmem:[%s337 + $0x121] sm:$0xff] %vm243, %v329
          %363 = vst.msk [vmem:[%s337 + $0x129] sm:$0xff] %vm243, %v330
          %364 = vst.msk [vmem:[%s337 + $0x139] sm:$0xff] %vm243, %v331
          %365 = vst.msk [vmem:[%s337 + $0x141] sm:$0xff] %vm243, %v332
          %366 = vst.msk [vmem:[%s337 + $0x151] sm:$0xff] %vm243, %v333
          %367 = vst.msk [vmem:[%s337 + $0x159] sm:$0xff] %vm243, %v334
          %368 = vst.msk [vmem:[%s337 + $0x169] sm:$0xff] %vm243, %v335
          %369 = vst.msk [vmem:[%s337 + $0x171] sm:$0xff] %vm243, %v336
        $region44: #{tpu_custom_call.1} parent=39 // pred_fallthru
          _
        %v370 = vld [vmem:[%s4] sm:$0x1]
        %v371 = vld [vmem:[%s4 + $0x1] sm:$0x1]
        %v372 = vld [vmem:[%s4 + $0x2] sm:$0x1]
        %v373 = vld [vmem:[%s4 + $0x3] sm:$0x1]
        %s374 = sadd.s32 %s238, 2
        %s375 = sadd.s32 %s238, 1
        %s376 = smul.u32 %s238, 24
        %s377 = scalar_lea.vmem [#allocation2], %s376
        %v378 = vld [vmem:[%s377] sm:$0xff]
        %v379 = vld [vmem:[%s377 + $0x8] sm:$0xff]
        %v380 = vld [vmem:[%s377 + $0x18] sm:$0xff]
        %v381 = vld [vmem:[%s377 + $0x20] sm:$0xff]
        %v382 = vld [vmem:[%s377 + $0x30] sm:$0xff]
        %v383 = vld [vmem:[%s377 + $0x38] sm:$0xff]
        %v384 = vld [vmem:[%s377 + $0x48] sm:$0xff]
        %v385 = vld [vmem:[%s377 + $0x50] sm:$0xff]
        %v386 = vld [vmem:[%s377 + $0x60] sm:$0xff]
        %v387 = vld [vmem:[%s377 + $0x68] sm:$0xff]
        %v388 = vld [vmem:[%s377 + $0x78] sm:$0xff]
        %v389 = vld [vmem:[%s377 + $0x80] sm:$0xff]
        %v390 = vld [vmem:[%s377 + $0x90] sm:$0xff]
        %v391 = vld [vmem:[%s377 + $0x98] sm:$0xff]
        %v392 = vld [vmem:[%s377 + $0xa8] sm:$0xff]
        %v393 = vld [vmem:[%s377 + $0xb0] sm:$0xff]
        %v394 = vld [vmem:[%s377 + $0xc0] sm:$0xff]
        %v395 = vld [vmem:[%s377 + $0xc8] sm:$0xff]
        %v396 = vld [vmem:[%s377 + $0xd8] sm:$0xff]
        %v397 = vld [vmem:[%s377 + $0xe0] sm:$0xff]
        %vm398 = vcmask 31744
        %399 = vst.msk [vmem:[#allocation3] sm:$0xff] %vm398, %v378
        %400 = vst.msk [vmem:[#allocation3 + $0x8] sm:$0xff] %vm398, %v379
        %401 = vst.msk [vmem:[#allocation3 + $0x10] sm:$0xff] %vm398, %v380
        %402 = vst.msk [vmem:[#allocation3 + $0x18] sm:$0xff] %vm398, %v381
        %403 = vst.msk [vmem:[#allocation3 + $0x20] sm:$0xff] %vm398, %v382
        %404 = vst.msk [vmem:[#allocation3 + $0x28] sm:$0xff] %vm398, %v383
        %405 = vst.msk [vmem:[#allocation3 + $0x30] sm:$0xff] %vm398, %v384
        %406 = vst.msk [vmem:[#allocation3 + $0x38] sm:$0xff] %vm398, %v385
        %407 = vst.msk [vmem:[#allocation3 + $0x40] sm:$0xff] %vm398, %v386
        %408 = vst.msk [vmem:[#allocation3 + $0x48] sm:$0xff] %vm398, %v387
        %409 = vst.msk [vmem:[#allocation3 + $0x50] sm:$0xff] %vm398, %v388
        %410 = vst.msk [vmem:[#allocation3 + $0x58] sm:$0xff] %vm398, %v389
        %411 = vst.msk [vmem:[#allocation3 + $0x60] sm:$0xff] %vm398, %v390
        %412 = vst.msk [vmem:[#allocation3 + $0x68] sm:$0xff] %vm398, %v391
        %413 = vst.msk [vmem:[#allocation3 + $0x70] sm:$0xff] %vm398, %v392
        %414 = vst.msk [vmem:[#allocation3 + $0x78] sm:$0xff] %vm398, %v393
        %415 = vst.msk [vmem:[#allocation3 + $0x80] sm:$0xff] %vm398, %v394
        %416 = vst.msk [vmem:[#allocation3 + $0x88] sm:$0xff] %vm398, %v395
        %417 = vst.msk [vmem:[#allocation3 + $0x90] sm:$0xff] %vm398, %v396
        %418 = vst.msk [vmem:[#allocation3 + $0x98] sm:$0xff] %vm398, %v397
        %v419 = vld [vmem:[%s377 + $0x1] sm:$0xff]
        %v420 = vld [vmem:[%s377 + $0x9] sm:$0xff]
        %v421 = vld [vmem:[%s377 + $0x19] sm:$0xff]
        %v422 = vld [vmem:[%s377 + $0x21] sm:$0xff]
        %v423 = vld [vmem:[%s377 + $0x31] sm:$0xff]
        %v424 = vld [vmem:[%s377 + $0x39] sm:$0xff]
        %v425 = vld [vmem:[%s377 + $0x49] sm:$0xff]
        %v426 = vld [vmem:[%s377 + $0x51] sm:$0xff]
        %v427 = vld [vmem:[%s377 + $0x61] sm:$0xff]
        %v428 = vld [vmem:[%s377 + $0x69] sm:$0xff]
        %v429 = vld [vmem:[%s377 + $0x79] sm:$0xff]
        %v430 = vld [vmem:[%s377 + $0x81] sm:$0xff]
        %v431 = vld [vmem:[%s377 + $0x91] sm:$0xff]
        %v432 = vld [vmem:[%s377 + $0x99] sm:$0xff]
        %v433 = vld [vmem:[%s377 + $0xa9] sm:$0xff]
        %v434 = vld [vmem:[%s377 + $0xb1] sm:$0xff]
        %v435 = vld [vmem:[%s377 + $0xc1] sm:$0xff]
        %v436 = vld [vmem:[%s377 + $0xc9] sm:$0xff]
        %v437 = vld [vmem:[%s377 + $0xd9] sm:$0xff]
        %v438 = vld [vmem:[%s377 + $0xe1] sm:$0xff]
        %459 = vrot.lane.b32.xlu0 %v419, 4
        %v460 = vpop.permute.xlu0 %459
        %461 = vrot.lane.b32.xlu0 %v420, 4
        %v462 = vpop.permute.xlu0 %461
        %463 = vrot.lane.b32.xlu0 %v421, 4
        %v464 = vpop.permute.xlu0 %463
        %465 = vrot.lane.b32.xlu0 %v422, 4
        %v466 = vpop.permute.xlu0 %465
        %467 = vrot.lane.b32.xlu0 %v423, 4
        %v468 = vpop.permute.xlu0 %467
        %469 = vrot.lane.b32.xlu0 %v424, 4
        %v470 = vpop.permute.xlu0 %469
        %471 = vrot.lane.b32.xlu0 %v425, 4
        %v472 = vpop.permute.xlu0 %471
        %473 = vrot.lane.b32.xlu0 %v426, 4
        %v474 = vpop.permute.xlu0 %473
        %475 = vrot.lane.b32.xlu0 %v427, 4
        %v476 = vpop.permute.xlu0 %475
        %477 = vrot.lane.b32.xlu0 %v428, 4
        %v478 = vpop.permute.xlu0 %477
        %479 = vrot.lane.b32.xlu0 %v429, 4
        %v480 = vpop.permute.xlu0 %479
        %481 = vrot.lane.b32.xlu0 %v430, 4
        %v482 = vpop.permute.xlu0 %481
        %483 = vrot.lane.b32.xlu0 %v431, 4
        %v484 = vpop.permute.xlu0 %483
        %485 = vrot.lane.b32.xlu0 %v432, 4
        %v486 = vpop.permute.xlu0 %485
        %487 = vrot.lane.b32.xlu0 %v433, 4
        %v488 = vpop.permute.xlu0 %487
        %489 = vrot.lane.b32.xlu0 %v434, 4
        %v490 = vpop.permute.xlu0 %489
        %491 = vrot.lane.b32.xlu0 %v435, 4
        %v492 = vpop.permute.xlu0 %491
        %493 = vrot.lane.b32.xlu0 %v436, 4
        %v494 = vpop.permute.xlu0 %493
        %495 = vrot.lane.b32.xlu0 %v437, 4
        %v496 = vpop.permute.xlu0 %495
        %497 = vrot.lane.b32.xlu0 %v438, 4
        %v498 = vpop.permute.xlu0 %497
        %vm519 = vcmask 64544
        %520 = vst.msk [vmem:[#allocation3] sm:$0xff] %vm519, %v460
        %521 = vst.msk [vmem:[#allocation3 + $0x8] sm:$0xff] %vm519, %v462
        %522 = vst.msk [vmem:[#allocation3 + $0x10] sm:$0xff] %vm519, %v464
        %523 = vst.msk [vmem:[#allocation3 + $0x18] sm:$0xff] %vm519, %v466
        %524 = vst.msk [vmem:[#allocation3 + $0x20] sm:$0xff] %vm519, %v468
        %525 = vst.msk [vmem:[#allocation3 + $0x28] sm:$0xff] %vm519, %v470
        %526 = vst.msk [vmem:[#allocation3 + $0x30] sm:$0xff] %vm519, %v472
        %527 = vst.msk [vmem:[#allocation3 + $0x38] sm:$0xff] %vm519, %v474
        %528 = vst.msk [vmem:[#allocation3 + $0x40] sm:$0xff] %vm519, %v476
        %529 = vst.msk [vmem:[#allocation3 + $0x48] sm:$0xff] %vm519, %v478
        %530 = vst.msk [vmem:[#allocation3 + $0x50] sm:$0xff] %vm519, %v480
        %531 = vst.msk [vmem:[#allocation3 + $0x58] sm:$0xff] %vm519, %v482
        %532 = vst.msk [vmem:[#allocation3 + $0x60] sm:$0xff] %vm519, %v484
        %533 = vst.msk [vmem:[#allocation3 + $0x68] sm:$0xff] %vm519, %v486
        %534 = vst.msk [vmem:[#allocation3 + $0x70] sm:$0xff] %vm519, %v488
        %535 = vst.msk [vmem:[#allocation3 + $0x78] sm:$0xff] %vm519, %v490
        %536 = vst.msk [vmem:[#allocation3 + $0x80] sm:$0xff] %vm519, %v492
        %537 = vst.msk [vmem:[#allocation3 + $0x88] sm:$0xff] %vm519, %v494
        %538 = vst.msk [vmem:[#allocation3 + $0x90] sm:$0xff] %vm519, %v496
        %539 = vst.msk [vmem:[#allocation3 + $0x98] sm:$0xff] %vm519, %v498
        %v540 = vld [vmem:[%s377 + $0x2] sm:$0xff]
        %v541 = vld [vmem:[%s377 + $0xa] sm:$0xff]
        %v542 = vld [vmem:[%s377 + $0x1a] sm:$0xff]
        %v543 = vld [vmem:[%s377 + $0x22] sm:$0xff]
        %v544 = vld [vmem:[%s377 + $0x32] sm:$0xff]
        %v545 = vld [vmem:[%s377 + $0x3a] sm:$0xff]
        %v546 = vld [vmem:[%s377 + $0x4a] sm:$0xff]
        %v547 = vld [vmem:[%s377 + $0x52] sm:$0xff]
        %v548 = vld [vmem:[%s377 + $0x62] sm:$0xff]
        %v549 = vld [vmem:[%s377 + $0x6a] sm:$0xff]
        %v550 = vld [vmem:[%s377 + $0x7a] sm:$0xff]
        %v551 = vld [vmem:[%s377 + $0x82] sm:$0xff]
        %v552 = vld [vmem:[%s377 + $0x92] sm:$0xff]
        %v553 = vld [vmem:[%s377 + $0x9a] sm:$0xff]
        %v554 = vld [vmem:[%s377 + $0xaa] sm:$0xff]
        %v555 = vld [vmem:[%s377 + $0xb2] sm:$0xff]
        %v556 = vld [vmem:[%s377 + $0xc2] sm:$0xff]
        %v557 = vld [vmem:[%s377 + $0xca] sm:$0xff]
        %v558 = vld [vmem:[%s377 + $0xda] sm:$0xff]
        %v559 = vld [vmem:[%s377 + $0xe2] sm:$0xff]
        %580 = vrot.lane.b32.xlu0 %v540, 8
        %v581 = vpop.permute.xlu0 %580
        %582 = vrot.lane.b32.xlu0 %v541, 8
        %v583 = vpop.permute.xlu0 %582
        %584 = vrot.lane.b32.xlu0 %v542, 8
        %v585 = vpop.permute.xlu0 %584
        %586 = vrot.lane.b32.xlu0 %v543, 8
        %v587 = vpop.permute.xlu0 %586
        %588 = vrot.lane.b32.xlu0 %v544, 8
        %v589 = vpop.permute.xlu0 %588
        %590 = vrot.lane.b32.xlu0 %v545, 8
        %v591 = vpop.permute.xlu0 %590
        %592 = vrot.lane.b32.xlu0 %v546, 8
        %v593 = vpop.permute.xlu0 %592
        %594 = vrot.lane.b32.xlu0 %v547, 8
        %v595 = vpop.permute.xlu0 %594
        %596 = vrot.lane.b32.xlu0 %v548, 8
        %v597 = vpop.permute.xlu0 %596
        %598 = vrot.lane.b32.xlu0 %v549, 8
        %v599 = vpop.permute.xlu0 %598
        %600 = vrot.lane.b32.xlu0 %v550, 8
        %v601 = vpop.permute.xlu0 %600
        %602 = vrot.lane.b32.xlu0 %v551, 8
        %v603 = vpop.permute.xlu0 %602
        %604 = vrot.lane.b32.xlu0 %v552, 8
        %v605 = vpop.permute.xlu0 %604
        %606 = vrot.lane.b32.xlu0 %v553, 8
        %v607 = vpop.permute.xlu0 %606
        %608 = vrot.lane.b32.xlu0 %v554, 8
        %v609 = vpop.permute.xlu0 %608
        %610 = vrot.lane.b32.xlu0 %v555, 8
        %v611 = vpop.permute.xlu0 %610
        %612 = vrot.lane.b32.xlu0 %v556, 8
        %v613 = vpop.permute.xlu0 %612
        %614 = vrot.lane.b32.xlu0 %v557, 8
        %v615 = vpop.permute.xlu0 %614
        %616 = vrot.lane.b32.xlu0 %v558, 8
        %v617 = vpop.permute.xlu0 %616
        %618 = vrot.lane.b32.xlu0 %v559, 8
        %v619 = vpop.permute.xlu0 %618
        %vm640 = vcmask 97344
        %641 = vst.msk [vmem:[#allocation3] sm:$0xff] %vm640, %v581
        %642 = vst.msk [vmem:[#allocation3 + $0x8] sm:$0xff] %vm640, %v583
        %643 = vst.msk [vmem:[#allocation3 + $0x10] sm:$0xff] %vm640, %v585
        %644 = vst.msk [vmem:[#allocation3 + $0x18] sm:$0xff] %vm640, %v587
        %645 = vst.msk [vmem:[#allocation3 + $0x20] sm:$0xff] %vm640, %v589
        %646 = vst.msk [vmem:[#allocation3 + $0x28] sm:$0xff] %vm640, %v591
        %647 = vst.msk [vmem:[#allocation3 + $0x30] sm:$0xff] %vm640, %v593
        %648 = vst.msk [vmem:[#allocation3 + $0x38] sm:$0xff] %vm640, %v595
        %649 = vst.msk [vmem:[#allocation3 + $0x40] sm:$0xff] %vm640, %v597
        %650 = vst.msk [vmem:[#allocation3 + $0x48] sm:$0xff] %vm640, %v599
        %651 = vst.msk [vmem:[#allocation3 + $0x50] sm:$0xff] %vm640, %v601
        %652 = vst.msk [vmem:[#allocation3 + $0x58] sm:$0xff] %vm640, %v603
        %653 = vst.msk [vmem:[#allocation3 + $0x60] sm:$0xff] %vm640, %v605
        %654 = vst.msk [vmem:[#allocation3 + $0x68] sm:$0xff] %vm640, %v607
        %655 = vst.msk [vmem:[#allocation3 + $0x70] sm:$0xff] %vm640, %v609
        %656 = vst.msk [vmem:[#allocation3 + $0x78] sm:$0xff] %vm640, %v611
        %657 = vst.msk [vmem:[#allocation3 + $0x80] sm:$0xff] %vm640, %v613
        %658 = vst.msk [vmem:[#allocation3 + $0x88] sm:$0xff] %vm640, %v615
        %659 = vst.msk [vmem:[#allocation3 + $0x90] sm:$0xff] %vm640, %v617
        %660 = vst.msk [vmem:[#allocation3 + $0x98] sm:$0xff] %vm640, %v619
        %s661 = smul.u32 %s375, 24
        %s662 = scalar_lea.vmem [#allocation2], %s661
        %v663 = vld [vmem:[%s662] sm:$0xff]
        %v664 = vld [vmem:[%s662 + $0x8] sm:$0xff]
        %v665 = vld [vmem:[%s662 + $0x18] sm:$0xff]
        %v666 = vld [vmem:[%s662 + $0x20] sm:$0xff]
        %v667 = vld [vmem:[%s662 + $0x30] sm:$0xff]
        %v668 = vld [vmem:[%s662 + $0x38] sm:$0xff]
        %v669 = vld [vmem:[%s662 + $0x48] sm:$0xff]
        %v670 = vld [vmem:[%s662 + $0x50] sm:$0xff]
        %v671 = vld [vmem:[%s662 + $0x60] sm:$0xff]
        %v672 = vld [vmem:[%s662 + $0x68] sm:$0xff]
        %v673 = vld [vmem:[%s662 + $0x78] sm:$0xff]
        %v674 = vld [vmem:[%s662 + $0x80] sm:$0xff]
        %v675 = vld [vmem:[%s662 + $0x90] sm:$0xff]
        %v676 = vld [vmem:[%s662 + $0x98] sm:$0xff]
        %v677 = vld [vmem:[%s662 + $0xa8] sm:$0xff]
        %v678 = vld [vmem:[%s662 + $0xb0] sm:$0xff]
        %v679 = vld [vmem:[%s662 + $0xc0] sm:$0xff]
        %v680 = vld [vmem:[%s662 + $0xc8] sm:$0xff]
        %v681 = vld [vmem:[%s662 + $0xd8] sm:$0xff]
        %v682 = vld [vmem:[%s662 + $0xe0] sm:$0xff]
        %703 = vrot.lane.b32.xlu0 %v663, 12
        %v704 = vpop.permute.xlu0 %703
        %705 = vrot.lane.b32.xlu0 %v664, 12
        %v706 = vpop.permute.xlu0 %705
        %707 = vrot.lane.b32.xlu0 %v665, 12
        %v708 = vpop.permute.xlu0 %707
        %709 = vrot.lane.b32.xlu0 %v666, 12
        %v710 = vpop.permute.xlu0 %709
        %711 = vrot.lane.b32.xlu0 %v667, 12
        %v712 = vpop.permute.xlu0 %711
        %713 = vrot.lane.b32.xlu0 %v668, 12
        %v714 = vpop.permute.xlu0 %713
        %715 = vrot.lane.b32.xlu0 %v669, 12
        %v716 = vpop.permute.xlu0 %715
        %717 = vrot.lane.b32.xlu0 %v670, 12
        %v718 = vpop.permute.xlu0 %717
        %719 = vrot.lane.b32.xlu0 %v671, 12
        %v720 = vpop.permute.xlu0 %719
        %721 = vrot.lane.b32.xlu0 %v672, 12
        %v722 = vpop.permute.xlu0 %721
        %723 = vrot.lane.b32.xlu0 %v673, 12
        %v724 = vpop.permute.xlu0 %723
        %725 = vrot.lane.b32.xlu0 %v674, 12
        %v726 = vpop.permute.xlu0 %725
        %727 = vrot.lane.b32.xlu0 %v675, 12
        %v728 = vpop.permute.xlu0 %727
        %729 = vrot.lane.b32.xlu0 %v676, 12
        %v730 = vpop.permute.xlu0 %729
        %731 = vrot.lane.b32.xlu0 %v677, 12
        %v732 = vpop.permute.xlu0 %731
        %733 = vrot.lane.b32.xlu0 %v678, 12
        %v734 = vpop.permute.xlu0 %733
        %735 = vrot.lane.b32.xlu0 %v679, 12
        %v736 = vpop.permute.xlu0 %735
        %737 = vrot.lane.b32.xlu0 %v680, 12
        %v738 = vpop.permute.xlu0 %737
        %739 = vrot.lane.b32.xlu0 %v681, 12
        %v740 = vpop.permute.xlu0 %739
        %741 = vrot.lane.b32.xlu0 %v682, 12
        %v742 = vpop.permute.xlu0 %741
        %vm763 = vcmask 130144
        %764 = vst.msk [vmem:[#allocation3] sm:$0xff] %vm763, %v704
        %765 = vst.msk [vmem:[#allocation3 + $0x8] sm:$0xff] %vm763, %v706
        %766 = vst.msk [vmem:[#allocation3 + $0x10] sm:$0xff] %vm763, %v708
        %767 = vst.msk [vmem:[#allocation3 + $0x18] sm:$0xff] %vm763, %v710
        %768 = vst.msk [vmem:[#allocation3 + $0x20] sm:$0xff] %vm763, %v712
        %769 = vst.msk [vmem:[#allocation3 + $0x28] sm:$0xff] %vm763, %v714
        %770 = vst.msk [vmem:[#allocation3 + $0x30] sm:$0xff] %vm763, %v716
        %771 = vst.msk [vmem:[#allocation3 + $0x38] sm:$0xff] %vm763, %v718
        %772 = vst.msk [vmem:[#allocation3 + $0x40] sm:$0xff] %vm763, %v720
        %773 = vst.msk [vmem:[#allocation3 + $0x48] sm:$0xff] %vm763, %v722
        %774 = vst.msk [vmem:[#allocation3 + $0x50] sm:$0xff] %vm763, %v724
        %775 = vst.msk [vmem:[#allocation3 + $0x58] sm:$0xff] %vm763, %v726
        %776 = vst.msk [vmem:[#allocation3 + $0x60] sm:$0xff] %vm763, %v728
        %777 = vst.msk [vmem:[#allocation3 + $0x68] sm:$0xff] %vm763, %v730
        %778 = vst.msk [vmem:[#allocation3 + $0x70] sm:$0xff] %vm763, %v732
        %779 = vst.msk [vmem:[#allocation3 + $0x78] sm:$0xff] %vm763, %v734
        %780 = vst.msk [vmem:[#allocation3 + $0x80] sm:$0xff] %vm763, %v736
        %781 = vst.msk [vmem:[#allocation3 + $0x88] sm:$0xff] %vm763, %v738
        %782 = vst.msk [vmem:[#allocation3 + $0x90] sm:$0xff] %vm763, %v740
        %783 = vst.msk [vmem:[#allocation3 + $0x98] sm:$0xff] %vm763, %v742
        %v784 = vld [vmem:[%s662 + $0x1] sm:$0xff]
        %v785 = vld [vmem:[%s662 + $0x9] sm:$0xff]
        %v786 = vld [vmem:[%s662 + $0x19] sm:$0xff]
        %v787 = vld [vmem:[%s662 + $0x21] sm:$0xff]
        %v788 = vld [vmem:[%s662 + $0x31] sm:$0xff]
        %v789 = vld [vmem:[%s662 + $0x39] sm:$0xff]
        %v790 = vld [vmem:[%s662 + $0x49] sm:$0xff]
        %v791 = vld [vmem:[%s662 + $0x51] sm:$0xff]
        %v792 = vld [vmem:[%s662 + $0x61] sm:$0xff]
        %v793 = vld [vmem:[%s662 + $0x69] sm:$0xff]
        %v794 = vld [vmem:[%s662 + $0x79] sm:$0xff]
        %v795 = vld [vmem:[%s662 + $0x81] sm:$0xff]
        %v796 = vld [vmem:[%s662 + $0x91] sm:$0xff]
        %v797 = vld [vmem:[%s662 + $0x99] sm:$0xff]
        %v798 = vld [vmem:[%s662 + $0xa9] sm:$0xff]
        %v799 = vld [vmem:[%s662 + $0xb1] sm:$0xff]
        %v800 = vld [vmem:[%s662 + $0xc1] sm:$0xff]
        %v801 = vld [vmem:[%s662 + $0xc9] sm:$0xff]
        %v802 = vld [vmem:[%s662 + $0xd9] sm:$0xff]
        %v803 = vld [vmem:[%s662 + $0xe1] sm:$0xff]
        %824 = vrot.lane.b32.xlu0 %v784, 16
        %v825 = vpop.permute.xlu0 %824
        %826 = vrot.lane.b32.xlu0 %v785, 16
        %v827 = vpop.permute.xlu0 %826
        %828 = vrot.lane.b32.xlu0 %v786, 16
        %v829 = vpop.permute.xlu0 %828
        %830 = vrot.lane.b32.xlu0 %v787, 16
        %v831 = vpop.permute.xlu0 %830
        %832 = vrot.lane.b32.xlu0 %v788, 16
        %v833 = vpop.permute.xlu0 %832
        %834 = vrot.lane.b32.xlu0 %v789, 16
        %v835 = vpop.permute.xlu0 %834
        %836 = vrot.lane.b32.xlu0 %v790, 16
        %v837 = vpop.permute.xlu0 %836
        %838 = vrot.lane.b32.xlu0 %v791, 16
        %v839 = vpop.permute.xlu0 %838
        %840 = vrot.lane.b32.xlu0 %v792, 16
        %v841 = vpop.permute.xlu0 %840
        %842 = vrot.lane.b32.xlu0 %v793, 16
        %v843 = vpop.permute.xlu0 %842
        %844 = vrot.lane.b32.xlu0 %v794, 16
        %v845 = vpop.permute.xlu0 %844
        %846 = vrot.lane.b32.xlu0 %v795, 16
        %v847 = vpop.permute.xlu0 %846
        %848 = vrot.lane.b32.xlu0 %v796, 16
        %v849 = vpop.permute.xlu0 %848
        %850 = vrot.lane.b32.xlu0 %v797, 16
        %v851 = vpop.permute.xlu0 %850
        %852 = vrot.lane.b32.xlu0 %v798, 16
        %v853 = vpop.permute.xlu0 %852
        %854 = vrot.lane.b32.xlu0 %v799, 16
        %v855 = vpop.permute.xlu0 %854
        %856 = vrot.lane.b32.xlu0 %v800, 16
        %v857 = vpop.permute.xlu0 %856
        %858 = vrot.lane.b32.xlu0 %v801, 16
        %v859 = vpop.permute.xlu0 %858
        %860 = vrot.lane.b32.xlu0 %v802, 16
        %v861 = vpop.permute.xlu0 %860
        %862 = vrot.lane.b32.xlu0 %v803, 16
        %v863 = vpop.permute.xlu0 %862
        %vm884 = vcmask 162944
        %885 = vst.msk [vmem:[#allocation3] sm:$0xff] %vm884, %v825
        %886 = vst.msk [vmem:[#allocation3 + $0x8] sm:$0xff] %vm884, %v827
        %887 = vst.msk [vmem:[#allocation3 + $0x10] sm:$0xff] %vm884, %v829
        %888 = vst.msk [vmem:[#allocation3 + $0x18] sm:$0xff] %vm884, %v831
        %889 = vst.msk [vmem:[#allocation3 + $0x20] sm:$0xff] %vm884, %v833
        %890 = vst.msk [vmem:[#allocation3 + $0x28] sm:$0xff] %vm884, %v835
        %891 = vst.msk [vmem:[#allocation3 + $0x30] sm:$0xff] %vm884, %v837
        %892 = vst.msk [vmem:[#allocation3 + $0x38] sm:$0xff] %vm884, %v839
        %893 = vst.msk [vmem:[#allocation3 + $0x40] sm:$0xff] %vm884, %v841
        %894 = vst.msk [vmem:[#allocation3 + $0x48] sm:$0xff] %vm884, %v843
        %895 = vst.msk [vmem:[#allocation3 + $0x50] sm:$0xff] %vm884, %v845
        %896 = vst.msk [vmem:[#allocation3 + $0x58] sm:$0xff] %vm884, %v847
        %897 = vst.msk [vmem:[#allocation3 + $0x60] sm:$0xff] %vm884, %v849
        %898 = vst.msk [vmem:[#allocation3 + $0x68] sm:$0xff] %vm884, %v851
        %899 = vst.msk [vmem:[#allocation3 + $0x70] sm:$0xff] %vm884, %v853
        %900 = vst.msk [vmem:[#allocation3 + $0x78] sm:$0xff] %vm884, %v855
        %901 = vst.msk [vmem:[#allocation3 + $0x80] sm:$0xff] %vm884, %v857
        %902 = vst.msk [vmem:[#allocation3 + $0x88] sm:$0xff] %vm884, %v859
        %903 = vst.msk [vmem:[#allocation3 + $0x90] sm:$0xff] %vm884, %v861
        %904 = vst.msk [vmem:[#allocation3 + $0x98] sm:$0xff] %vm884, %v863
        %v905 = vld [vmem:[%s662 + $0x2] sm:$0xff]
        %v906 = vld [vmem:[%s662 + $0xa] sm:$0xff]
        %v907 = vld [vmem:[%s662 + $0x1a] sm:$0xff]
        %v908 = vld [vmem:[%s662 + $0x22] sm:$0xff]
        %v909 = vld [vmem:[%s662 + $0x32] sm:$0xff]
        %v910 = vld [vmem:[%s662 + $0x3a] sm:$0xff]
        %v911 = vld [vmem:[%s662 + $0x4a] sm:$0xff]
        %v912 = vld [vmem:[%s662 + $0x52] sm:$0xff]
        %v913 = vld [vmem:[%s662 + $0x62] sm:$0xff]
        %v914 = vld [vmem:[%s662 + $0x6a] sm:$0xff]
        %v915 = vld [vmem:[%s662 + $0x7a] sm:$0xff]
        %v916 = vld [vmem:[%s662 + $0x82] sm:$0xff]
        %v917 = vld [vmem:[%s662 + $0x92] sm:$0xff]
        %v918 = vld [vmem:[%s662 + $0x9a] sm:$0xff]
        %v919 = vld [vmem:[%s662 + $0xaa] sm:$0xff]
        %v920 = vld [vmem:[%s662 + $0xb2] sm:$0xff]
        %v921 = vld [vmem:[%s662 + $0xc2] sm:$0xff]
        %v922 = vld [vmem:[%s662 + $0xca] sm:$0xff]
        %v923 = vld [vmem:[%s662 + $0xda] sm:$0xff]
        %v924 = vld [vmem:[%s662 + $0xe2] sm:$0xff]
        %945 = vrot.lane.b32.xlu0 %v905, 20
        %v946 = vpop.permute.xlu0 %945
        %947 = vrot.lane.b32.xlu0 %v906, 20
        %v948 = vpop.permute.xlu0 %947
        %949 = vrot.lane.b32.xlu0 %v907, 20
        %v950 = vpop.permute.xlu0 %949
        %951 = vrot.lane.b32.xlu0 %v908, 20
        %v952 = vpop.permute.xlu0 %951
        %953 = vrot.lane.b32.xlu0 %v909, 20
        %v954 = vpop.permute.xlu0 %953
        %955 = vrot.lane.b32.xlu0 %v910, 20
        %v956 = vpop.permute.xlu0 %955
        %957 = vrot.lane.b32.xlu0 %v911, 20
        %v958 = vpop.permute.xlu0 %957
        %959 = vrot.lane.b32.xlu0 %v912, 20
        %v960 = vpop.permute.xlu0 %959
        %961 = vrot.lane.b32.xlu0 %v913, 20
        %v962 = vpop.permute.xlu0 %961
        %963 = vrot.lane.b32.xlu0 %v914, 20
        %v964 = vpop.permute.xlu0 %963
        %965 = vrot.lane.b32.xlu0 %v915, 20
        %v966 = vpop.permute.xlu0 %965
        %967 = vrot.lane.b32.xlu0 %v916, 20
        %v968 = vpop.permute.xlu0 %967
        %969 = vrot.lane.b32.xlu0 %v917, 20
        %v970 = vpop.permute.xlu0 %969
        %971 = vrot.lane.b32.xlu0 %v918, 20
        %v972 = vpop.permute.xlu0 %971
        %973 = vrot.lane.b32.xlu0 %v919, 20
        %v974 = vpop.permute.xlu0 %973
        %975 = vrot.lane.b32.xlu0 %v920, 20
        %v976 = vpop.permute.xlu0 %975
        %977 = vrot.lane.b32.xlu0 %v921, 20
        %v978 = vpop.permute.xlu0 %977
        %979 = vrot.lane.b32.xlu0 %v922, 20
        %v980 = vpop.permute.xlu0 %979
        %981 = vrot.lane.b32.xlu0 %v923, 20
        %v982 = vpop.permute.xlu0 %981
        %983 = vrot.lane.b32.xlu0 %v924, 20
        %v984 = vpop.permute.xlu0 %983
        %vm1005 = vcmask 195744
        %1006 = vst.msk [vmem:[#allocation3] sm:$0xff] %vm1005, %v946
        %1007 = vst.msk [vmem:[#allocation3 + $0x8] sm:$0xff] %vm1005, %v948
        %1008 = vst.msk [vmem:[#allocation3 + $0x10] sm:$0xff] %vm1005, %v950
        %1009 = vst.msk [vmem:[#allocation3 + $0x18] sm:$0xff] %vm1005, %v952
        %1010 = vst.msk [vmem:[#allocation3 + $0x20] sm:$0xff] %vm1005, %v954
        %1011 = vst.msk [vmem:[#allocation3 + $0x28] sm:$0xff] %vm1005, %v956
        %1012 = vst.msk [vmem:[#allocation3 + $0x30] sm:$0xff] %vm1005, %v958
        %1013 = vst.msk [vmem:[#allocation3 + $0x38] sm:$0xff] %vm1005, %v960
        %1014 = vst.msk [vmem:[#allocation3 + $0x40] sm:$0xff] %vm1005, %v962
        %1015 = vst.msk [vmem:[#allocation3 + $0x48] sm:$0xff] %vm1005, %v964
        %1016 = vst.msk [vmem:[#allocation3 + $0x50] sm:$0xff] %vm1005, %v966
        %1017 = vst.msk [vmem:[#allocation3 + $0x58] sm:$0xff] %vm1005, %v968
        %1018 = vst.msk [vmem:[#allocation3 + $0x60] sm:$0xff] %vm1005, %v970
        %1019 = vst.msk [vmem:[#allocation3 + $0x68] sm:$0xff] %vm1005, %v972
        %1020 = vst.msk [vmem:[#allocation3 + $0x70] sm:$0xff] %vm1005, %v974
        %1021 = vst.msk [vmem:[#allocation3 + $0x78] sm:$0xff] %vm1005, %v976
        %1022 = vst.msk [vmem:[#allocation3 + $0x80] sm:$0xff] %vm1005, %v978
        %1023 = vst.msk [vmem:[#allocation3 + $0x88] sm:$0xff] %vm1005, %v980
        %1024 = vst.msk [vmem:[#allocation3 + $0x90] sm:$0xff] %vm1005, %v982
        %1025 = vst.msk [vmem:[#allocation3 + $0x98] sm:$0xff] %vm1005, %v984
        %s1026 = smul.u32 %s374, 24
        %s1027 = scalar_lea.vmem [#allocation2], %s1026
        %v1028 = vld [vmem:[%s1027] sm:$0xff]
        %v1029 = vld [vmem:[%s1027 + $0x8] sm:$0xff]
        %v1030 = vld [vmem:[%s1027 + $0x18] sm:$0xff]
        %v1031 = vld [vmem:[%s1027 + $0x20] sm:$0xff]
        %v1032 = vld [vmem:[%s1027 + $0x30] sm:$0xff]
        %v1033 = vld [vmem:[%s1027 + $0x38] sm:$0xff]
        %v1034 = vld [vmem:[%s1027 + $0x48] sm:$0xff]
        %v1035 = vld [vmem:[%s1027 + $0x50] sm:$0xff]
        %v1036 = vld [vmem:[%s1027 + $0x60] sm:$0xff]
        %v1037 = vld [vmem:[%s1027 + $0x68] sm:$0xff]
        %v1038 = vld [vmem:[%s1027 + $0x78] sm:$0xff]
        %v1039 = vld [vmem:[%s1027 + $0x80] sm:$0xff]
        %v1040 = vld [vmem:[%s1027 + $0x90] sm:$0xff]
        %v1041 = vld [vmem:[%s1027 + $0x98] sm:$0xff]
        %v1042 = vld [vmem:[%s1027 + $0xa8] sm:$0xff]
        %v1043 = vld [vmem:[%s1027 + $0xb0] sm:$0xff]
        %v1044 = vld [vmem:[%s1027 + $0xc0] sm:$0xff]
        %v1045 = vld [vmem:[%s1027 + $0xc8] sm:$0xff]
        %v1046 = vld [vmem:[%s1027 + $0xd8] sm:$0xff]
        %v1047 = vld [vmem:[%s1027 + $0xe0] sm:$0xff]
        %1068 = vrot.lane.b32.xlu0 %v1028, 24
        %v1069 = vpop.permute.xlu0 %1068
        %1070 = vrot.lane.b32.xlu0 %v1029, 24
        %v1071 = vpop.permute.xlu0 %1070
        %1072 = vrot.lane.b32.xlu0 %v1030, 24
        %v1073 = vpop.permute.xlu0 %1072
        %1074 = vrot.lane.b32.xlu0 %v1031, 24
        %v1075 = vpop.permute.xlu0 %1074
        %1076 = vrot.lane.b32.xlu0 %v1032, 24
        %v1077 = vpop.permute.xlu0 %1076
        %1078 = vrot.lane.b32.xlu0 %v1033, 24
        %v1079 = vpop.permute.xlu0 %1078
        %1080 = vrot.lane.b32.xlu0 %v1034, 24
        %v1081 = vpop.permute.xlu0 %1080
        %1082 = vrot.lane.b32.xlu0 %v1035, 24
        %v1083 = vpop.permute.xlu0 %1082
        %1084 = vrot.lane.b32.xlu0 %v1036, 24
        %v1085 = vpop.permute.xlu0 %1084
        %1086 = vrot.lane.b32.xlu0 %v1037, 24
        %v1087 = vpop.permute.xlu0 %1086
        %1088 = vrot.lane.b32.xlu0 %v1038, 24
        %v1089 = vpop.permute.xlu0 %1088
        %1090 = vrot.lane.b32.xlu0 %v1039, 24
        %v1091 = vpop.permute.xlu0 %1090
        %1092 = vrot.lane.b32.xlu0 %v1040, 24
        %v1093 = vpop.permute.xlu0 %1092
        %1094 = vrot.lane.b32.xlu0 %v1041, 24
        %v1095 = vpop.permute.xlu0 %1094
        %1096 = vrot.lane.b32.xlu0 %v1042, 24
        %v1097 = vpop.permute.xlu0 %1096
        %1098 = vrot.lane.b32.xlu0 %v1043, 24
        %v1099 = vpop.permute.xlu0 %1098
        %1100 = vrot.lane.b32.xlu0 %v1044, 24
        %v1101 = vpop.permute.xlu0 %1100
        %1102 = vrot.lane.b32.xlu0 %v1045, 24
        %v1103 = vpop.permute.xlu0 %1102
        %1104 = vrot.lane.b32.xlu0 %v1046, 24
        %v1105 = vpop.permute.xlu0 %1104
        %1106 = vrot.lane.b32.xlu0 %v1047, 24
        %v1107 = vpop.permute.xlu0 %1106
        %vm1128 = vcmask 228544
        %1129 = vst.msk [vmem:[#allocation3] sm:$0xff] %vm1128, %v1069
        %1130 = vst.msk [vmem:[#allocation3 + $0x8] sm:$0xff] %vm1128, %v1071
        %1131 = vst.msk [vmem:[#allocation3 + $0x10] sm:$0xff] %vm1128, %v1073
        %1132 = vst.msk [vmem:[#allocation3 + $0x18] sm:$0xff] %vm1128, %v1075
        %1133 = vst.msk [vmem:[#allocation3 + $0x20] sm:$0xff] %vm1128, %v1077
        %1134 = vst.msk [vmem:[#allocation3 + $0x28] sm:$0xff] %vm1128, %v1079
        %1135 = vst.msk [vmem:[#allocation3 + $0x30] sm:$0xff] %vm1128, %v1081
        %1136 = vst.msk [vmem:[#allocation3 + $0x38] sm:$0xff] %vm1128, %v1083
        %1137 = vst.msk [vmem:[#allocation3 + $0x40] sm:$0xff] %vm1128, %v1085
        %1138 = vst.msk [vmem:[#allocation3 + $0x48] sm:$0xff] %vm1128, %v1087
        %1139 = vst.msk [vmem:[#allocation3 + $0x50] sm:$0xff] %vm1128, %v1089
        %1140 = vst.msk [vmem:[#allocation3 + $0x58] sm:$0xff] %vm1128, %v1091
        %1141 = vst.msk [vmem:[#allocation3 + $0x60] sm:$0xff] %vm1128, %v1093
        %1142 = vst.msk [vmem:[#allocation3 + $0x68] sm:$0xff] %vm1128, %v1095
        %1143 = vst.msk [vmem:[#allocation3 + $0x70] sm:$0xff] %vm1128, %v1097
        %1144 = vst.msk [vmem:[#allocation3 + $0x78] sm:$0xff] %vm1128, %v1099
        %1145 = vst.msk [vmem:[#allocation3 + $0x80] sm:$0xff] %vm1128, %v1101
        %1146 = vst.msk [vmem:[#allocation3 + $0x88] sm:$0xff] %vm1128, %v1103
        %1147 = vst.msk [vmem:[#allocation3 + $0x90] sm:$0xff] %vm1128, %v1105
        %1148 = vst.msk [vmem:[#allocation3 + $0x98] sm:$0xff] %vm1128, %v1107
        %v1149 = vld [vmem:[%s1027 + $0x1] sm:$0xff]
        %v1150 = vld [vmem:[%s1027 + $0x9] sm:$0xff]
        %v1151 = vld [vmem:[%s1027 + $0x19] sm:$0xff]
        %v1152 = vld [vmem:[%s1027 + $0x21] sm:$0xff]
        %v1153 = vld [vmem:[%s1027 + $0x31] sm:$0xff]
        %v1154 = vld [vmem:[%s1027 + $0x39] sm:$0xff]
        %v1155 = vld [vmem:[%s1027 + $0x49] sm:$0xff]
        %v1156 = vld [vmem:[%s1027 + $0x51] sm:$0xff]
        %v1157 = vld [vmem:[%s1027 + $0x61] sm:$0xff]
        %v1158 = vld [vmem:[%s1027 + $0x69] sm:$0xff]
        %v1159 = vld [vmem:[%s1027 + $0x79] sm:$0xff]
        %v1160 = vld [vmem:[%s1027 + $0x81] sm:$0xff]
        %v1161 = vld [vmem:[%s1027 + $0x91] sm:$0xff]
        %v1162 = vld [vmem:[%s1027 + $0x99] sm:$0xff]
        %v1163 = vld [vmem:[%s1027 + $0xa9] sm:$0xff]
        %v1164 = vld [vmem:[%s1027 + $0xb1] sm:$0xff]
        %v1165 = vld [vmem:[%s1027 + $0xc1] sm:$0xff]
        %v1166 = vld [vmem:[%s1027 + $0xc9] sm:$0xff]
        %v1167 = vld [vmem:[%s1027 + $0xd9] sm:$0xff]
        %v1168 = vld [vmem:[%s1027 + $0xe1] sm:$0xff]
        %1189 = vrot.lane.b32.xlu0 %v1149, 28
        %v1190 = vpop.permute.xlu0 %1189
        %1191 = vrot.lane.b32.xlu0 %v1150, 28
        %v1192 = vpop.permute.xlu0 %1191
        %1193 = vrot.lane.b32.xlu0 %v1151, 28
        %v1194 = vpop.permute.xlu0 %1193
        %1195 = vrot.lane.b32.xlu0 %v1152, 28
        %v1196 = vpop.permute.xlu0 %1195
        %1197 = vrot.lane.b32.xlu0 %v1153, 28
        %v1198 = vpop.permute.xlu0 %1197
        %1199 = vrot.lane.b32.xlu0 %v1154, 28
        %v1200 = vpop.permute.xlu0 %1199
        %1201 = vrot.lane.b32.xlu0 %v1155, 28
        %v1202 = vpop.permute.xlu0 %1201
        %1203 = vrot.lane.b32.xlu0 %v1156, 28
        %v1204 = vpop.permute.xlu0 %1203
        %1205 = vrot.lane.b32.xlu0 %v1157, 28
        %v1206 = vpop.permute.xlu0 %1205
        %1207 = vrot.lane.b32.xlu0 %v1158, 28
        %v1208 = vpop.permute.xlu0 %1207
        %1209 = vrot.lane.b32.xlu0 %v1159, 28
        %v1210 = vpop.permute.xlu0 %1209
        %1211 = vrot.lane.b32.xlu0 %v1160, 28
        %v1212 = vpop.permute.xlu0 %1211
        %1213 = vrot.lane.b32.xlu0 %v1161, 28
        %v1214 = vpop.permute.xlu0 %1213
        %1215 = vrot.lane.b32.xlu0 %v1162, 28
        %v1216 = vpop.permute.xlu0 %1215
        %1217 = vrot.lane.b32.xlu0 %v1163, 28
        %v1218 = vpop.permute.xlu0 %1217
        %1219 = vrot.lane.b32.xlu0 %v1164, 28
        %v1220 = vpop.permute.xlu0 %1219
        %1221 = vrot.lane.b32.xlu0 %v1165, 28
        %v1222 = vpop.permute.xlu0 %1221
        %1223 = vrot.lane.b32.xlu0 %v1166, 28
        %v1224 = vpop.permute.xlu0 %1223
        %1225 = vrot.lane.b32.xlu0 %v1167, 28
        %v1226 = vpop.permute.xlu0 %1225
        %1227 = vrot.lane.b32.xlu0 %v1168, 28
        %v1228 = vpop.permute.xlu0 %1227
        %vm1249 = vcmask 261344
        %1250 = vst.msk [vmem:[#allocation3] sm:$0xff] %vm1249, %v1190
        %1251 = vst.msk [vmem:[#allocation3 + $0x8] sm:$0xff] %vm1249, %v1192
        %1252 = vst.msk [vmem:[#allocation3 + $0x10] sm:$0xff] %vm1249, %v1194
        %1253 = vst.msk [vmem:[#allocation3 + $0x18] sm:$0xff] %vm1249, %v1196
        %1254 = vst.msk [vmem:[#allocation3 + $0x20] sm:$0xff] %vm1249, %v1198
        %1255 = vst.msk [vmem:[#allocation3 + $0x28] sm:$0xff] %vm1249, %v1200
        %1256 = vst.msk [vmem:[#allocation3 + $0x30] sm:$0xff] %vm1249, %v1202
        %1257 = vst.msk [vmem:[#allocation3 + $0x38] sm:$0xff] %vm1249, %v1204
        %1258 = vst.msk [vmem:[#allocation3 + $0x40] sm:$0xff] %vm1249, %v1206
        %1259 = vst.msk [vmem:[#allocation3 + $0x48] sm:$0xff] %vm1249, %v1208
        %1260 = vst.msk [vmem:[#allocation3 + $0x50] sm:$0xff] %vm1249, %v1210
        %1261 = vst.msk [vmem:[#allocation3 + $0x58] sm:$0xff] %vm1249, %v1212
        %1262 = vst.msk [vmem:[#allocation3 + $0x60] sm:$0xff] %vm1249, %v1214
        %1263 = vst.msk [vmem:[#allocation3 + $0x68] sm:$0xff] %vm1249, %v1216
        %1264 = vst.msk [vmem:[#allocation3 + $0x70] sm:$0xff] %vm1249, %v1218
        %1265 = vst.msk [vmem:[#allocation3 + $0x78] sm:$0xff] %vm1249, %v1220
        %1266 = vst.msk [vmem:[#allocation3 + $0x80] sm:$0xff] %vm1249, %v1222
        %1267 = vst.msk [vmem:[#allocation3 + $0x88] sm:$0xff] %vm1249, %v1224
        %1268 = vst.msk [vmem:[#allocation3 + $0x90] sm:$0xff] %vm1249, %v1226
        %1269 = vst.msk [vmem:[#allocation3 + $0x98] sm:$0xff] %vm1249, %v1228
        %v1270 = vld [vmem:[%s1027 + $0x2] sm:$0xff]
        %v1271 = vld [vmem:[%s1027 + $0xa] sm:$0xff]
        %v1272 = vld [vmem:[%s1027 + $0x1a] sm:$0xff]
        %v1273 = vld [vmem:[%s1027 + $0x22] sm:$0xff]
        %v1274 = vld [vmem:[%s1027 + $0x32] sm:$0xff]
        %v1275 = vld [vmem:[%s1027 + $0x3a] sm:$0xff]
        %v1276 = vld [vmem:[%s1027 + $0x4a] sm:$0xff]
        %v1277 = vld [vmem:[%s1027 + $0x52] sm:$0xff]
        %v1278 = vld [vmem:[%s1027 + $0x62] sm:$0xff]
        %v1279 = vld [vmem:[%s1027 + $0x6a] sm:$0xff]
        %v1280 = vld [vmem:[%s1027 + $0x7a] sm:$0xff]
        %v1281 = vld [vmem:[%s1027 + $0x82] sm:$0xff]
        %v1282 = vld [vmem:[%s1027 + $0x92] sm:$0xff]
        %v1283 = vld [vmem:[%s1027 + $0x9a] sm:$0xff]
        %v1284 = vld [vmem:[%s1027 + $0xaa] sm:$0xff]
        %v1285 = vld [vmem:[%s1027 + $0xb2] sm:$0xff]
        %v1286 = vld [vmem:[%s1027 + $0xc2] sm:$0xff]
        %v1287 = vld [vmem:[%s1027 + $0xca] sm:$0xff]
        %v1288 = vld [vmem:[%s1027 + $0xda] sm:$0xff]
        %v1289 = vld [vmem:[%s1027 + $0xe2] sm:$0xff]
        %1310 = vrot.lane.b32.xlu0 %v1270, 32
        %v1311 = vpop.permute.xlu0 %1310
        %1312 = vrot.lane.b32.xlu0 %v1271, 32
        %v1313 = vpop.permute.xlu0 %1312
        %1314 = vrot.lane.b32.xlu0 %v1272, 32
        %v1315 = vpop.permute.xlu0 %1314
        %1316 = vrot.lane.b32.xlu0 %v1273, 32
        %v1317 = vpop.permute.xlu0 %1316
        %1318 = vrot.lane.b32.xlu0 %v1274, 32
        %v1319 = vpop.permute.xlu0 %1318
        %1320 = vrot.lane.b32.xlu0 %v1275, 32
        %v1321 = vpop.permute.xlu0 %1320
        %1322 = vrot.lane.b32.xlu0 %v1276, 32
        %v1323 = vpop.permute.xlu0 %1322
        %1324 = vrot.lane.b32.xlu0 %v1277, 32
        %v1325 = vpop.permute.xlu0 %1324
        %1326 = vrot.lane.b32.xlu0 %v1278, 32
        %v1327 = vpop.permute.xlu0 %1326
        %1328 = vrot.lane.b32.xlu0 %v1279, 32
        %v1329 = vpop.permute.xlu0 %1328
        %1330 = vrot.lane.b32.xlu0 %v1280, 32
        %v1331 = vpop.permute.xlu0 %1330
        %1332 = vrot.lane.b32.xlu0 %v1281, 32
        %v1333 = vpop.permute.xlu0 %1332
        %1334 = vrot.lane.b32.xlu0 %v1282, 32
        %v1335 = vpop.permute.xlu0 %1334
        %1336 = vrot.lane.b32.xlu0 %v1283, 32
        %v1337 = vpop.permute.xlu0 %1336
        %1338 = vrot.lane.b32.xlu0 %v1284, 32
        %v1339 = vpop.permute.xlu0 %1338
        %1340 = vrot.lane.b32.xlu0 %v1285, 32
        %v1341 = vpop.permute.xlu0 %1340
        %1342 = vrot.lane.b32.xlu0 %v1286, 32
        %v1343 = vpop.permute.xlu0 %1342
        %1344 = vrot.lane.b32.xlu0 %v1287, 32
        %v1345 = vpop.permute.xlu0 %1344
        %1346 = vrot.lane.b32.xlu0 %v1288, 32
        %v1347 = vpop.permute.xlu0 %1346
        %1348 = vrot.lane.b32.xlu0 %v1289, 32
        %v1349 = vpop.permute.xlu0 %1348
        %vm1370 = vcmask 294144
        %1371 = vst.msk [vmem:[#allocation3] sm:$0xff] %vm1370, %v1311
        %1372 = vst.msk [vmem:[#allocation3 + $0x8] sm:$0xff] %vm1370, %v1313
        %1373 = vst.msk [vmem:[#allocation3 + $0x10] sm:$0xff] %vm1370, %v1315
        %1374 = vst.msk [vmem:[#allocation3 + $0x18] sm:$0xff] %vm1370, %v1317
        %1375 = vst.msk [vmem:[#allocation3 + $0x20] sm:$0xff] %vm1370, %v1319
        %1376 = vst.msk [vmem:[#allocation3 + $0x28] sm:$0xff] %vm1370, %v1321
        %1377 = vst.msk [vmem:[#allocation3 + $0x30] sm:$0xff] %vm1370, %v1323
        %1378 = vst.msk [vmem:[#allocation3 + $0x38] sm:$0xff] %vm1370, %v1325
        %1379 = vst.msk [vmem:[#allocation3 + $0x40] sm:$0xff] %vm1370, %v1327
        %1380 = vst.msk [vmem:[#allocation3 + $0x48] sm:$0xff] %vm1370, %v1329
        %1381 = vst.msk [vmem:[#allocation3 + $0x50] sm:$0xff] %vm1370, %v1331
        %1382 = vst.msk [vmem:[#allocation3 + $0x58] sm:$0xff] %vm1370, %v1333
        %1383 = vst.msk [vmem:[#allocation3 + $0x60] sm:$0xff] %vm1370, %v1335
        %1384 = vst.msk [vmem:[#allocation3 + $0x68] sm:$0xff] %vm1370, %v1337
        %1385 = vst.msk [vmem:[#allocation3 + $0x70] sm:$0xff] %vm1370, %v1339
        %1386 = vst.msk [vmem:[#allocation3 + $0x78] sm:$0xff] %vm1370, %v1341
        %1387 = vst.msk [vmem:[#allocation3 + $0x80] sm:$0xff] %vm1370, %v1343
        %1388 = vst.msk [vmem:[#allocation3 + $0x88] sm:$0xff] %vm1370, %v1345
        %1389 = vst.msk [vmem:[#allocation3 + $0x90] sm:$0xff] %vm1370, %v1347
        %1390 = vst.msk [vmem:[#allocation3 + $0x98] sm:$0xff] %vm1370, %v1349
        %v1391 = vld [vmem:[#allocation3] sm:$0xff]
        %v1392 = vld [vmem:[#allocation3 + $0x8] sm:$0xff]
        %v1393 = vld [vmem:[#allocation3 + $0x10] sm:$0xff]
        %v1394 = vld [vmem:[#allocation3 + $0x18] sm:$0xff]
        %v1395 = vld [vmem:[#allocation3 + $0x20] sm:$0xff]
        %v1396 = vld [vmem:[#allocation3 + $0x28] sm:$0xff]
        %v1397 = vld [vmem:[#allocation3 + $0x30] sm:$0xff]
        %v1398 = vld [vmem:[#allocation3 + $0x38] sm:$0xff]
        %v1399 = vld [vmem:[#allocation3 + $0x40] sm:$0xff]
        %v1400 = vld [vmem:[#allocation3 + $0x48] sm:$0xff]
        %v1401 = vld [vmem:[#allocation3 + $0x50] sm:$0xff]
        %v1402 = vld [vmem:[#allocation3 + $0x58] sm:$0xff]
        %v1403 = vld [vmem:[#allocation3 + $0x60] sm:$0xff]
        %v1404 = vld [vmem:[#allocation3 + $0x68] sm:$0xff]
        %v1405 = vld [vmem:[#allocation3 + $0x70] sm:$0xff]
        %v1406 = vld [vmem:[#allocation3 + $0x78] sm:$0xff]
        %v1407 = vld [vmem:[#allocation3 + $0x80] sm:$0xff]
        %v1408 = vld [vmem:[#allocation3 + $0x88] sm:$0xff]
        %v1409 = vld [vmem:[#allocation3 + $0x90] sm:$0xff]
        %v1410 = vld [vmem:[#allocation3 + $0x98] sm:$0xff]
        %v1411 = vpack.c.bf16 %v1392, %v1391
        %v1412 = vpack.c.bf16 %v1394, %v1393
        %v1413 = vpack.c.bf16 %v1396, %v1395
        %v1414 = vpack.c.bf16 %v1398, %v1397
        %v1415 = vpack.c.bf16 %v1400, %v1399
        %v1416 = vpack.c.bf16 %v1402, %v1401
        %v1417 = vpack.c.bf16 %v1404, %v1403
        %v1418 = vpack.c.bf16 %v1406, %v1405
        %v1419 = vpack.c.bf16 %v1408, %v1407
        %v1420 = vpack.c.bf16 %v1410, %v1409
        %v1421 = vld [vmem:[%s1] sm:$0xf]
        %v1422 = vld [vmem:[%s1 + $0x4] sm:$0xf]
        %v1423 = vld [vmem:[%s1 + $0x8] sm:$0xf]
        %v1424 = vld [vmem:[%s1 + $0xc] sm:$0xf]
        %v1425 = vld [vmem:[%s1 + $0x10] sm:$0x3]
        %v1431 = vunpack.c.l.b16 %v1421
        %v1432 = vunpack.c.l.b16 %v1422
        %v1433 = vunpack.c.l.b16 %v1423
        %v1434 = vunpack.c.l.b16 %v1424
        %v1435 = vunpack.c.l.b16 %v1425
        %v1436 = vpack.c.b16 %v1432, %v1431
        %v1437 = vpack.c.b16 %v1434, %v1433
        %v1438 = vpack.c.b16 %v1435, %v1435
        %vm1441 = vcmask 293888
        %v1443 = vsel %vm1441, %v1411, 0
        %v1446 = vsel %vm1441, %v1412, 0
        %v1449 = vsel %vm1441, %v1413, 0
        %v1452 = vsel %vm1441, %v1414, 0
        %v1455 = vsel %vm1441, %v1415, 0
        %v1458 = vsel %vm1441, %v1416, 0
        %v1461 = vsel %vm1441, %v1417, 0
        %v1464 = vsel %vm1441, %v1418, 0
        %v1467 = vsel %vm1441, %v1419, 0
        %v1470 = vsel %vm1441, %v1420, 0
        %vm1472 = vcmask 1041408
        %v1474 = vsel %vm1472, %v1438, 0
        %1476 = vmatprep.subr.bf16.mxu0 0
        %1477 = vmatpush1.bf16.msra.mxu0 %v1436
        %1478 = vmatprep.subr.bf16.mxu0 0
        %1479 = vmatpush1.bf16.msra.mxu0 %v1437
        %1480 = vmatprep.subr.bf16.mxu0 0
        %1481 = vmatpush1.bf16.msra.mxu0 %v1474
        %1482 = vmatprep.subr.bf16.mxu0 0
        %1483 = vmatpush1.bf16.msra.mxu0 0
        %1484 = vmatprep.subr.bf16.mxu0 0
        %1485 = vmatpush1.bf16.msra.mxu0 0
        %1486 = vmatprep.subr.bf16.mxu0 0
        %1487 = vmatpush1.bf16.msra.mxu0 0
        %1488 = vmatprep.subr.bf16.mxu0 0
        %1489 = vmatpush1.bf16.msra.mxu0 0
        %1490 = vmatprep.subr.bf16.mxu0 0
        %1491 = vmatpush1.bf16.msra.mxu0 0
        %1492 = vmatprep.subr.bf16.mxu0 0
        %1493 = vmatpush1.bf16.msra.mxu0 0
        %1494 = vmatprep.subr.bf16.mxu0 0
        %1495 = vmatpush1.bf16.msra.mxu0 0
        %1496 = vmatprep.subr.bf16.mxu0 0
        %1497 = vmatpush1.bf16.msra.mxu0 0
        %1498 = vmatprep.subr.bf16.mxu0 0
        %1499 = vmatpush1.bf16.msra.mxu0 0
        %1500 = vmatprep.subr.bf16.mxu0 0
        %1501 = vmatpush1.bf16.msra.mxu0 0
        %1502 = vmatprep.subr.bf16.mxu0 0
        %1503 = vmatpush1.bf16.msra.mxu0 0
        %1504 = vmatprep.subr.bf16.mxu0 0
        %1505 = vmatpush1.bf16.msra.mxu0 0
        %1506 = vmatprep.subr.bf16.mxu0 0
        %1507 = vmatpush1.bf16.msra.mxu0 0
        %1508 = vmatprep.mubr.bf16.mxu0 0
        %1509 = vmatmul.mubr.bf16.gmra.mrb[0].mxu0 %v1443
        %v1510 = vpop.f32.mrb[0].mxu0
        %v1511 = vadd.f32 0.0, %v1510
        %v1512 = vpop.f32.mrb[0].mxu0
        %v1513 = vpop.f32.mrb[0].mxu0
        %v1514 = vadd.f32 0.0, %v1513
        %v1515 = vpop.f32.mrb[0].mxu0
        %1516 = vmatprep.mubr.bf16.mxu0 0
        %1517 = vmatmul.mubr.bf16.gmra.mrb[0].mxu0 %v1446
        %v1518 = vpop.f32.mrb[0].mxu0
        %v1519 = vadd.f32 0.0, %v1518
        %v1520 = vpop.f32.mrb[0].mxu0
        %v1521 = vpop.f32.mrb[0].mxu0
        %v1522 = vadd.f32 0.0, %v1521
        %v1523 = vpop.f32.mrb[0].mxu0
        %1524 = vmatprep.mubr.bf16.mxu0 0
        %1525 = vmatmul.mubr.bf16.gmra.mrb[0].mxu0 %v1449
        %v1526 = vpop.f32.mrb[0].mxu0
        %v1527 = vadd.f32 0.0, %v1526
        %v1528 = vpop.f32.mrb[0].mxu0
        %v1529 = vpop.f32.mrb[0].mxu0
        %v1530 = vadd.f32 0.0, %v1529
        %v1531 = vpop.f32.mrb[0].mxu0
        %1532 = vmatprep.mubr.bf16.mxu0 0
        %1533 = vmatmul.mubr.bf16.gmra.mrb[0].mxu0 %v1452
        %v1534 = vpop.f32.mrb[0].mxu0
        %v1535 = vadd.f32 0.0, %v1534
        %v1536 = vpop.f32.mrb[0].mxu0
        %v1537 = vpop.f32.mrb[0].mxu0
        %v1538 = vadd.f32 0.0, %v1537
        %v1539 = vpop.f32.mrb[0].mxu0
        %1540 = vmatprep.mubr.bf16.mxu0 0
        %1541 = vmatmul.mubr.bf16.gmra.mrb[0].mxu0 %v1455
        %v1542 = vpop.f32.mrb[0].mxu0
        %v1543 = vadd.f32 0.0, %v1542
        %v1544 = vpop.f32.mrb[0].mxu0
        %v1545 = vpop.f32.mrb[0].mxu0
        %v1546 = vadd.f32 0.0, %v1545
        %v1547 = vpop.f32.mrb[0].mxu0
        %1548 = vmatprep.mubr.bf16.mxu0 0
        %1549 = vmatmul.mubr.bf16.gmra.mrb[0].mxu0 %v1458
        %v1550 = vpop.f32.mrb[0].mxu0
        %v1551 = vadd.f32 0.0, %v1550
        %v1552 = vpop.f32.mrb[0].mxu0
        %v1553 = vpop.f32.mrb[0].mxu0
        %v1554 = vadd.f32 0.0, %v1553
        %v1555 = vpop.f32.mrb[0].mxu0
        %1556 = vmatprep.mubr.bf16.mxu0 0
        %1557 = vmatmul.mubr.bf16.gmra.mrb[0].mxu0 %v1461
        %v1558 = vpop.f32.mrb[0].mxu0
        %v1559 = vadd.f32 0.0, %v1558
        %v1560 = vpop.f32.mrb[0].mxu0
        %v1561 = vpop.f32.mrb[0].mxu0
        %v1562 = vadd.f32 0.0, %v1561
        %v1563 = vpop.f32.mrb[0].mxu0
        %1564 = vmatprep.mubr.bf16.mxu0 0
        %1565 = vmatmul.mubr.bf16.gmra.mrb[0].mxu0 %v1464
        %v1566 = vpop.f32.mrb[0].mxu0
        %v1567 = vadd.f32 0.0, %v1566
        %v1568 = vpop.f32.mrb[0].mxu0
        %v1569 = vpop.f32.mrb[0].mxu0
        %v1570 = vadd.f32 0.0, %v1569
        %v1571 = vpop.f32.mrb[0].mxu0
        %1572 = vmatprep.mubr.bf16.mxu0 0
        %1573 = vmatmul.mubr.bf16.gmra.mrb[0].mxu0 %v1467
        %v1574 = vpop.f32.mrb[0].mxu0
        %v1575 = vadd.f32 0.0, %v1574
        %v1576 = vpop.f32.mrb[0].mxu0
        %v1577 = vpop.f32.mrb[0].mxu0
        %v1578 = vadd.f32 0.0, %v1577
        %v1579 = vpop.f32.mrb[0].mxu0
        %1580 = vmatprep.mubr.bf16.mxu0 0
        %1581 = vmatmul.mubr.bf16.gmra.mrb[0].mxu0 %v1470
        %v1582 = vpop.f32.mrb[0].mxu0
        %v1583 = vadd.f32 0.0, %v1582
        %v1584 = vpop.f32.mrb[0].mxu0
        %v1585 = vpop.f32.mrb[0].mxu0
        %v1586 = vadd.f32 0.0, %v1585
        %v1587 = vpop.f32.mrb[0].mxu0
        %1588 = vdwg.mxu0
        %v1589 = vlaneseq
        %v1590 = vshrl.u32 %v1589, 7
        %v1591 = vsub.s32 0, %v1590
        %v1592 = vrot.slane %v370, %v1591
        %v1593 = vmul.f32 %v1511, %v1592
        %v1594 = vmul.f32 %v1514, %v1592
        %v1595 = vmul.f32 %v1519, %v1592
        %v1596 = vmul.f32 %v1522, %v1592
        %v1597 = vmul.f32 %v1527, %v1592
        %v1598 = vmul.f32 %v1530, %v1592
        %v1599 = vmul.f32 %v1535, %v1592
        %v1600 = vmul.f32 %v1538, %v1592
        %v1601 = vmul.f32 %v1543, %v1592
        %v1602 = vmul.f32 %v1546, %v1592
        %v1603 = vmul.f32 %v1551, %v1592
        %v1604 = vmul.f32 %v1554, %v1592
        %v1605 = vmul.f32 %v1559, %v1592
        %v1606 = vmul.f32 %v1562, %v1592
        %v1607 = vmul.f32 %v1567, %v1592
        %v1608 = vmul.f32 %v1570, %v1592
        %v1609 = vmul.f32 %v1575, %v1592
        %v1610 = vmul.f32 %v1578, %v1592
        %v1611 = vmul.f32 %v1583, %v1592
        %v1612 = vmul.f32 %v1586, %v1592
        %v1613 = vlaneseq
        %v1614 = vshrl.u32 %v1613, 7
        %v1615 = vsub.s32 0, %v1614
        %v1616 = vrot.slane %v371, %v1615
        %v1617 = vadd.f32 %v1593, %v1616
        %v1618 = vadd.f32 %v1594, %v1616
        %v1619 = vadd.f32 %v1595, %v1616
        %v1620 = vadd.f32 %v1596, %v1616
        %v1621 = vadd.f32 %v1597, %v1616
        %v1622 = vadd.f32 %v1598, %v1616
        %v1623 = vadd.f32 %v1599, %v1616
        %v1624 = vadd.f32 %v1600, %v1616
        %v1625 = vadd.f32 %v1601, %v1616
        %v1626 = vadd.f32 %v1602, %v1616
        %v1627 = vadd.f32 %v1603, %v1616
        %v1628 = vadd.f32 %v1604, %v1616
        %v1629 = vadd.f32 %v1605, %v1616
        %v1630 = vadd.f32 %v1606, %v1616
        %v1631 = vadd.f32 %v1607, %v1616
        %v1632 = vadd.f32 %v1608, %v1616
        %v1633 = vadd.f32 %v1609, %v1616
        %v1634 = vadd.f32 %v1610, %v1616
        %v1635 = vadd.f32 %v1611, %v1616
        %v1636 = vadd.f32 %v1612, %v1616
        %v1637 = vmax.f32 %v1617, 0.0
        %v1638 = vmax.f32 %v1618, 0.0
        %v1639 = vmax.f32 %v1619, 0.0
        %v1640 = vmax.f32 %v1620, 0.0
        %v1641 = vmax.f32 %v1621, 0.0
        %v1642 = vmax.f32 %v1622, 0.0
        %v1643 = vmax.f32 %v1623, 0.0
        %v1644 = vmax.f32 %v1624, 0.0
        %v1645 = vmax.f32 %v1625, 0.0
        %v1646 = vmax.f32 %v1626, 0.0
        %v1647 = vmax.f32 %v1627, 0.0
        %v1648 = vmax.f32 %v1628, 0.0
        %v1649 = vmax.f32 %v1629, 0.0
        %v1650 = vmax.f32 %v1630, 0.0
        %v1651 = vmax.f32 %v1631, 0.0
        %v1652 = vmax.f32 %v1632, 0.0
        %v1653 = vmax.f32 %v1633, 0.0
        %v1654 = vmax.f32 %v1634, 0.0
        %v1655 = vmax.f32 %v1635, 0.0
        %v1656 = vmax.f32 %v1636, 0.0
        %s1657 = ssub.s32 %s238, 1
        %v1658 = vstv %s1657
        %v1659 = vadd.s32 %v1658, 1
        %v1660 = vadd.s32 %v1658, 2
        %v1661 = vadd.s32 %v1658, 3
        %v1662 = vadd.s32 %v1658, 4
        %v1663 = vadd.s32 %v1658, 5
        %v1664 = vadd.s32 %v1658, 6
        %v1665 = vadd.s32 %v1658, 7
        %v1666 = vadd.s32 %v1658, 8
        %v1667 = vadd.s32 %v1658, 9
        %vm1668 = vcmp.ge.s32.totalorder %v1658, 0
        %vm1669 = vcmp.ge.s32.totalorder %v1659, 0
        %vm1670 = vcmp.ge.s32.totalorder %v1660, 0
        %vm1671 = vcmp.ge.s32.totalorder %v1661, 0
        %vm1672 = vcmp.ge.s32.totalorder %v1662, 0
        %vm1673 = vcmp.ge.s32.totalorder %v1663, 0
        %vm1674 = vcmp.ge.s32.totalorder %v1664, 0
        %vm1675 = vcmp.ge.s32.totalorder %v1665, 0
        %vm1676 = vcmp.ge.s32.totalorder %v1666, 0
        %vm1677 = vcmp.ge.s32.totalorder %v1667, 0
        %vm1678 = vcmp.lt.s32.totalorder %v1658, 16
        %vm1679 = vcmp.lt.s32.totalorder %v1659, 16
        %vm1680 = vcmp.lt.s32.totalorder %v1660, 16
        %vm1681 = vcmp.lt.s32.totalorder %v1661, 16
        %vm1682 = vcmp.lt.s32.totalorder %v1662, 16
        %vm1683 = vcmp.lt.s32.totalorder %v1663, 16
        %vm1684 = vcmp.lt.s32.totalorder %v1664, 16
        %vm1685 = vcmp.lt.s32.totalorder %v1665, 16
        %vm1686 = vcmp.lt.s32.totalorder %v1666, 16
        %vm1687 = vcmp.lt.s32.totalorder %v1667, 16
        %vm1688 = vmand %vm1668, %vm1678
        %vm1689 = vmand %vm1669, %vm1679
        %vm1690 = vmand %vm1670, %vm1680
        %vm1691 = vmand %vm1671, %vm1681
        %vm1692 = vmand %vm1672, %vm1682
        %vm1693 = vmand %vm1673, %vm1683
        %vm1694 = vmand %vm1674, %vm1684
        %vm1695 = vmand %vm1675, %vm1685
        %vm1696 = vmand %vm1676, %vm1686
        %vm1697 = vmand %vm1677, %vm1687
        %v1698 = vsel %vm1688, 1, 0
        %v1699 = vsel %vm1689, 1, 0
        %v1700 = vsel %vm1690, 1, 0
        %v1701 = vsel %vm1691, 1, 0
        %v1702 = vsel %vm1692, 1, 0
        %v1703 = vsel %vm1693, 1, 0
        %v1704 = vsel %vm1694, 1, 0
        %v1705 = vsel %vm1695, 1, 0
        %v1706 = vsel %vm1696, 1, 0
        %v1707 = vsel %vm1697, 1, 0
        %vm1708 = vcmp.eq.s32.totalorder %v1698, 1
        %vm1709 = vcmp.eq.s32.totalorder %v1699, 1
        %vm1710 = vcmp.eq.s32.totalorder %v1700, 1
        %vm1711 = vcmp.eq.s32.totalorder %v1701, 1
        %vm1712 = vcmp.eq.s32.totalorder %v1702, 1
        %vm1713 = vcmp.eq.s32.totalorder %v1703, 1
        %vm1714 = vcmp.eq.s32.totalorder %v1704, 1
        %vm1715 = vcmp.eq.s32.totalorder %v1705, 1
        %vm1716 = vcmp.eq.s32.totalorder %v1706, 1
        %vm1717 = vcmp.eq.s32.totalorder %v1707, 1
        %v1718 = vsel %vm1708, %v1637, 0.0
        %v1719 = vsel %vm1708, %v1638, 0.0
        %v1720 = vsel %vm1709, %v1639, 0.0
        %v1721 = vsel %vm1709, %v1640, 0.0
        %v1722 = vsel %vm1710, %v1641, 0.0
        %v1723 = vsel %vm1710, %v1642, 0.0
        %v1724 = vsel %vm1711, %v1643, 0.0
        %v1725 = vsel %vm1711, %v1644, 0.0
        %v1726 = vsel %vm1712, %v1645, 0.0
        %v1727 = vsel %vm1712, %v1646, 0.0
        %v1728 = vsel %vm1713, %v1647, 0.0
        %v1729 = vsel %vm1713, %v1648, 0.0
        %v1730 = vsel %vm1714, %v1649, 0.0
        %v1731 = vsel %vm1714, %v1650, 0.0
        %v1732 = vsel %vm1715, %v1651, 0.0
        %v1733 = vsel %vm1715, %v1652, 0.0
        %v1734 = vsel %vm1716, %v1653, 0.0
        %v1735 = vsel %vm1716, %v1654, 0.0
        %v1736 = vsel %vm1717, %v1655, 0.0
        %v1737 = vsel %vm1717, %v1656, 0.0
        %vm1738 = vcmask 57344
        %1739 = vst.msk [vmem:[#allocation4] sm:$0x1] %vm1738, 0.0
        %1740 = vst.msk [vmem:[#allocation4 + $0x18] sm:$0x1] %vm1738, 0.0
        %1741 = vst.msk [vmem:[#allocation4 + $0x30] sm:$0x1] %vm1738, 0.0
        %1742 = vst.msk [vmem:[#allocation4 + $0x48] sm:$0x1] %vm1738, 0.0
        %1743 = vst.msk [vmem:[#allocation4 + $0x60] sm:$0x1] %vm1738, 0.0
        %1744 = vst.msk [vmem:[#allocation4 + $0x78] sm:$0x1] %vm1738, 0.0
        %1745 = vst.msk [vmem:[#allocation4 + $0x90] sm:$0x1] %vm1738, 0.0
        %1746 = vst.msk [vmem:[#allocation4 + $0xa8] sm:$0x1] %vm1738, 0.0
        %1747 = vst.msk [vmem:[#allocation4 + $0xc0] sm:$0x1] %vm1738, 0.0
        %1748 = vst.msk [vmem:[#allocation4 + $0xd8] sm:$0x1] %vm1738, 0.0
        %1749 = vst.msk [vmem:[#allocation4 + $0x11] sm:$0x1] %vm1738, 0.0
        %1750 = vst.msk [vmem:[#allocation4 + $0x29] sm:$0x1] %vm1738, 0.0
        %1751 = vst.msk [vmem:[#allocation4 + $0x41] sm:$0x1] %vm1738, 0.0
        %1752 = vst.msk [vmem:[#allocation4 + $0x59] sm:$0x1] %vm1738, 0.0
        %1753 = vst.msk [vmem:[#allocation4 + $0x71] sm:$0x1] %vm1738, 0.0
        %1754 = vst.msk [vmem:[#allocation4 + $0x89] sm:$0x1] %vm1738, 0.0
        %1755 = vst.msk [vmem:[#allocation4 + $0xa1] sm:$0x1] %vm1738, 0.0
        %1756 = vst.msk [vmem:[#allocation4 + $0xb9] sm:$0x1] %vm1738, 0.0
        %1757 = vst.msk [vmem:[#allocation4 + $0xd1] sm:$0x1] %vm1738, 0.0
        %1758 = vst.msk [vmem:[#allocation4 + $0xe9] sm:$0x1] %vm1738, 0.0
        %vm1759 = vcmask 64512
        %1760 = vst.msk [vmem:[#allocation4 + $0x1] sm:$0xff] %vm1759, %v1718
        %1761 = vst.msk [vmem:[#allocation4 + $0x9] sm:$0xff] %vm1759, %v1719
        %1762 = vst.msk [vmem:[#allocation4 + $0x19] sm:$0xff] %vm1759, %v1720
        %1763 = vst.msk [vmem:[#allocation4 + $0x21] sm:$0xff] %vm1759, %v1721
        %1764 = vst.msk [vmem:[#allocation4 + $0x31] sm:$0xff] %vm1759, %v1722
        %1765 = vst.msk [vmem:[#allocation4 + $0x39] sm:$0xff] %vm1759, %v1723
        %1766 = vst.msk [vmem:[#allocation4 + $0x49] sm:$0xff] %vm1759, %v1724
        %1767 = vst.msk [vmem:[#allocation4 + $0x51] sm:$0xff] %vm1759, %v1725
        %1768 = vst.msk [vmem:[#allocation4 + $0x61] sm:$0xff] %vm1759, %v1726
        %1769 = vst.msk [vmem:[#allocation4 + $0x69] sm:$0xff] %vm1759, %v1727
        %1770 = vst.msk [vmem:[#allocation4 + $0x79] sm:$0xff] %vm1759, %v1728
        %1771 = vst.msk [vmem:[#allocation4 + $0x81] sm:$0xff] %vm1759, %v1729
        %1772 = vst.msk [vmem:[#allocation4 + $0x91] sm:$0xff] %vm1759, %v1730
        %1773 = vst.msk [vmem:[#allocation4 + $0x99] sm:$0xff] %vm1759, %v1731
        %1774 = vst.msk [vmem:[#allocation4 + $0xa9] sm:$0xff] %vm1759, %v1732
        %1775 = vst.msk [vmem:[#allocation4 + $0xb1] sm:$0xff] %vm1759, %v1733
        %1776 = vst.msk [vmem:[#allocation4 + $0xc1] sm:$0xff] %vm1759, %v1734
        %1777 = vst.msk [vmem:[#allocation4 + $0xc9] sm:$0xff] %vm1759, %v1735
        %1778 = vst.msk [vmem:[#allocation4 + $0xd9] sm:$0xff] %vm1759, %v1736
        %1779 = vst.msk [vmem:[#allocation4 + $0xe1] sm:$0xff] %vm1759, %v1737
        %v1780 = vld [vmem:[#allocation4] sm:$0xff]
        %v1781 = vld [vmem:[#allocation4 + $0x8] sm:$0xff]
        %v1782 = vld [vmem:[#allocation4 + $0x18] sm:$0xff]
        %v1783 = vld [vmem:[#allocation4 + $0x20] sm:$0xff]
        %v1784 = vld [vmem:[#allocation4 + $0x30] sm:$0xff]
        %v1785 = vld [vmem:[#allocation4 + $0x38] sm:$0xff]
        %v1786 = vld [vmem:[#allocation4 + $0x48] sm:$0xff]
        %v1787 = vld [vmem:[#allocation4 + $0x50] sm:$0xff]
        %v1788 = vld [vmem:[#allocation4 + $0x60] sm:$0xff]
        %v1789 = vld [vmem:[#allocation4 + $0x68] sm:$0xff]
        %v1790 = vld [vmem:[#allocation4 + $0x78] sm:$0xff]
        %v1791 = vld [vmem:[#allocation4 + $0x80] sm:$0xff]
        %v1792 = vld [vmem:[#allocation4 + $0x90] sm:$0xff]
        %v1793 = vld [vmem:[#allocation4 + $0x98] sm:$0xff]
        %v1794 = vld [vmem:[#allocation4 + $0xa8] sm:$0xff]
        %v1795 = vld [vmem:[#allocation4 + $0xb0] sm:$0xff]
        %1796 = vst.msk [vmem:[#allocation5] sm:$0xff] %vm1759, %v1780
        %1797 = vst.msk [vmem:[#allocation5 + $0x8] sm:$0xff] %vm1759, %v1781
        %1798 = vst.msk [vmem:[#allocation5 + $0x10] sm:$0xff] %vm1759, %v1782
        %1799 = vst.msk [vmem:[#allocation5 + $0x18] sm:$0xff] %vm1759, %v1783
        %1800 = vst.msk [vmem:[#allocation5 + $0x20] sm:$0xff] %vm1759, %v1784
        %1801 = vst.msk [vmem:[#allocation5 + $0x28] sm:$0xff] %vm1759, %v1785
        %1802 = vst.msk [vmem:[#allocation5 + $0x30] sm:$0xff] %vm1759, %v1786
        %1803 = vst.msk [vmem:[#allocation5 + $0x38] sm:$0xff] %vm1759, %v1787
        %1804 = vst.msk [vmem:[#allocation5 + $0x40] sm:$0xff] %vm1759, %v1788
        %1805 = vst.msk [vmem:[#allocation5 + $0x48] sm:$0xff] %vm1759, %v1789
        %1806 = vst.msk [vmem:[#allocation5 + $0x50] sm:$0xff] %vm1759, %v1790
        %1807 = vst.msk [vmem:[#allocation5 + $0x58] sm:$0xff] %vm1759, %v1791
        %1808 = vst.msk [vmem:[#allocation5 + $0x60] sm:$0xff] %vm1759, %v1792
        %1809 = vst.msk [vmem:[#allocation5 + $0x68] sm:$0xff] %vm1759, %v1793
        %1810 = vst.msk [vmem:[#allocation5 + $0x70] sm:$0xff] %vm1759, %v1794
        %1811 = vst.msk [vmem:[#allocation5 + $0x78] sm:$0xff] %vm1759, %v1795
        %v1812 = vld [vmem:[#allocation4 + $0x1] sm:$0xff]
        %v1813 = vld [vmem:[#allocation4 + $0x9] sm:$0xff]
        %v1814 = vld [vmem:[#allocation4 + $0x19] sm:$0xff]
        %v1815 = vld [vmem:[#allocation4 + $0x21] sm:$0xff]
        %v1816 = vld [vmem:[#allocation4 + $0x31] sm:$0xff]
        %v1817 = vld [vmem:[#allocation4 + $0x39] sm:$0xff]
        %v1818 = vld [vmem:[#allocation4 + $0x49] sm:$0xff]
        %v1819 = vld [vmem:[#allocation4 + $0x51] sm:$0xff]
        %v1820 = vld [vmem:[#allocation4 + $0x61] sm:$0xff]
        %v1821 = vld [vmem:[#allocation4 + $0x69] sm:$0xff]
        %v1822 = vld [vmem:[#allocation4 + $0x79] sm:$0xff]
        %v1823 = vld [vmem:[#allocation4 + $0x81] sm:$0xff]
        %v1824 = vld [vmem:[#allocation4 + $0x91] sm:$0xff]
        %v1825 = vld [vmem:[#allocation4 + $0x99] sm:$0xff]
        %v1826 = vld [vmem:[#allocation4 + $0xa9] sm:$0xff]
        %v1827 = vld [vmem:[#allocation4 + $0xb1] sm:$0xff]
        %1844 = vrot.lane.b32.xlu0 %v1812, 8
        %v1845 = vpop.permute.xlu0 %1844
        %1846 = vrot.lane.b32.xlu0 %v1813, 8
        %v1847 = vpop.permute.xlu0 %1846
        %1848 = vrot.lane.b32.xlu0 %v1814, 8
        %v1849 = vpop.permute.xlu0 %1848
        %1850 = vrot.lane.b32.xlu0 %v1815, 8
        %v1851 = vpop.permute.xlu0 %1850
        %1852 = vrot.lane.b32.xlu0 %v1816, 8
        %v1853 = vpop.permute.xlu0 %1852
        %1854 = vrot.lane.b32.xlu0 %v1817, 8
        %v1855 = vpop.permute.xlu0 %1854
        %1856 = vrot.lane.b32.xlu0 %v1818, 8
        %v1857 = vpop.permute.xlu0 %1856
        %1858 = vrot.lane.b32.xlu0 %v1819, 8
        %v1859 = vpop.permute.xlu0 %1858
        %1860 = vrot.lane.b32.xlu0 %v1820, 8
        %v1861 = vpop.permute.xlu0 %1860
        %1862 = vrot.lane.b32.xlu0 %v1821, 8
        %v1863 = vpop.permute.xlu0 %1862
        %1864 = vrot.lane.b32.xlu0 %v1822, 8
        %v1865 = vpop.permute.xlu0 %1864
        %1866 = vrot.lane.b32.xlu0 %v1823, 8
        %v1867 = vpop.permute.xlu0 %1866
        %1868 = vrot.lane.b32.xlu0 %v1824, 8
        %v1869 = vpop.permute.xlu0 %1868
        %1870 = vrot.lane.b32.xlu0 %v1825, 8
        %v1871 = vpop.permute.xlu0 %1870
        %1872 = vrot.lane.b32.xlu0 %v1826, 8
        %v1873 = vpop.permute.xlu0 %1872
        %1874 = vrot.lane.b32.xlu0 %v1827, 8
        %v1875 = vpop.permute.xlu0 %1874
        %vm1892 = vcmask 130112
        %1893 = vst.msk [vmem:[#allocation5] sm:$0xff] %vm1892, %v1845
        %1894 = vst.msk [vmem:[#allocation5 + $0x8] sm:$0xff] %vm1892, %v1847
        %1895 = vst.msk [vmem:[#allocation5 + $0x10] sm:$0xff] %vm1892, %v1849
        %1896 = vst.msk [vmem:[#allocation5 + $0x18] sm:$0xff] %vm1892, %v1851
        %1897 = vst.msk [vmem:[#allocation5 + $0x20] sm:$0xff] %vm1892, %v1853
        %1898 = vst.msk [vmem:[#allocation5 + $0x28] sm:$0xff] %vm1892, %v1855
        %1899 = vst.msk [vmem:[#allocation5 + $0x30] sm:$0xff] %vm1892, %v1857
        %1900 = vst.msk [vmem:[#allocation5 + $0x38] sm:$0xff] %vm1892, %v1859
        %1901 = vst.msk [vmem:[#allocation5 + $0x40] sm:$0xff] %vm1892, %v1861
        %1902 = vst.msk [vmem:[#allocation5 + $0x48] sm:$0xff] %vm1892, %v1863
        %1903 = vst.msk [vmem:[#allocation5 + $0x50] sm:$0xff] %vm1892, %v1865
        %1904 = vst.msk [vmem:[#allocation5 + $0x58] sm:$0xff] %vm1892, %v1867
        %1905 = vst.msk [vmem:[#allocation5 + $0x60] sm:$0xff] %vm1892, %v1869
        %1906 = vst.msk [vmem:[#allocation5 + $0x68] sm:$0xff] %vm1892, %v1871
        %1907 = vst.msk [vmem:[#allocation5 + $0x70] sm:$0xff] %vm1892, %v1873
        %1908 = vst.msk [vmem:[#allocation5 + $0x78] sm:$0xff] %vm1892, %v1875
        %v1909 = vld [vmem:[#allocation4 + $0x2] sm:$0xff]
        %v1910 = vld [vmem:[#allocation4 + $0xa] sm:$0xff]
        %v1911 = vld [vmem:[#allocation4 + $0x1a] sm:$0xff]
        %v1912 = vld [vmem:[#allocation4 + $0x22] sm:$0xff]
        %v1913 = vld [vmem:[#allocation4 + $0x32] sm:$0xff]
        %v1914 = vld [vmem:[#allocation4 + $0x3a] sm:$0xff]
        %v1915 = vld [vmem:[#allocation4 + $0x4a] sm:$0xff]
        %v1916 = vld [vmem:[#allocation4 + $0x52] sm:$0xff]
        %v1917 = vld [vmem:[#allocation4 + $0x62] sm:$0xff]
        %v1918 = vld [vmem:[#allocation4 + $0x6a] sm:$0xff]
        %v1919 = vld [vmem:[#allocation4 + $0x7a] sm:$0xff]
        %v1920 = vld [vmem:[#allocation4 + $0x82] sm:$0xff]
        %v1921 = vld [vmem:[#allocation4 + $0x92] sm:$0xff]
        %v1922 = vld [vmem:[#allocation4 + $0x9a] sm:$0xff]
        %v1923 = vld [vmem:[#allocation4 + $0xaa] sm:$0xff]
        %v1924 = vld [vmem:[#allocation4 + $0xb2] sm:$0xff]
        %1941 = vrot.lane.b32.xlu0 %v1909, 16
        %v1942 = vpop.permute.xlu0 %1941
        %1943 = vrot.lane.b32.xlu0 %v1910, 16
        %v1944 = vpop.permute.xlu0 %1943
        %1945 = vrot.lane.b32.xlu0 %v1911, 16
        %v1946 = vpop.permute.xlu0 %1945
        %1947 = vrot.lane.b32.xlu0 %v1912, 16
        %v1948 = vpop.permute.xlu0 %1947
        %1949 = vrot.lane.b32.xlu0 %v1913, 16
        %v1950 = vpop.permute.xlu0 %1949
        %1951 = vrot.lane.b32.xlu0 %v1914, 16
        %v1952 = vpop.permute.xlu0 %1951
        %1953 = vrot.lane.b32.xlu0 %v1915, 16
        %v1954 = vpop.permute.xlu0 %1953
        %1955 = vrot.lane.b32.xlu0 %v1916, 16
        %v1956 = vpop.permute.xlu0 %1955
        %1957 = vrot.lane.b32.xlu0 %v1917, 16
        %v1958 = vpop.permute.xlu0 %1957
        %1959 = vrot.lane.b32.xlu0 %v1918, 16
        %v1960 = vpop.permute.xlu0 %1959
        %1961 = vrot.lane.b32.xlu0 %v1919, 16
        %v1962 = vpop.permute.xlu0 %1961
        %1963 = vrot.lane.b32.xlu0 %v1920, 16
        %v1964 = vpop.permute.xlu0 %1963
        %1965 = vrot.lane.b32.xlu0 %v1921, 16
        %v1966 = vpop.permute.xlu0 %1965
        %1967 = vrot.lane.b32.xlu0 %v1922, 16
        %v1968 = vpop.permute.xlu0 %1967
        %1969 = vrot.lane.b32.xlu0 %v1923, 16
        %v1970 = vpop.permute.xlu0 %1969
        %1971 = vrot.lane.b32.xlu0 %v1924, 16
        %v1972 = vpop.permute.xlu0 %1971
        %vm1989 = vcmask 195712
        %1990 = vst.msk [vmem:[#allocation5] sm:$0xff] %vm1989, %v1942
        %1991 = vst.msk [vmem:[#allocation5 + $0x8] sm:$0xff] %vm1989, %v1944
        %1992 = vst.msk [vmem:[#allocation5 + $0x10] sm:$0xff] %vm1989, %v1946
        %1993 = vst.msk [vmem:[#allocation5 + $0x18] sm:$0xff] %vm1989, %v1948
        %1994 = vst.msk [vmem:[#allocation5 + $0x20] sm:$0xff] %vm1989, %v1950
        %1995 = vst.msk [vmem:[#allocation5 + $0x28] sm:$0xff] %vm1989, %v1952
        %1996 = vst.msk [vmem:[#allocation5 + $0x30] sm:$0xff] %vm1989, %v1954
        %1997 = vst.msk [vmem:[#allocation5 + $0x38] sm:$0xff] %vm1989, %v1956
        %1998 = vst.msk [vmem:[#allocation5 + $0x40] sm:$0xff] %vm1989, %v1958
        %1999 = vst.msk [vmem:[#allocation5 + $0x48] sm:$0xff] %vm1989, %v1960
        %2000 = vst.msk [vmem:[#allocation5 + $0x50] sm:$0xff] %vm1989, %v1962
        %2001 = vst.msk [vmem:[#allocation5 + $0x58] sm:$0xff] %vm1989, %v1964
        %2002 = vst.msk [vmem:[#allocation5 + $0x60] sm:$0xff] %vm1989, %v1966
        %2003 = vst.msk [vmem:[#allocation5 + $0x68] sm:$0xff] %vm1989, %v1968
        %2004 = vst.msk [vmem:[#allocation5 + $0x70] sm:$0xff] %vm1989, %v1970
        %2005 = vst.msk [vmem:[#allocation5 + $0x78] sm:$0xff] %vm1989, %v1972
        %s2006 = scalar_lea.vmem [#allocation4], 24
        %v2007 = vld [vmem:[%s2006] sm:$0xff]
        %v2008 = vld [vmem:[%s2006 + $0x8] sm:$0xff]
        %v2009 = vld [vmem:[%s2006 + $0x18] sm:$0xff]
        %v2010 = vld [vmem:[%s2006 + $0x20] sm:$0xff]
        %v2011 = vld [vmem:[%s2006 + $0x30] sm:$0xff]
        %v2012 = vld [vmem:[%s2006 + $0x38] sm:$0xff]
        %v2013 = vld [vmem:[%s2006 + $0x48] sm:$0xff]
        %v2014 = vld [vmem:[%s2006 + $0x50] sm:$0xff]
        %v2015 = vld [vmem:[%s2006 + $0x60] sm:$0xff]
        %v2016 = vld [vmem:[%s2006 + $0x68] sm:$0xff]
        %v2017 = vld [vmem:[%s2006 + $0x78] sm:$0xff]
        %v2018 = vld [vmem:[%s2006 + $0x80] sm:$0xff]
        %v2019 = vld [vmem:[%s2006 + $0x90] sm:$0xff]
        %v2020 = vld [vmem:[%s2006 + $0x98] sm:$0xff]
        %v2021 = vld [vmem:[%s2006 + $0xa8] sm:$0xff]
        %v2022 = vld [vmem:[%s2006 + $0xb0] sm:$0xff]
        %2039 = vrot.lane.b32.xlu0 %v2007, 24
        %v2040 = vpop.permute.xlu0 %2039
        %2041 = vrot.lane.b32.xlu0 %v2008, 24
        %v2042 = vpop.permute.xlu0 %2041
        %2043 = vrot.lane.b32.xlu0 %v2009, 24
        %v2044 = vpop.permute.xlu0 %2043
        %2045 = vrot.lane.b32.xlu0 %v2010, 24
        %v2046 = vpop.permute.xlu0 %2045
        %2047 = vrot.lane.b32.xlu0 %v2011, 24
        %v2048 = vpop.permute.xlu0 %2047
        %2049 = vrot.lane.b32.xlu0 %v2012, 24
        %v2050 = vpop.permute.xlu0 %2049
        %2051 = vrot.lane.b32.xlu0 %v2013, 24
        %v2052 = vpop.permute.xlu0 %2051
        %2053 = vrot.lane.b32.xlu0 %v2014, 24
        %v2054 = vpop.permute.xlu0 %2053
        %2055 = vrot.lane.b32.xlu0 %v2015, 24
        %v2056 = vpop.permute.xlu0 %2055
        %2057 = vrot.lane.b32.xlu0 %v2016, 24
        %v2058 = vpop.permute.xlu0 %2057
        %2059 = vrot.lane.b32.xlu0 %v2017, 24
        %v2060 = vpop.permute.xlu0 %2059
        %2061 = vrot.lane.b32.xlu0 %v2018, 24
        %v2062 = vpop.permute.xlu0 %2061
        %2063 = vrot.lane.b32.xlu0 %v2019, 24
        %v2064 = vpop.permute.xlu0 %2063
        %2065 = vrot.lane.b32.xlu0 %v2020, 24
        %v2066 = vpop.permute.xlu0 %2065
        %2067 = vrot.lane.b32.xlu0 %v2021, 24
        %v2068 = vpop.permute.xlu0 %2067
        %2069 = vrot.lane.b32.xlu0 %v2022, 24
        %v2070 = vpop.permute.xlu0 %2069
        %vm2087 = vcmask 261312
        %2088 = vst.msk [vmem:[#allocation5] sm:$0xff] %vm2087, %v2040
        %2089 = vst.msk [vmem:[#allocation5 + $0x8] sm:$0xff] %vm2087, %v2042
        %2090 = vst.msk [vmem:[#allocation5 + $0x10] sm:$0xff] %vm2087, %v2044
        %2091 = vst.msk [vmem:[#allocation5 + $0x18] sm:$0xff] %vm2087, %v2046
        %2092 = vst.msk [vmem:[#allocation5 + $0x20] sm:$0xff] %vm2087, %v2048
        %2093 = vst.msk [vmem:[#allocation5 + $0x28] sm:$0xff] %vm2087, %v2050
        %2094 = vst.msk [vmem:[#allocation5 + $0x30] sm:$0xff] %vm2087, %v2052
        %2095 = vst.msk [vmem:[#allocation5 + $0x38] sm:$0xff] %vm2087, %v2054
        %2096 = vst.msk [vmem:[#allocation5 + $0x40] sm:$0xff] %vm2087, %v2056
        %2097 = vst.msk [vmem:[#allocation5 + $0x48] sm:$0xff] %vm2087, %v2058
        %2098 = vst.msk [vmem:[#allocation5 + $0x50] sm:$0xff] %vm2087, %v2060
        %2099 = vst.msk [vmem:[#allocation5 + $0x58] sm:$0xff] %vm2087, %v2062
        %2100 = vst.msk [vmem:[#allocation5 + $0x60] sm:$0xff] %vm2087, %v2064
        %2101 = vst.msk [vmem:[#allocation5 + $0x68] sm:$0xff] %vm2087, %v2066
        %2102 = vst.msk [vmem:[#allocation5 + $0x70] sm:$0xff] %vm2087, %v2068
        %2103 = vst.msk [vmem:[#allocation5 + $0x78] sm:$0xff] %vm2087, %v2070
        %v2104 = vld [vmem:[%s2006 + $0x1] sm:$0xff]
        %v2105 = vld [vmem:[%s2006 + $0x9] sm:$0xff]
        %v2106 = vld [vmem:[%s2006 + $0x19] sm:$0xff]
        %v2107 = vld [vmem:[%s2006 + $0x21] sm:$0xff]
        %v2108 = vld [vmem:[%s2006 + $0x31] sm:$0xff]
        %v2109 = vld [vmem:[%s2006 + $0x39] sm:$0xff]
        %v2110 = vld [vmem:[%s2006 + $0x49] sm:$0xff]
        %v2111 = vld [vmem:[%s2006 + $0x51] sm:$0xff]
        %v2112 = vld [vmem:[%s2006 + $0x61] sm:$0xff]
        %v2113 = vld [vmem:[%s2006 + $0x69] sm:$0xff]
        %v2114 = vld [vmem:[%s2006 + $0x79] sm:$0xff]
        %v2115 = vld [vmem:[%s2006 + $0x81] sm:$0xff]
        %v2116 = vld [vmem:[%s2006 + $0x91] sm:$0xff]
        %v2117 = vld [vmem:[%s2006 + $0x99] sm:$0xff]
        %v2118 = vld [vmem:[%s2006 + $0xa9] sm:$0xff]
        %v2119 = vld [vmem:[%s2006 + $0xb1] sm:$0xff]
        %2136 = vrot.lane.b32.xlu0 %v2104, 32
        %v2137 = vpop.permute.xlu0 %2136
        %2138 = vrot.lane.b32.xlu0 %v2105, 32
        %v2139 = vpop.permute.xlu0 %2138
        %2140 = vrot.lane.b32.xlu0 %v2106, 32
        %v2141 = vpop.permute.xlu0 %2140
        %2142 = vrot.lane.b32.xlu0 %v2107, 32
        %v2143 = vpop.permute.xlu0 %2142
        %2144 = vrot.lane.b32.xlu0 %v2108, 32
        %v2145 = vpop.permute.xlu0 %2144
        %2146 = vrot.lane.b32.xlu0 %v2109, 32
        %v2147 = vpop.permute.xlu0 %2146
        %2148 = vrot.lane.b32.xlu0 %v2110, 32
        %v2149 = vpop.permute.xlu0 %2148
        %2150 = vrot.lane.b32.xlu0 %v2111, 32
        %v2151 = vpop.permute.xlu0 %2150
        %2152 = vrot.lane.b32.xlu0 %v2112, 32
        %v2153 = vpop.permute.xlu0 %2152
        %2154 = vrot.lane.b32.xlu0 %v2113, 32
        %v2155 = vpop.permute.xlu0 %2154
        %2156 = vrot.lane.b32.xlu0 %v2114, 32
        %v2157 = vpop.permute.xlu0 %2156
        %2158 = vrot.lane.b32.xlu0 %v2115, 32
        %v2159 = vpop.permute.xlu0 %2158
        %2160 = vrot.lane.b32.xlu0 %v2116, 32
        %v2161 = vpop.permute.xlu0 %2160
        %2162 = vrot.lane.b32.xlu0 %v2117, 32
        %v2163 = vpop.permute.xlu0 %2162
        %2164 = vrot.lane.b32.xlu0 %v2118, 32
        %v2165 = vpop.permute.xlu0 %2164
        %2166 = vrot.lane.b32.xlu0 %v2119, 32
        %v2167 = vpop.permute.xlu0 %2166
        %vm2184 = vcmask 326912
        %2185 = vst.msk [vmem:[#allocation5] sm:$0xff] %vm2184, %v2137
        %2186 = vst.msk [vmem:[#allocation5 + $0x8] sm:$0xff] %vm2184, %v2139
        %2187 = vst.msk [vmem:[#allocation5 + $0x10] sm:$0xff] %vm2184, %v2141
        %2188 = vst.msk [vmem:[#allocation5 + $0x18] sm:$0xff] %vm2184, %v2143
        %2189 = vst.msk [vmem:[#allocation5 + $0x20] sm:$0xff] %vm2184, %v2145
        %2190 = vst.msk [vmem:[#allocation5 + $0x28] sm:$0xff] %vm2184, %v2147
        %2191 = vst.msk [vmem:[#allocation5 + $0x30] sm:$0xff] %vm2184, %v2149
        %2192 = vst.msk [vmem:[#allocation5 + $0x38] sm:$0xff] %vm2184, %v2151
        %2193 = vst.msk [vmem:[#allocation5 + $0x40] sm:$0xff] %vm2184, %v2153
        %2194 = vst.msk [vmem:[#allocation5 + $0x48] sm:$0xff] %vm2184, %v2155
        %2195 = vst.msk [vmem:[#allocation5 + $0x50] sm:$0xff] %vm2184, %v2157
        %2196 = vst.msk [vmem:[#allocation5 + $0x58] sm:$0xff] %vm2184, %v2159
        %2197 = vst.msk [vmem:[#allocation5 + $0x60] sm:$0xff] %vm2184, %v2161
        %2198 = vst.msk [vmem:[#allocation5 + $0x68] sm:$0xff] %vm2184, %v2163
        %2199 = vst.msk [vmem:[#allocation5 + $0x70] sm:$0xff] %vm2184, %v2165
        %2200 = vst.msk [vmem:[#allocation5 + $0x78] sm:$0xff] %vm2184, %v2167
        %v2201 = vld [vmem:[%s2006 + $0x2] sm:$0xff]
        %v2202 = vld [vmem:[%s2006 + $0xa] sm:$0xff]
        %v2203 = vld [vmem:[%s2006 + $0x1a] sm:$0xff]
        %v2204 = vld [vmem:[%s2006 + $0x22] sm:$0xff]
        %v2205 = vld [vmem:[%s2006 + $0x32] sm:$0xff]
        %v2206 = vld [vmem:[%s2006 + $0x3a] sm:$0xff]
        %v2207 = vld [vmem:[%s2006 + $0x4a] sm:$0xff]
        %v2208 = vld [vmem:[%s2006 + $0x52] sm:$0xff]
        %v2209 = vld [vmem:[%s2006 + $0x62] sm:$0xff]
        %v2210 = vld [vmem:[%s2006 + $0x6a] sm:$0xff]
        %v2211 = vld [vmem:[%s2006 + $0x7a] sm:$0xff]
        %v2212 = vld [vmem:[%s2006 + $0x82] sm:$0xff]
        %v2213 = vld [vmem:[%s2006 + $0x92] sm:$0xff]
        %v2214 = vld [vmem:[%s2006 + $0x9a] sm:$0xff]
        %v2215 = vld [vmem:[%s2006 + $0xaa] sm:$0xff]
        %v2216 = vld [vmem:[%s2006 + $0xb2] sm:$0xff]
        %2233 = vrot.lane.b32.xlu0 %v2201, 40
        %v2234 = vpop.permute.xlu0 %2233
        %2235 = vrot.lane.b32.xlu0 %v2202, 40
        %v2236 = vpop.permute.xlu0 %2235
        %2237 = vrot.lane.b32.xlu0 %v2203, 40
        %v2238 = vpop.permute.xlu0 %2237
        %2239 = vrot.lane.b32.xlu0 %v2204, 40
        %v2240 = vpop.permute.xlu0 %2239
        %2241 = vrot.lane.b32.xlu0 %v2205, 40
        %v2242 = vpop.permute.xlu0 %2241
        %2243 = vrot.lane.b32.xlu0 %v2206, 40
        %v2244 = vpop.permute.xlu0 %2243
        %2245 = vrot.lane.b32.xlu0 %v2207, 40
        %v2246 = vpop.permute.xlu0 %2245
        %2247 = vrot.lane.b32.xlu0 %v2208, 40
        %v2248 = vpop.permute.xlu0 %2247
        %2249 = vrot.lane.b32.xlu0 %v2209, 40
        %v2250 = vpop.permute.xlu0 %2249
        %2251 = vrot.lane.b32.xlu0 %v2210, 40
        %v2252 = vpop.permute.xlu0 %2251
        %2253 = vrot.lane.b32.xlu0 %v2211, 40
        %v2254 = vpop.permute.xlu0 %2253
        %2255 = vrot.lane.b32.xlu0 %v2212, 40
        %v2256 = vpop.permute.xlu0 %2255
        %2257 = vrot.lane.b32.xlu0 %v2213, 40
        %v2258 = vpop.permute.xlu0 %2257
        %2259 = vrot.lane.b32.xlu0 %v2214, 40
        %v2260 = vpop.permute.xlu0 %2259
        %2261 = vrot.lane.b32.xlu0 %v2215, 40
        %v2262 = vpop.permute.xlu0 %2261
        %2263 = vrot.lane.b32.xlu0 %v2216, 40
        %v2264 = vpop.permute.xlu0 %2263
        %vm2281 = vcmask 392512
        %2282 = vst.msk [vmem:[#allocation5] sm:$0xff] %vm2281, %v2234
        %2283 = vst.msk [vmem:[#allocation5 + $0x8] sm:$0xff] %vm2281, %v2236
        %2284 = vst.msk [vmem:[#allocation5 + $0x10] sm:$0xff] %vm2281, %v2238
        %2285 = vst.msk [vmem:[#allocation5 + $0x18] sm:$0xff] %vm2281, %v2240
        %2286 = vst.msk [vmem:[#allocation5 + $0x20] sm:$0xff] %vm2281, %v2242
        %2287 = vst.msk [vmem:[#allocation5 + $0x28] sm:$0xff] %vm2281, %v2244
        %2288 = vst.msk [vmem:[#allocation5 + $0x30] sm:$0xff] %vm2281, %v2246
        %2289 = vst.msk [vmem:[#allocation5 + $0x38] sm:$0xff] %vm2281, %v2248
        %2290 = vst.msk [vmem:[#allocation5 + $0x40] sm:$0xff] %vm2281, %v2250
        %2291 = vst.msk [vmem:[#allocation5 + $0x48] sm:$0xff] %vm2281, %v2252
        %2292 = vst.msk [vmem:[#allocation5 + $0x50] sm:$0xff] %vm2281, %v2254
        %2293 = vst.msk [vmem:[#allocation5 + $0x58] sm:$0xff] %vm2281, %v2256
        %2294 = vst.msk [vmem:[#allocation5 + $0x60] sm:$0xff] %vm2281, %v2258
        %2295 = vst.msk [vmem:[#allocation5 + $0x68] sm:$0xff] %vm2281, %v2260
        %2296 = vst.msk [vmem:[#allocation5 + $0x70] sm:$0xff] %vm2281, %v2262
        %2297 = vst.msk [vmem:[#allocation5 + $0x78] sm:$0xff] %vm2281, %v2264
        %s2298 = scalar_lea.vmem [#allocation4], 48
        %v2299 = vld [vmem:[%s2298] sm:$0xff]
        %v2300 = vld [vmem:[%s2298 + $0x8] sm:$0xff]
        %v2301 = vld [vmem:[%s2298 + $0x18] sm:$0xff]
        %v2302 = vld [vmem:[%s2298 + $0x20] sm:$0xff]
        %v2303 = vld [vmem:[%s2298 + $0x30] sm:$0xff]
        %v2304 = vld [vmem:[%s2298 + $0x38] sm:$0xff]
        %v2305 = vld [vmem:[%s2298 + $0x48] sm:$0xff]
        %v2306 = vld [vmem:[%s2298 + $0x50] sm:$0xff]
        %v2307 = vld [vmem:[%s2298 + $0x60] sm:$0xff]
        %v2308 = vld [vmem:[%s2298 + $0x68] sm:$0xff]
        %v2309 = vld [vmem:[%s2298 + $0x78] sm:$0xff]
        %v2310 = vld [vmem:[%s2298 + $0x80] sm:$0xff]
        %v2311 = vld [vmem:[%s2298 + $0x90] sm:$0xff]
        %v2312 = vld [vmem:[%s2298 + $0x98] sm:$0xff]
        %v2313 = vld [vmem:[%s2298 + $0xa8] sm:$0xff]
        %v2314 = vld [vmem:[%s2298 + $0xb0] sm:$0xff]
        %2331 = vrot.lane.b32.xlu0 %v2299, 48
        %v2332 = vpop.permute.xlu0 %2331
        %2333 = vrot.lane.b32.xlu0 %v2300, 48
        %v2334 = vpop.permute.xlu0 %2333
        %2335 = vrot.lane.b32.xlu0 %v2301, 48
        %v2336 = vpop.permute.xlu0 %2335
        %2337 = vrot.lane.b32.xlu0 %v2302, 48
        %v2338 = vpop.permute.xlu0 %2337
        %2339 = vrot.lane.b32.xlu0 %v2303, 48
        %v2340 = vpop.permute.xlu0 %2339
        %2341 = vrot.lane.b32.xlu0 %v2304, 48
        %v2342 = vpop.permute.xlu0 %2341
        %2343 = vrot.lane.b32.xlu0 %v2305, 48
        %v2344 = vpop.permute.xlu0 %2343
        %2345 = vrot.lane.b32.xlu0 %v2306, 48
        %v2346 = vpop.permute.xlu0 %2345
        %2347 = vrot.lane.b32.xlu0 %v2307, 48
        %v2348 = vpop.permute.xlu0 %2347
        %2349 = vrot.lane.b32.xlu0 %v2308, 48
        %v2350 = vpop.permute.xlu0 %2349
        %2351 = vrot.lane.b32.xlu0 %v2309, 48
        %v2352 = vpop.permute.xlu0 %2351
        %2353 = vrot.lane.b32.xlu0 %v2310, 48
        %v2354 = vpop.permute.xlu0 %2353
        %2355 = vrot.lane.b32.xlu0 %v2311, 48
        %v2356 = vpop.permute.xlu0 %2355
        %2357 = vrot.lane.b32.xlu0 %v2312, 48
        %v2358 = vpop.permute.xlu0 %2357
        %2359 = vrot.lane.b32.xlu0 %v2313, 48
        %v2360 = vpop.permute.xlu0 %2359
        %2361 = vrot.lane.b32.xlu0 %v2314, 48
        %v2362 = vpop.permute.xlu0 %2361
        %vm2379 = vcmask 458112
        %2380 = vst.msk [vmem:[#allocation5] sm:$0xff] %vm2379, %v2332
        %2381 = vst.msk [vmem:[#allocation5 + $0x8] sm:$0xff] %vm2379, %v2334
        %2382 = vst.msk [vmem:[#allocation5 + $0x10] sm:$0xff] %vm2379, %v2336
        %2383 = vst.msk [vmem:[#allocation5 + $0x18] sm:$0xff] %vm2379, %v2338
        %2384 = vst.msk [vmem:[#allocation5 + $0x20] sm:$0xff] %vm2379, %v2340
        %2385 = vst.msk [vmem:[#allocation5 + $0x28] sm:$0xff] %vm2379, %v2342
        %2386 = vst.msk [vmem:[#allocation5 + $0x30] sm:$0xff] %vm2379, %v2344
        %2387 = vst.msk [vmem:[#allocation5 + $0x38] sm:$0xff] %vm2379, %v2346
        %2388 = vst.msk [vmem:[#allocation5 + $0x40] sm:$0xff] %vm2379, %v2348
        %2389 = vst.msk [vmem:[#allocation5 + $0x48] sm:$0xff] %vm2379, %v2350
        %2390 = vst.msk [vmem:[#allocation5 + $0x50] sm:$0xff] %vm2379, %v2352
        %2391 = vst.msk [vmem:[#allocation5 + $0x58] sm:$0xff] %vm2379, %v2354
        %2392 = vst.msk [vmem:[#allocation5 + $0x60] sm:$0xff] %vm2379, %v2356
        %2393 = vst.msk [vmem:[#allocation5 + $0x68] sm:$0xff] %vm2379, %v2358
        %2394 = vst.msk [vmem:[#allocation5 + $0x70] sm:$0xff] %vm2379, %v2360
        %2395 = vst.msk [vmem:[#allocation5 + $0x78] sm:$0xff] %vm2379, %v2362
        %v2396 = vld [vmem:[%s2298 + $0x1] sm:$0xff]
        %v2397 = vld [vmem:[%s2298 + $0x9] sm:$0xff]
        %v2398 = vld [vmem:[%s2298 + $0x19] sm:$0xff]
        %v2399 = vld [vmem:[%s2298 + $0x21] sm:$0xff]
        %v2400 = vld [vmem:[%s2298 + $0x31] sm:$0xff]
        %v2401 = vld [vmem:[%s2298 + $0x39] sm:$0xff]
        %v2402 = vld [vmem:[%s2298 + $0x49] sm:$0xff]
        %v2403 = vld [vmem:[%s2298 + $0x51] sm:$0xff]
        %v2404 = vld [vmem:[%s2298 + $0x61] sm:$0xff]
        %v2405 = vld [vmem:[%s2298 + $0x69] sm:$0xff]
        %v2406 = vld [vmem:[%s2298 + $0x79] sm:$0xff]
        %v2407 = vld [vmem:[%s2298 + $0x81] sm:$0xff]
        %v2408 = vld [vmem:[%s2298 + $0x91] sm:$0xff]
        %v2409 = vld [vmem:[%s2298 + $0x99] sm:$0xff]
        %v2410 = vld [vmem:[%s2298 + $0xa9] sm:$0xff]
        %v2411 = vld [vmem:[%s2298 + $0xb1] sm:$0xff]
        %2428 = vrot.lane.b32.xlu0 %v2396, 56
        %v2429 = vpop.permute.xlu0 %2428
        %2430 = vrot.lane.b32.xlu0 %v2397, 56
        %v2431 = vpop.permute.xlu0 %2430
        %2432 = vrot.lane.b32.xlu0 %v2398, 56
        %v2433 = vpop.permute.xlu0 %2432
        %2434 = vrot.lane.b32.xlu0 %v2399, 56
        %v2435 = vpop.permute.xlu0 %2434
        %2436 = vrot.lane.b32.xlu0 %v2400, 56
        %v2437 = vpop.permute.xlu0 %2436
        %2438 = vrot.lane.b32.xlu0 %v2401, 56
        %v2439 = vpop.permute.xlu0 %2438
        %2440 = vrot.lane.b32.xlu0 %v2402, 56
        %v2441 = vpop.permute.xlu0 %2440
        %2442 = vrot.lane.b32.xlu0 %v2403, 56
        %v2443 = vpop.permute.xlu0 %2442
        %2444 = vrot.lane.b32.xlu0 %v2404, 56
        %v2445 = vpop.permute.xlu0 %2444
        %2446 = vrot.lane.b32.xlu0 %v2405, 56
        %v2447 = vpop.permute.xlu0 %2446
        %2448 = vrot.lane.b32.xlu0 %v2406, 56
        %v2449 = vpop.permute.xlu0 %2448
        %2450 = vrot.lane.b32.xlu0 %v2407, 56
        %v2451 = vpop.permute.xlu0 %2450
        %2452 = vrot.lane.b32.xlu0 %v2408, 56
        %v2453 = vpop.permute.xlu0 %2452
        %2454 = vrot.lane.b32.xlu0 %v2409, 56
        %v2455 = vpop.permute.xlu0 %2454
        %2456 = vrot.lane.b32.xlu0 %v2410, 56
        %v2457 = vpop.permute.xlu0 %2456
        %2458 = vrot.lane.b32.xlu0 %v2411, 56
        %v2459 = vpop.permute.xlu0 %2458
        %vm2476 = vcmask 523712
        %2477 = vst.msk [vmem:[#allocation5] sm:$0xff] %vm2476, %v2429
        %2478 = vst.msk [vmem:[#allocation5 + $0x8] sm:$0xff] %vm2476, %v2431
        %2479 = vst.msk [vmem:[#allocation5 + $0x10] sm:$0xff] %vm2476, %v2433
        %2480 = vst.msk [vmem:[#allocation5 + $0x18] sm:$0xff] %vm2476, %v2435
        %2481 = vst.msk [vmem:[#allocation5 + $0x20] sm:$0xff] %vm2476, %v2437
        %2482 = vst.msk [vmem:[#allocation5 + $0x28] sm:$0xff] %vm2476, %v2439
        %2483 = vst.msk [vmem:[#allocation5 + $0x30] sm:$0xff] %vm2476, %v2441
        %2484 = vst.msk [vmem:[#allocation5 + $0x38] sm:$0xff] %vm2476, %v2443
        %2485 = vst.msk [vmem:[#allocation5 + $0x40] sm:$0xff] %vm2476, %v2445
        %2486 = vst.msk [vmem:[#allocation5 + $0x48] sm:$0xff] %vm2476, %v2447
        %2487 = vst.msk [vmem:[#allocation5 + $0x50] sm:$0xff] %vm2476, %v2449
        %2488 = vst.msk [vmem:[#allocation5 + $0x58] sm:$0xff] %vm2476, %v2451
        %2489 = vst.msk [vmem:[#allocation5 + $0x60] sm:$0xff] %vm2476, %v2453
        %2490 = vst.msk [vmem:[#allocation5 + $0x68] sm:$0xff] %vm2476, %v2455
        %2491 = vst.msk [vmem:[#allocation5 + $0x70] sm:$0xff] %vm2476, %v2457
        %2492 = vst.msk [vmem:[#allocation5 + $0x78] sm:$0xff] %vm2476, %v2459
        %v2493 = vld [vmem:[%s2298 + $0x2] sm:$0xff]
        %v2494 = vld [vmem:[%s2298 + $0xa] sm:$0xff]
        %v2495 = vld [vmem:[%s2298 + $0x1a] sm:$0xff]
        %v2496 = vld [vmem:[%s2298 + $0x22] sm:$0xff]
        %v2497 = vld [vmem:[%s2298 + $0x32] sm:$0xff]
        %v2498 = vld [vmem:[%s2298 + $0x3a] sm:$0xff]
        %v2499 = vld [vmem:[%s2298 + $0x4a] sm:$0xff]
        %v2500 = vld [vmem:[%s2298 + $0x52] sm:$0xff]
        %v2501 = vld [vmem:[%s2298 + $0x62] sm:$0xff]
        %v2502 = vld [vmem:[%s2298 + $0x6a] sm:$0xff]
        %v2503 = vld [vmem:[%s2298 + $0x7a] sm:$0xff]
        %v2504 = vld [vmem:[%s2298 + $0x82] sm:$0xff]
        %v2505 = vld [vmem:[%s2298 + $0x92] sm:$0xff]
        %v2506 = vld [vmem:[%s2298 + $0x9a] sm:$0xff]
        %v2507 = vld [vmem:[%s2298 + $0xaa] sm:$0xff]
        %v2508 = vld [vmem:[%s2298 + $0xb2] sm:$0xff]
        %2525 = vrot.lane.b32.xlu0 %v2493, 64
        %v2526 = vpop.permute.xlu0 %2525
        %2527 = vrot.lane.b32.xlu0 %v2494, 64
        %v2528 = vpop.permute.xlu0 %2527
        %2529 = vrot.lane.b32.xlu0 %v2495, 64
        %v2530 = vpop.permute.xlu0 %2529
        %2531 = vrot.lane.b32.xlu0 %v2496, 64
        %v2532 = vpop.permute.xlu0 %2531
        %2533 = vrot.lane.b32.xlu0 %v2497, 64
        %v2534 = vpop.permute.xlu0 %2533
        %2535 = vrot.lane.b32.xlu0 %v2498, 64
        %v2536 = vpop.permute.xlu0 %2535
        %2537 = vrot.lane.b32.xlu0 %v2499, 64
        %v2538 = vpop.permute.xlu0 %2537
        %2539 = vrot.lane.b32.xlu0 %v2500, 64
        %v2540 = vpop.permute.xlu0 %2539
        %2541 = vrot.lane.b32.xlu0 %v2501, 64
        %v2542 = vpop.permute.xlu0 %2541
        %2543 = vrot.lane.b32.xlu0 %v2502, 64
        %v2544 = vpop.permute.xlu0 %2543
        %2545 = vrot.lane.b32.xlu0 %v2503, 64
        %v2546 = vpop.permute.xlu0 %2545
        %2547 = vrot.lane.b32.xlu0 %v2504, 64
        %v2548 = vpop.permute.xlu0 %2547
        %2549 = vrot.lane.b32.xlu0 %v2505, 64
        %v2550 = vpop.permute.xlu0 %2549
        %2551 = vrot.lane.b32.xlu0 %v2506, 64
        %v2552 = vpop.permute.xlu0 %2551
        %2553 = vrot.lane.b32.xlu0 %v2507, 64
        %v2554 = vpop.permute.xlu0 %2553
        %2555 = vrot.lane.b32.xlu0 %v2508, 64
        %v2556 = vpop.permute.xlu0 %2555
        %vm2573 = vcmask 589312
        %2574 = vst.msk [vmem:[#allocation5] sm:$0xff] %vm2573, %v2526
        %2575 = vst.msk [vmem:[#allocation5 + $0x8] sm:$0xff] %vm2573, %v2528
        %2576 = vst.msk [vmem:[#allocation5 + $0x10] sm:$0xff] %vm2573, %v2530
        %2577 = vst.msk [vmem:[#allocation5 + $0x18] sm:$0xff] %vm2573, %v2532
        %2578 = vst.msk [vmem:[#allocation5 + $0x20] sm:$0xff] %vm2573, %v2534
        %2579 = vst.msk [vmem:[#allocation5 + $0x28] sm:$0xff] %vm2573, %v2536
        %2580 = vst.msk [vmem:[#allocation5 + $0x30] sm:$0xff] %vm2573, %v2538
        %2581 = vst.msk [vmem:[#allocation5 + $0x38] sm:$0xff] %vm2573, %v2540
        %2582 = vst.msk [vmem:[#allocation5 + $0x40] sm:$0xff] %vm2573, %v2542
        %2583 = vst.msk [vmem:[#allocation5 + $0x48] sm:$0xff] %vm2573, %v2544
        %2584 = vst.msk [vmem:[#allocation5 + $0x50] sm:$0xff] %vm2573, %v2546
        %2585 = vst.msk [vmem:[#allocation5 + $0x58] sm:$0xff] %vm2573, %v2548
        %2586 = vst.msk [vmem:[#allocation5 + $0x60] sm:$0xff] %vm2573, %v2550
        %2587 = vst.msk [vmem:[#allocation5 + $0x68] sm:$0xff] %vm2573, %v2552
        %2588 = vst.msk [vmem:[#allocation5 + $0x70] sm:$0xff] %vm2573, %v2554
        %2589 = vst.msk [vmem:[#allocation5 + $0x78] sm:$0xff] %vm2573, %v2556
        %v2590 = vld [vmem:[#allocation5] sm:$0xff]
        %v2591 = vld [vmem:[#allocation5 + $0x8] sm:$0xff]
        %v2592 = vld [vmem:[#allocation5 + $0x10] sm:$0xff]
        %v2593 = vld [vmem:[#allocation5 + $0x18] sm:$0xff]
        %v2594 = vld [vmem:[#allocation5 + $0x20] sm:$0xff]
        %v2595 = vld [vmem:[#allocation5 + $0x28] sm:$0xff]
        %v2596 = vld [vmem:[#allocation5 + $0x30] sm:$0xff]
        %v2597 = vld [vmem:[#allocation5 + $0x38] sm:$0xff]
        %v2598 = vld [vmem:[#allocation5 + $0x40] sm:$0xff]
        %v2599 = vld [vmem:[#allocation5 + $0x48] sm:$0xff]
        %v2600 = vld [vmem:[#allocation5 + $0x50] sm:$0xff]
        %v2601 = vld [vmem:[#allocation5 + $0x58] sm:$0xff]
        %v2602 = vld [vmem:[#allocation5 + $0x60] sm:$0xff]
        %v2603 = vld [vmem:[#allocation5 + $0x68] sm:$0xff]
        %v2604 = vld [vmem:[#allocation5 + $0x70] sm:$0xff]
        %v2605 = vld [vmem:[#allocation5 + $0x78] sm:$0xff]
        %v2606 = vpack.c.bf16 %v2591, %v2590
        %v2607 = vpack.c.bf16 %v2593, %v2592
        %v2608 = vpack.c.bf16 %v2595, %v2594
        %v2609 = vpack.c.bf16 %v2597, %v2596
        %v2610 = vpack.c.bf16 %v2599, %v2598
        %v2611 = vpack.c.bf16 %v2601, %v2600
        %v2612 = vpack.c.bf16 %v2603, %v2602
        %v2613 = vpack.c.bf16 %v2605, %v2604
        %v2614 = vld [vmem:[%s2] sm:$0xf]
        %v2615 = vld [vmem:[%s2 + $0x4] sm:$0xf]
        %v2616 = vld [vmem:[%s2 + $0x8] sm:$0xf]
        %v2617 = vld [vmem:[%s2 + $0xc] sm:$0xf]
        %v2618 = vld [vmem:[%s2 + $0x10] sm:$0xf]
        %v2619 = vld [vmem:[%s2 + $0x14] sm:$0xf]
        %v2620 = vld [vmem:[%s2 + $0x18] sm:$0xf]
        %v2621 = vld [vmem:[%s2 + $0x1c] sm:$0xf]
        %v2622 = vld [vmem:[%s2 + $0x20] sm:$0xf]
        %v2632 = vunpack.c.l.b16 %v2614
        %v2633 = vunpack.c.l.b16 %v2615
        %v2634 = vunpack.c.l.b16 %v2616
        %v2635 = vunpack.c.l.b16 %v2617
        %v2636 = vunpack.c.l.b16 %v2618
        %v2637 = vunpack.c.l.b16 %v2619
        %v2638 = vunpack.c.l.b16 %v2620
        %v2639 = vunpack.c.l.b16 %v2621
        %v2640 = vunpack.c.l.b16 %v2622
        %v2641 = vpack.c.b16 %v2633, %v2632
        %v2642 = vpack.c.b16 %v2635, %v2634
        %v2643 = vpack.c.b16 %v2637, %v2636
        %v2644 = vpack.c.b16 %v2639, %v2638
        %v2645 = vpack.c.b16 %v2640, %v2640
        %vm2650 = vcmask 588800
        %v2652 = vsel %vm2650, %v2606, 0
        %v2655 = vsel %vm2650, %v2607, 0
        %v2658 = vsel %vm2650, %v2608, 0
        %v2661 = vsel %vm2650, %v2609, 0
        %v2664 = vsel %vm2650, %v2610, 0
        %v2667 = vsel %vm2650, %v2611, 0
        %v2670 = vsel %vm2650, %v2612, 0
        %v2673 = vsel %vm2650, %v2613, 0
        %vm2675 = vcmask 1043456
        %v2677 = vsel %vm2675, %v2645, 0
        %2679 = vmatprep.subr.bf16.mxu0 0
        %2680 = vmatpush1.bf16.msra.mxu0 %v2641
        %2681 = vmatprep.subr.bf16.mxu0 0
        %2682 = vmatpush1.bf16.msra.mxu0 %v2642
        %2683 = vmatprep.subr.bf16.mxu0 0
        %2684 = vmatpush1.bf16.msra.mxu0 %v2643
        %2685 = vmatprep.subr.bf16.mxu0 0
        %2686 = vmatpush1.bf16.msra.mxu0 %v2644
        %2687 = vmatprep.subr.bf16.mxu0 0
        %2688 = vmatpush1.bf16.msra.mxu0 %v2677
        %2689 = vmatprep.subr.bf16.mxu0 0
        %2690 = vmatpush1.bf16.msra.mxu0 0
        %2691 = vmatprep.subr.bf16.mxu0 0
        %2692 = vmatpush1.bf16.msra.mxu0 0
        %2693 = vmatprep.subr.bf16.mxu0 0
        %2694 = vmatpush1.bf16.msra.mxu0 0
        %2695 = vmatprep.subr.bf16.mxu0 0
        %2696 = vmatpush1.bf16.msra.mxu0 0
        %2697 = vmatprep.subr.bf16.mxu0 0
        %2698 = vmatpush1.bf16.msra.mxu0 0
        %2699 = vmatprep.subr.bf16.mxu0 0
        %2700 = vmatpush1.bf16.msra.mxu0 0
        %2701 = vmatprep.subr.bf16.mxu0 0
        %2702 = vmatpush1.bf16.msra.mxu0 0
        %2703 = vmatprep.subr.bf16.mxu0 0
        %2704 = vmatpush1.bf16.msra.mxu0 0
        %2705 = vmatprep.subr.bf16.mxu0 0
        %2706 = vmatpush1.bf16.msra.mxu0 0
        %2707 = vmatprep.subr.bf16.mxu0 0
        %2708 = vmatpush1.bf16.msra.mxu0 0
        %2709 = vmatprep.subr.bf16.mxu0 0
        %2710 = vmatpush1.bf16.msra.mxu0 0
        %2711 = vmatprep.mubr.bf16.mxu0 0
        %2712 = vmatmul.mubr.bf16.gmra.mrb[0].mxu0 %v2652
        %v2713 = vpop.f32.mrb[0].mxu0
        %v2714 = vadd.f32 0.0, %v2713
        %v2715 = vpop.f32.mrb[0].mxu0
        %v2716 = vpop.f32.mrb[0].mxu0
        %v2717 = vadd.f32 0.0, %v2716
        %v2718 = vpop.f32.mrb[0].mxu0
        %2719 = vmatprep.mubr.bf16.mxu0 0
        %2720 = vmatmul.mubr.bf16.gmra.mrb[0].mxu0 %v2655
        %v2721 = vpop.f32.mrb[0].mxu0
        %v2722 = vadd.f32 0.0, %v2721
        %v2723 = vpop.f32.mrb[0].mxu0
        %v2724 = vpop.f32.mrb[0].mxu0
        %v2725 = vadd.f32 0.0, %v2724
        %v2726 = vpop.f32.mrb[0].mxu0
        %2727 = vmatprep.mubr.bf16.mxu0 0
        %2728 = vmatmul.mubr.bf16.gmra.mrb[0].mxu0 %v2658
        %v2729 = vpop.f32.mrb[0].mxu0
        %v2730 = vadd.f32 0.0, %v2729
        %v2731 = vpop.f32.mrb[0].mxu0
        %v2732 = vpop.f32.mrb[0].mxu0
        %v2733 = vadd.f32 0.0, %v2732
        %v2734 = vpop.f32.mrb[0].mxu0
        %2735 = vmatprep.mubr.bf16.mxu0 0
        %2736 = vmatmul.mubr.bf16.gmra.mrb[0].mxu0 %v2661
        %v2737 = vpop.f32.mrb[0].mxu0
        %v2738 = vadd.f32 0.0, %v2737
        %v2739 = vpop.f32.mrb[0].mxu0
        %v2740 = vpop.f32.mrb[0].mxu0
        %v2741 = vadd.f32 0.0, %v2740
        %v2742 = vpop.f32.mrb[0].mxu0
        %2743 = vmatprep.mubr.bf16.mxu0 0
        %2744 = vmatmul.mubr.bf16.gmra.mrb[0].mxu0 %v2664
        %v2745 = vpop.f32.mrb[0].mxu0
        %v2746 = vadd.f32 0.0, %v2745
        %v2747 = vpop.f32.mrb[0].mxu0
        %v2748 = vpop.f32.mrb[0].mxu0
        %v2749 = vadd.f32 0.0, %v2748
        %v2750 = vpop.f32.mrb[0].mxu0
        %2751 = vmatprep.mubr.bf16.mxu0 0
        %2752 = vmatmul.mubr.bf16.gmra.mrb[0].mxu0 %v2667
        %v2753 = vpop.f32.mrb[0].mxu0
        %v2754 = vadd.f32 0.0, %v2753
        %v2755 = vpop.f32.mrb[0].mxu0
        %v2756 = vpop.f32.mrb[0].mxu0
        %v2757 = vadd.f32 0.0, %v2756
        %v2758 = vpop.f32.mrb[0].mxu0
        %2759 = vmatprep.mubr.bf16.mxu0 0
        %2760 = vmatmul.mubr.bf16.gmra.mrb[0].mxu0 %v2670
        %v2761 = vpop.f32.mrb[0].mxu0
        %v2762 = vadd.f32 0.0, %v2761
        %v2763 = vpop.f32.mrb[0].mxu0
        %v2764 = vpop.f32.mrb[0].mxu0
        %v2765 = vadd.f32 0.0, %v2764
        %v2766 = vpop.f32.mrb[0].mxu0
        %2767 = vmatprep.mubr.bf16.mxu0 0
        %2768 = vmatmul.mubr.bf16.gmra.mrb[0].mxu0 %v2673
        %v2769 = vpop.f32.mrb[0].mxu0
        %v2770 = vadd.f32 0.0, %v2769
        %v2771 = vpop.f32.mrb[0].mxu0
        %v2772 = vpop.f32.mrb[0].mxu0
        %v2773 = vadd.f32 0.0, %v2772
        %v2774 = vpop.f32.mrb[0].mxu0
        %2775 = vdwg.mxu0
        %v2776 = vlaneseq
        %v2777 = vshrl.u32 %v2776, 7
        %v2778 = vsub.s32 0, %v2777
        %v2779 = vrot.slane %v372, %v2778
        %v2780 = vmul.f32 %v2714, %v2779
        %v2781 = vmul.f32 %v2717, %v2779
        %v2782 = vmul.f32 %v2722, %v2779
        %v2783 = vmul.f32 %v2725, %v2779
        %v2784 = vmul.f32 %v2730, %v2779
        %v2785 = vmul.f32 %v2733, %v2779
        %v2786 = vmul.f32 %v2738, %v2779
        %v2787 = vmul.f32 %v2741, %v2779
        %v2788 = vmul.f32 %v2746, %v2779
        %v2789 = vmul.f32 %v2749, %v2779
        %v2790 = vmul.f32 %v2754, %v2779
        %v2791 = vmul.f32 %v2757, %v2779
        %v2792 = vmul.f32 %v2762, %v2779
        %v2793 = vmul.f32 %v2765, %v2779
        %v2794 = vmul.f32 %v2770, %v2779
        %v2795 = vmul.f32 %v2773, %v2779
        %v2796 = vlaneseq
        %v2797 = vshrl.u32 %v2796, 7
        %v2798 = vsub.s32 0, %v2797
        %v2799 = vrot.slane %v373, %v2798
        %v2800 = vadd.f32 %v2780, %v2799
        %v2801 = vadd.f32 %v2781, %v2799
        %v2802 = vadd.f32 %v2782, %v2799
        %v2803 = vadd.f32 %v2783, %v2799
        %v2804 = vadd.f32 %v2784, %v2799
        %v2805 = vadd.f32 %v2785, %v2799
        %v2806 = vadd.f32 %v2786, %v2799
        %v2807 = vadd.f32 %v2787, %v2799
        %v2808 = vadd.f32 %v2788, %v2799
        %v2809 = vadd.f32 %v2789, %v2799
        %v2810 = vadd.f32 %v2790, %v2799
        %v2811 = vadd.f32 %v2791, %v2799
        %v2812 = vadd.f32 %v2792, %v2799
        %v2813 = vadd.f32 %v2793, %v2799
        %v2814 = vadd.f32 %v2794, %v2799
        %v2815 = vadd.f32 %v2795, %v2799
        %v2816 = vld [vmem:[%s1027 + $0x1] sm:$0xff]
        %v2817 = vld [vmem:[%s1027 + $0x9] sm:$0xff]
        %v2818 = vld [vmem:[%s1027 + $0x19] sm:$0xff]
        %v2819 = vld [vmem:[%s1027 + $0x21] sm:$0xff]
        %v2820 = vld [vmem:[%s1027 + $0x31] sm:$0xff]
        %v2821 = vld [vmem:[%s1027 + $0x39] sm:$0xff]
        %v2822 = vld [vmem:[%s1027 + $0x49] sm:$0xff]
        %v2823 = vld [vmem:[%s1027 + $0x51] sm:$0xff]
        %v2824 = vld [vmem:[%s1027 + $0x61] sm:$0xff]
        %v2825 = vld [vmem:[%s1027 + $0x69] sm:$0xff]
        %v2826 = vld [vmem:[%s1027 + $0x79] sm:$0xff]
        %v2827 = vld [vmem:[%s1027 + $0x81] sm:$0xff]
        %v2828 = vld [vmem:[%s1027 + $0x91] sm:$0xff]
        %v2829 = vld [vmem:[%s1027 + $0x99] sm:$0xff]
        %v2830 = vld [vmem:[%s1027 + $0xa9] sm:$0xff]
        %v2831 = vld [vmem:[%s1027 + $0xb1] sm:$0xff]
        %v2832 = vld [vmem:[%s4 + $0x4] sm:$0x1]
        %v2833 = vld [vmem:[%s4 + $0x5] sm:$0x1]
        %v2834 = vpack.c.bf16 %v2817, %v2816
        %v2835 = vpack.c.bf16 %v2819, %v2818
        %v2836 = vpack.c.bf16 %v2821, %v2820
        %v2837 = vpack.c.bf16 %v2823, %v2822
        %v2838 = vpack.c.bf16 %v2825, %v2824
        %v2839 = vpack.c.bf16 %v2827, %v2826
        %v2840 = vpack.c.bf16 %v2829, %v2828
        %v2841 = vpack.c.bf16 %v2831, %v2830
        %v2842 = vld [vmem:[%s3] sm:$0x3]
        %v2844 = vsel %vm398, %v2834, 0
        %v2847 = vsel %vm398, %v2835, 0
        %v2850 = vsel %vm398, %v2836, 0
        %v2853 = vsel %vm398, %v2837, 0
        %v2856 = vsel %vm398, %v2838, 0
        %v2859 = vsel %vm398, %v2839, 0
        %v2862 = vsel %vm398, %v2840, 0
        %v2865 = vsel %vm398, %v2841, 0
        %v2868 = vsel %vm1472, %v2842, 0
        %2870 = vmatprep.subr.bf16.mxu0 0
        %2871 = vmatpush1.bf16.msra.mxu0 %v2868
        %2872 = vmatprep.subr.bf16.mxu0 0
        %2873 = vmatpush1.bf16.msra.mxu0 0
        %2874 = vmatprep.subr.bf16.mxu0 0
        %2875 = vmatpush1.bf16.msra.mxu0 0
        %2876 = vmatprep.subr.bf16.mxu0 0
        %2877 = vmatpush1.bf16.msra.mxu0 0
        %2878 = vmatprep.subr.bf16.mxu0 0
        %2879 = vmatpush1.bf16.msra.mxu0 0
        %2880 = vmatprep.subr.bf16.mxu0 0
        %2881 = vmatpush1.bf16.msra.mxu0 0
        %2882 = vmatprep.subr.bf16.mxu0 0
        %2883 = vmatpush1.bf16.msra.mxu0 0
        %2884 = vmatprep.subr.bf16.mxu0 0
        %2885 = vmatpush1.bf16.msra.mxu0 0
        %2886 = vmatprep.subr.bf16.mxu0 0
        %2887 = vmatpush1.bf16.msra.mxu0 0
        %2888 = vmatprep.subr.bf16.mxu0 0
        %2889 = vmatpush1.bf16.msra.mxu0 0
        %2890 = vmatprep.subr.bf16.mxu0 0
        %2891 = vmatpush1.bf16.msra.mxu0 0
        %2892 = vmatprep.subr.bf16.mxu0 0
        %2893 = vmatpush1.bf16.msra.mxu0 0
        %2894 = vmatprep.subr.bf16.mxu0 0
        %2895 = vmatpush1.bf16.msra.mxu0 0
        %2896 = vmatprep.subr.bf16.mxu0 0
        %2897 = vmatpush1.bf16.msra.mxu0 0
        %2898 = vmatprep.subr.bf16.mxu0 0
        %2899 = vmatpush1.bf16.msra.mxu0 0
        %2900 = vmatprep.subr.bf16.mxu0 0
        %2901 = vmatpush1.bf16.msra.mxu0 0
        %2902 = vmatprep.mubr.bf16.mxu0 0
        %2903 = vmatmul.mubr.bf16.gmra.mrb[0].mxu0 %v2844
        %v2904 = vpop.f32.mrb[0].mxu0
        %v2905 = vadd.f32 0.0, %v2904
        %v2906 = vpop.f32.mrb[0].mxu0
        %v2907 = vpop.f32.mrb[0].mxu0
        %v2908 = vadd.f32 0.0, %v2907
        %v2909 = vpop.f32.mrb[0].mxu0
        %2910 = vmatprep.mubr.bf16.mxu0 0
        %2911 = vmatmul.mubr.bf16.gmra.mrb[0].mxu0 %v2847
        %v2912 = vpop.f32.mrb[0].mxu0
        %v2913 = vadd.f32 0.0, %v2912
        %v2914 = vpop.f32.mrb[0].mxu0
        %v2915 = vpop.f32.mrb[0].mxu0
        %v2916 = vadd.f32 0.0, %v2915
        %v2917 = vpop.f32.mrb[0].mxu0
        %2918 = vmatprep.mubr.bf16.mxu0 0
        %2919 = vmatmul.mubr.bf16.gmra.mrb[0].mxu0 %v2850
        %v2920 = vpop.f32.mrb[0].mxu0
        %v2921 = vadd.f32 0.0, %v2920
        %v2922 = vpop.f32.mrb[0].mxu0
        %v2923 = vpop.f32.mrb[0].mxu0
        %v2924 = vadd.f32 0.0, %v2923
        %v2925 = vpop.f32.mrb[0].mxu0
        %2926 = vmatprep.mubr.bf16.mxu0 0
        %2927 = vmatmul.mubr.bf16.gmra.mrb[0].mxu0 %v2853
        %v2928 = vpop.f32.mrb[0].mxu0
        %v2929 = vadd.f32 0.0, %v2928
        %v2930 = vpop.f32.mrb[0].mxu0
        %v2931 = vpop.f32.mrb[0].mxu0
        %v2932 = vadd.f32 0.0, %v2931
        %v2933 = vpop.f32.mrb[0].mxu0
        %2934 = vmatprep.mubr.bf16.mxu0 0
        %2935 = vmatmul.mubr.bf16.gmra.mrb[0].mxu0 %v2856
        %v2936 = vpop.f32.mrb[0].mxu0
        %v2937 = vadd.f32 0.0, %v2936
        %v2938 = vpop.f32.mrb[0].mxu0
        %v2939 = vpop.f32.mrb[0].mxu0
        %v2940 = vadd.f32 0.0, %v2939
        %v2941 = vpop.f32.mrb[0].mxu0
        %2942 = vmatprep.mubr.bf16.mxu0 0
        %2943 = vmatmul.mubr.bf16.gmra.mrb[0].mxu0 %v2859
        %v2944 = vpop.f32.mrb[0].mxu0
        %v2945 = vadd.f32 0.0, %v2944
        %v2946 = vpop.f32.mrb[0].mxu0
        %v2947 = vpop.f32.mrb[0].mxu0
        %v2948 = vadd.f32 0.0, %v2947
        %v2949 = vpop.f32.mrb[0].mxu0
        %2950 = vmatprep.mubr.bf16.mxu0 0
        %2951 = vmatmul.mubr.bf16.gmra.mrb[0].mxu0 %v2862
        %v2952 = vpop.f32.mrb[0].mxu0
        %v2953 = vadd.f32 0.0, %v2952
        %v2954 = vpop.f32.mrb[0].mxu0
        %v2955 = vpop.f32.mrb[0].mxu0
        %v2956 = vadd.f32 0.0, %v2955
        %v2957 = vpop.f32.mrb[0].mxu0
        %2958 = vmatprep.mubr.bf16.mxu0 0
        %2959 = vmatmul.mubr.bf16.gmra.mrb[0].mxu0 %v2865
        %v2960 = vpop.f32.mrb[0].mxu0
        %v2961 = vadd.f32 0.0, %v2960
        %v2962 = vpop.f32.mrb[0].mxu0
        %v2963 = vpop.f32.mrb[0].mxu0
        %v2964 = vadd.f32 0.0, %v2963
        %v2965 = vpop.f32.mrb[0].mxu0
        %2966 = vdwg.mxu0
        %v2967 = vlaneseq
        %v2968 = vshrl.u32 %v2967, 7
        %v2969 = vsub.s32 0, %v2968
        %v2970 = vrot.slane %v2832, %v2969
        %v2971 = vmul.f32 %v2905, %v2970
        %v2972 = vmul.f32 %v2908, %v2970
        %v2973 = vmul.f32 %v2913, %v2970
        %v2974 = vmul.f32 %v2916, %v2970
        %v2975 = vmul.f32 %v2921, %v2970
        %v2976 = vmul.f32 %v2924, %v2970
        %v2977 = vmul.f32 %v2929, %v2970
        %v2978 = vmul.f32 %v2932, %v2970
        %v2979 = vmul.f32 %v2937, %v2970
        %v2980 = vmul.f32 %v2940, %v2970
        %v2981 = vmul.f32 %v2945, %v2970
        %v2982 = vmul.f32 %v2948, %v2970
        %v2983 = vmul.f32 %v2953, %v2970
        %v2984 = vmul.f32 %v2956, %v2970
        %v2985 = vmul.f32 %v2961, %v2970
        %v2986 = vmul.f32 %v2964, %v2970
        %v2987 = vlaneseq
        %v2988 = vshrl.u32 %v2987, 7
        %v2989 = vsub.s32 0, %v2988
        %v2990 = vrot.slane %v2833, %v2989
        %v2991 = vadd.f32 %v2971, %v2990
        %v2992 = vadd.f32 %v2972, %v2990
        %v2993 = vadd.f32 %v2973, %v2990
        %v2994 = vadd.f32 %v2974, %v2990
        %v2995 = vadd.f32 %v2975, %v2990
        %v2996 = vadd.f32 %v2976, %v2990
        %v2997 = vadd.f32 %v2977, %v2990
        %v2998 = vadd.f32 %v2978, %v2990
        %v2999 = vadd.f32 %v2979, %v2990
        %v3000 = vadd.f32 %v2980, %v2990
        %v3001 = vadd.f32 %v2981, %v2990
        %v3002 = vadd.f32 %v2982, %v2990
        %v3003 = vadd.f32 %v2983, %v2990
        %v3004 = vadd.f32 %v2984, %v2990
        %v3005 = vadd.f32 %v2985, %v2990
        %v3006 = vadd.f32 %v2986, %v2990
        %v3007 = vadd.f32 %v2800, %v2991
        %v3008 = vadd.f32 %v2801, %v2992
        %v3009 = vadd.f32 %v2802, %v2993
        %v3010 = vadd.f32 %v2803, %v2994
        %v3011 = vadd.f32 %v2804, %v2995
        %v3012 = vadd.f32 %v2805, %v2996
        %v3013 = vadd.f32 %v2806, %v2997
        %v3014 = vadd.f32 %v2807, %v2998
        %v3015 = vadd.f32 %v2808, %v2999
        %v3016 = vadd.f32 %v2809, %v3000
        %v3017 = vadd.f32 %v2810, %v3001
        %v3018 = vadd.f32 %v2811, %v3002
        %v3019 = vadd.f32 %v2812, %v3003
        %v3020 = vadd.f32 %v2813, %v3004
        %v3021 = vadd.f32 %v2814, %v3005
        %v3022 = vadd.f32 %v2815, %v3006
        %v3023 = vmax.f32 %v3007, 0.0
        %v3024 = vmax.f32 %v3008, 0.0
        %v3025 = vmax.f32 %v3009, 0.0
        %v3026 = vmax.f32 %v3010, 0.0
        %v3027 = vmax.f32 %v3011, 0.0
        %v3028 = vmax.f32 %v3012, 0.0
        %v3029 = vmax.f32 %v3013, 0.0
        %v3030 = vmax.f32 %v3014, 0.0
        %v3031 = vmax.f32 %v3015, 0.0
        %v3032 = vmax.f32 %v3016, 0.0
        %v3033 = vmax.f32 %v3017, 0.0
        %v3034 = vmax.f32 %v3018, 0.0
        %v3035 = vmax.f32 %v3019, 0.0
        %v3036 = vmax.f32 %v3020, 0.0
        %v3037 = vmax.f32 %v3021, 0.0
        %v3038 = vmax.f32 %v3022, 0.0
        %v3047 = vrot.slane %v3025, 7
        %vm3048 = vcmask 1041409
        %v3049 = vsel %vm3048, %v3047, %v3023
        %v3050 = vrot.slane %v3027, 6
        %vm3051 = vcmask 1042434
        %v3052 = vsel %vm3051, %v3050, %v3049
        %v3053 = vrot.slane %v3029, 5
        %vm3054 = vcmask 1043459
        %v3055 = vsel %vm3054, %v3053, %v3052
        %v3056 = vrot.slane %v3031, 4
        %vm3057 = vcmask 1044484
        %v3058 = vsel %vm3057, %v3056, %v3055
        %v3059 = vrot.slane %v3033, 3
        %vm3060 = vcmask 1045509
        %v3061 = vsel %vm3060, %v3059, %v3058
        %v3062 = vrot.slane %v3035, 2
        %vm3063 = vcmask 1046534
        %v3064 = vsel %vm3063, %v3062, %v3061
        %v3065 = vrot.slane %v3037, 1
        %vm3066 = vcmask 1047559
        %v3067 = vsel %vm3066, %v3065, %v3064
        %3069 = vst.msk [vmem:[%s231] sm:$0xff] %vm1759, %v3067
        %v3070 = vsel %vm3051, %v3047, %v3023
        %v3071 = vsel %vm3054, %v3050, %v3070
        %v3072 = vsel %vm3057, %v3053, %v3071
        %v3073 = vsel %vm3060, %v3056, %v3072
        %v3074 = vsel %vm3063, %v3059, %v3073
        %v3075 = vsel %vm3066, %v3062, %v3074
        %3076 = vrot.lane.b32.xlu0 %v3075, 8
        %v3077 = vpop.permute.xlu0 %3076
        %3078 = vrot.lane.b32.xlu0 %v3065, 8
        %v3079 = vpop.permute.xlu0 %3078
        %vm3082 = vcmask 130113
        %3083 = vst.msk [vmem:[%s231 - $0x1] sm:$0xfe] %vm3082, %v3077
        %vm3084 = vcmask 122944
        %3085 = vst.msk [vmem:[%s231 + $0x7] sm:$0x1] %vm3084, %v3079
        %v3086 = vsel %vm3054, %v3047, %v3023
        %v3087 = vsel %vm3057, %v3050, %v3086
        %v3088 = vsel %vm3060, %v3053, %v3087
        %v3089 = vsel %vm3063, %v3056, %v3088
        %v3090 = vsel %vm3066, %v3059, %v3089
        %v3091 = vsel %vm3048, %v3065, %v3062
        %3092 = vrot.lane.b32.xlu0 %v3090, 16
        %v3093 = vpop.permute.xlu0 %3092
        %3094 = vrot.lane.b32.xlu0 %v3091, 16
        %v3095 = vpop.permute.xlu0 %3094
        %vm3098 = vcmask 195714
        %3099 = vst.msk [vmem:[%s231 - $0x2] sm:$0xfc] %vm3098, %v3093
        %vm3100 = vcmask 189568
        %3101 = vst.msk [vmem:[%s231 + $0x6] sm:$0x3] %vm3100, %v3095
        %v3102 = vsel %vm3057, %v3047, %v3023
        %v3103 = vsel %vm3060, %v3050, %v3102
        %v3104 = vsel %vm3063, %v3053, %v3103
        %v3105 = vsel %vm3066, %v3056, %v3104
        %v3106 = vsel %vm3048, %v3062, %v3059
        %v3107 = vsel %vm3051, %v3065, %v3106
        %3108 = vrot.lane.b32.xlu0 %v3105, 24
        %v3109 = vpop.permute.xlu0 %3108
        %3110 = vrot.lane.b32.xlu0 %v3107, 24
        %v3111 = vpop.permute.xlu0 %3110
        %vm3114 = vcmask 261315
        %3115 = vst.msk [vmem:[%s231 - $0x3] sm:$0xf8] %vm3114, %v3109
        %vm3116 = vcmask 256192
        %3117 = vst.msk [vmem:[%s231 + $0x5] sm:$0x7] %vm3116, %v3111
        %v3118 = vsel %vm3060, %v3047, %v3023
        %v3119 = vsel %vm3063, %v3050, %v3118
        %v3120 = vsel %vm3066, %v3053, %v3119
        %v3121 = vsel %vm3048, %v3059, %v3056
        %v3122 = vsel %vm3051, %v3062, %v3121
        %v3123 = vsel %vm3054, %v3065, %v3122
        %3124 = vrot.lane.b32.xlu0 %v3120, 32
        %v3125 = vpop.permute.xlu0 %3124
        %3126 = vrot.lane.b32.xlu0 %v3123, 32
        %v3127 = vpop.permute.xlu0 %3126
        %vm3130 = vcmask 326916
        %3131 = vst.msk [vmem:[%s231 - $0x4] sm:$0xf0] %vm3130, %v3125
        %vm3132 = vcmask 322816
        %3133 = vst.msk [vmem:[%s231 + $0x4] sm:$0xf] %vm3132, %v3127
        %v3134 = vsel %vm3063, %v3047, %v3023
        %v3135 = vsel %vm3066, %v3050, %v3134
        %v3136 = vsel %vm3048, %v3056, %v3053
        %v3137 = vsel %vm3051, %v3059, %v3136
        %v3138 = vsel %vm3054, %v3062, %v3137
        %v3139 = vsel %vm3057, %v3065, %v3138
        %3140 = vrot.lane.b32.xlu0 %v3135, 40
        %v3141 = vpop.permute.xlu0 %3140
        %3142 = vrot.lane.b32.xlu0 %v3139, 40
        %v3143 = vpop.permute.xlu0 %3142
        %vm3146 = vcmask 392517
        %3147 = vst.msk [vmem:[%s231 - $0x5] sm:$0xe0] %vm3146, %v3141
        %vm3148 = vcmask 389440
        %3149 = vst.msk [vmem:[%s231 + $0x3] sm:$0x1f] %vm3148, %v3143
        %v3150 = vsel %vm3066, %v3047, %v3023
        %v3151 = vsel %vm3048, %v3053, %v3050
        %v3152 = vsel %vm3051, %v3056, %v3151
        %v3153 = vsel %vm3054, %v3059, %v3152
        %v3154 = vsel %vm3057, %v3062, %v3153
        %v3155 = vsel %vm3060, %v3065, %v3154
        %3156 = vrot.lane.b32.xlu0 %v3150, 48
        %v3157 = vpop.permute.xlu0 %3156
        %3158 = vrot.lane.b32.xlu0 %v3155, 48
        %v3159 = vpop.permute.xlu0 %3158
        %vm3162 = vcmask 458118
        %3163 = vst.msk [vmem:[%s231 - $0x6] sm:$0xc0] %vm3162, %v3157
        %vm3164 = vcmask 456064
        %3165 = vst.msk [vmem:[%s231 + $0x2] sm:$0x3f] %vm3164, %v3159
        %v3166 = vsel %vm3048, %v3050, %v3047
        %v3167 = vsel %vm3051, %v3053, %v3166
        %v3168 = vsel %vm3054, %v3056, %v3167
        %v3169 = vsel %vm3057, %v3059, %v3168
        %v3170 = vsel %vm3060, %v3062, %v3169
        %v3171 = vsel %vm3063, %v3065, %v3170
        %3172 = vrot.lane.b32.xlu0 %v3023, 56
        %v3173 = vpop.permute.xlu0 %3172
        %3174 = vrot.lane.b32.xlu0 %v3171, 56
        %v3175 = vpop.permute.xlu0 %3174
        %vm3178 = vcmask 523719
        %3179 = vst.msk [vmem:[%s231 - $0x7] sm:$0x80] %vm3178, %v3173
        %vm3180 = vcmask 522688
        %3181 = vst.msk [vmem:[%s231 + $0x1] sm:$0x7f] %vm3180, %v3175
        %v3190 = vrot.slane %v3026, 7
        %v3191 = vsel %vm3048, %v3190, %v3024
        %v3192 = vrot.slane %v3028, 6
        %v3193 = vsel %vm3051, %v3192, %v3191
        %v3194 = vrot.slane %v3030, 5
        %v3195 = vsel %vm3054, %v3194, %v3193
        %v3196 = vrot.slane %v3032, 4
        %v3197 = vsel %vm3057, %v3196, %v3195
        %v3198 = vrot.slane %v3034, 3
        %v3199 = vsel %vm3060, %v3198, %v3197
        %v3200 = vrot.slane %v3036, 2
        %v3201 = vsel %vm3063, %v3200, %v3199
        %v3202 = vrot.slane %v3038, 1
        %v3203 = vsel %vm3066, %v3202, %v3201
        %3204 = vrot.lane.b32.xlu0 %v3203, 64
        %v3205 = vpop.permute.xlu0 %3204
        %3207 = vst.msk [vmem:[%s231] sm:$0xff] %vm2573, %v3205
        %v3208 = vsel %vm3051, %v3190, %v3024
        %v3209 = vsel %vm3054, %v3192, %v3208
        %v3210 = vsel %vm3057, %v3194, %v3209
        %v3211 = vsel %vm3060, %v3196, %v3210
        %v3212 = vsel %vm3063, %v3198, %v3211
        %v3213 = vsel %vm3066, %v3200, %v3212
        %3214 = vrot.lane.b32.xlu0 %v3213, 72
        %v3215 = vpop.permute.xlu0 %3214
        %3216 = vrot.lane.b32.xlu0 %v3202, 72
        %v3217 = vpop.permute.xlu0 %3216
        %vm3220 = vcmask 654913
        %3221 = vst.msk [vmem:[%s231 - $0x1] sm:$0xfe] %vm3220, %v3215
        %vm3222 = vcmask 647744
        %3223 = vst.msk [vmem:[%s231 + $0x7] sm:$0x1] %vm3222, %v3217
        %v3224 = vsel %vm3054, %v3190, %v3024
        %v3225 = vsel %vm3057, %v3192, %v3224
        %v3226 = vsel %vm3060, %v3194, %v3225
        %v3227 = vsel %vm3063, %v3196, %v3226
        %v3228 = vsel %vm3066, %v3198, %v3227
        %v3229 = vsel %vm3048, %v3202, %v3200
        %3230 = vrot.lane.b32.xlu0 %v3228, 80
        %v3231 = vpop.permute.xlu0 %3230
        %3232 = vrot.lane.b32.xlu0 %v3229, 80
        %v3233 = vpop.permute.xlu0 %3232
        %vm3236 = vcmask 720514
        %3237 = vst.msk [vmem:[%s231 - $0x2] sm:$0xfc] %vm3236, %v3231
        %vm3238 = vcmask 714368
        %3239 = vst.msk [vmem:[%s231 + $0x6] sm:$0x3] %vm3238, %v3233
        %v3240 = vsel %vm3057, %v3190, %v3024
        %v3241 = vsel %vm3060, %v3192, %v3240
        %v3242 = vsel %vm3063, %v3194, %v3241
        %v3243 = vsel %vm3066, %v3196, %v3242
        %v3244 = vsel %vm3048, %v3200, %v3198
        %v3245 = vsel %vm3051, %v3202, %v3244
        %3246 = vrot.lane.b32.xlu0 %v3243, 88
        %v3247 = vpop.permute.xlu0 %3246
        %3248 = vrot.lane.b32.xlu0 %v3245, 88
        %v3249 = vpop.permute.xlu0 %3248
        %vm3252 = vcmask 786115
        %3253 = vst.msk [vmem:[%s231 - $0x3] sm:$0xf8] %vm3252, %v3247
        %vm3254 = vcmask 780992
        %3255 = vst.msk [vmem:[%s231 + $0x5] sm:$0x7] %vm3254, %v3249
        %v3256 = vsel %vm3060, %v3190, %v3024
        %v3257 = vsel %vm3063, %v3192, %v3256
        %v3258 = vsel %vm3066, %v3194, %v3257
        %v3259 = vsel %vm3048, %v3198, %v3196
        %v3260 = vsel %vm3051, %v3200, %v3259
        %v3261 = vsel %vm3054, %v3202, %v3260
        %3262 = vrot.lane.b32.xlu0 %v3258, 96
        %v3263 = vpop.permute.xlu0 %3262
        %3264 = vrot.lane.b32.xlu0 %v3261, 96
        %v3265 = vpop.permute.xlu0 %3264
        %vm3268 = vcmask 851716
        %3269 = vst.msk [vmem:[%s231 - $0x4] sm:$0xf0] %vm3268, %v3263
        %vm3270 = vcmask 847616
        %3271 = vst.msk [vmem:[%s231 + $0x4] sm:$0xf] %vm3270, %v3265
        %v3272 = vsel %vm3063, %v3190, %v3024
        %v3273 = vsel %vm3066, %v3192, %v3272
        %v3274 = vsel %vm3048, %v3196, %v3194
        %v3275 = vsel %vm3051, %v3198, %v3274
        %v3276 = vsel %vm3054, %v3200, %v3275
        %v3277 = vsel %vm3057, %v3202, %v3276
        %3278 = vrot.lane.b32.xlu0 %v3273, 104
        %v3279 = vpop.permute.xlu0 %3278
        %3280 = vrot.lane.b32.xlu0 %v3277, 104
        %v3281 = vpop.permute.xlu0 %3280
        %vm3284 = vcmask 917317
        %3285 = vst.msk [vmem:[%s231 - $0x5] sm:$0xe0] %vm3284, %v3279
        %vm3286 = vcmask 914240
        %3287 = vst.msk [vmem:[%s231 + $0x3] sm:$0x1f] %vm3286, %v3281
        %v3288 = vsel %vm3066, %v3190, %v3024
        %v3289 = vsel %vm3048, %v3194, %v3192
        %v3290 = vsel %vm3051, %v3196, %v3289
        %v3291 = vsel %vm3054, %v3198, %v3290
        %v3292 = vsel %vm3057, %v3200, %v3291
        %v3293 = vsel %vm3060, %v3202, %v3292
        %3294 = vrot.lane.b32.xlu0 %v3288, 112
        %v3295 = vpop.permute.xlu0 %3294
        %3296 = vrot.lane.b32.xlu0 %v3293, 112
        %v3297 = vpop.permute.xlu0 %3296
        %vm3300 = vcmask 982918
        %3301 = vst.msk [vmem:[%s231 - $0x6] sm:$0xc0] %vm3300, %v3295
        %vm3302 = vcmask 980864
        %3303 = vst.msk [vmem:[%s231 + $0x2] sm:$0x3f] %vm3302, %v3297
        %v3304 = vsel %vm3048, %v3192, %v3190
        %v3305 = vsel %vm3051, %v3194, %v3304
        %v3306 = vsel %vm3054, %v3196, %v3305
        %v3307 = vsel %vm3057, %v3198, %v3306
        %v3308 = vsel %vm3060, %v3200, %v3307
        %v3309 = vsel %vm3063, %v3202, %v3308
        %3310 = vrot.lane.b32.xlu0 %v3024, 120
        %v3311 = vpop.permute.xlu0 %3310
        %3312 = vrot.lane.b32.xlu0 %v3309, 120
        %v3313 = vpop.permute.xlu0 %3312
        %vm3316 = vcmask 1048519
        %3317 = vst.msk [vmem:[%s231 - $0x7] sm:$0x80] %vm3316, %v3311
        %vm3318 = vcmask 1047488
        %3319 = vst.msk [vmem:[%s231 + $0x1] sm:$0x7f] %vm3318, %v3313
        %s3320 = sand.u32 %s151, 1
        %s3321 = scalar_lea.sflag [#allocation7], %s3320
        %s3322 = sand.u32 %s151, 1
        %s3323 = smul.addr %s3322, 8
        %s3324 = scalar_lea.vmem [#allocation6], %s3323
        // Predicated region
        $region45: #{tpu_custom_call.1} parent=39 // pred_check
          %p3325 = pneg %p161
        $region46: #{tpu_custom_call.1} parent=39 // pred_check_branch
          %3327 = sbr.rel (%p3325) target = $region48
        $region47: #{tpu_custom_call.1} parent=39 // pred_region
          %s3329 = ssub.s32 128, 128
          %3330 = vsyncadd %s3321, %s3329
          %s3331 = smul.addr %s23, 2
          %s3332 = sadd.s32 %s24, %s3331
          %s3333 = smul.addr %s3332, 128
          %s3334 = scalar_lea.hbm %s5, %s3333
          %s3336 = sshll.u32 %s3324, 4
          %s3337 = int_to_ptr.vmem [resolvable:$true] %s3336
          %3339 = dma.vmem_to_hbm [thread:$0]  %s3337, 128, %s3334, %s3321
        $region48: #{tpu_custom_call.1} parent=39 // pred_fallthru
          _
      $region40: #{tpu_custom_call.1} parent=5 // pred_fallthru
        _
      %p3340 = scmp.le.s32.totalorder 2, %s14
      // Predicated region
      $region49: #{tpu_custom_call.1} parent=5 // pred_check
        %p3341 = pneg %p3340
      $region50: #{tpu_custom_call.1} parent=5 // pred_check_branch
        %3343 = sbr.rel (%p3341) target = $region52
      $region51: #{tpu_custom_call.1} parent=5 // pred_region
        %s3344 = ssub.s32 %s14, 2
        // Predicated region
        $region53: #{tpu_custom_call.1} parent=51 // pred_check
          %p3345 = pneg %p167
        $region54: #{tpu_custom_call.1} parent=51 // pred_check_branch
          %3347 = sbr.rel (%p3345) target = $region56
        $region55: #{tpu_custom_call.1} parent=51 // pred_region
          %s3348 = sand.u32 %s152, 1
          %s3349 = scalar_lea.sflag [#allocation7], %s3348
          %s3350 = sand.u32 %s152, 1
          %s3351 = smul.addr %s3350, 8
          %s3352 = scalar_lea.vmem [#allocation6], %s3351
          %3353 = dma.done %s3349, 128
        $region56: #{tpu_custom_call.1} parent=51 // pred_fallthru
          _
      $region52: #{tpu_custom_call.1} parent=5 // pred_fallthru
        _
    $region6: #{tpu_custom_call.1} parent=1 // loop_footer
      %s18 = sadd.s32 1, %s14
    $region7: #{tpu_custom_call.1} parent=1 // loop_footer_branch
      %13 = sbr.rel target = $region3
    $region8: #{tpu_custom_call.1} parent=1 // loop_exit
      _
    %3354 = vsyncpa [#allocation7], 1
    %s3355 = scalar_lea.sflag [#allocation7], 1
    %3356 = vsyncpa %s3355, 1

</llo_original>
